<compile_context>
chip_gen: v7x
topology: tpu7x:2x2x1
jax: 0.10.0
libtpu: 0.0.40
codegen_flags: <defaults>
</compile_context>

<pallas_src>
import functools

import jax
import jax.numpy as jnp
from jax import lax
from jax.experimental import pallas as pl
from jax.experimental.pallas import tpu as pltpu


def graph_pool_kernel(h_ref, w_ref, b_ref, o_ref, *, k_nodes, dense_out):
    """One batch tile per grid step.

    h_ref : (bt, N, D)        node features (VMEM, native dtype)
    w_ref : (1, D)            projection weight (VMEM, f32)
    b_ref : (1, 1)            projection bias (SMEM scalar, f32)
    o_ref : (bt, 1, K*D) if dense_out else (bt, K, D)
    """
    bt, n, d = h_ref.shape

    h = h_ref[...]                                   # native dtype (f32 / bf16)
    w = w_ref[...]                                   # (1, D) f32

    # scores = sigmoid(h @ w + b) on the VPU path (broadcast-mul + lane reduce);
    # the f32 weight promotes the product to f32 without an explicit copy of h.
    logits = jnp.sum(h * w[None, :, :], axis=-1) + b_ref[0, 0]    # (bt, N) f32
    scores = jax.nn.sigmoid(logits)                               # (bt, N) f32

    # One-shot descending rank (single-dtype f32 chain, no int round-trips):
    #   rank_i = #{ j : s_j > s_i  or  (s_j == s_i and j < i) }
    s_i = scores[:, :, None]                                      # (bt, N, 1)
    s_j = scores[:, None, :]                                      # (bt, 1, N)
    idx_i = lax.broadcasted_iota(jnp.int32, (1, n, 1), 1)
    idx_j = lax.broadcasted_iota(jnp.int32, (1, 1, n), 2)
    beats = (s_j > s_i) | ((s_j == s_i) & (idx_j < idx_i))        # (bt, N, N)
    rank = jnp.sum(jnp.where(beats, 1.0, 0.0), axis=-1)           # (bt, N) f32

    # Score-weighted one-hot selection: p[b, k, i] = scores[b, i] * [rank_i == k]
    k_iota = lax.broadcasted_iota(jnp.int32, (1, k_nodes, 1), 1).astype(jnp.float32)
    p = jnp.where(rank[:, None, :] == k_iota, s_j, 0.0)           # (bt, K, N) f32
    p = p.astype(h.dtype)                                         # bf16 MXU path if h is bf16

    # Selection "gather" as a matmul, accumulated in f32.
    out = jnp.einsum("bkn,bnd->bkd", p, h,
                     preferred_element_type=jnp.float32)          # (bt, K, D) f32

    if dense_out:
        # Lane-dense store: one unmasked (bt, 1, K*D) slab.
        o_ref[...] = out.reshape(bt, 1, k_nodes * d).astype(o_ref.dtype)
    else:
        o_ref[...] = out.astype(o_ref.dtype)


def _num_tensorcores():
    """TensorCores that share one Pallas grid on the local device."""
    try:
        kind = jax.devices()[0].device_kind.lower()
    except Exception:
        return 1
    if "v7" in kind or "7x" in kind or "v4" in kind or "v5p" in kind:
        return 2          # dual-TC / megacore parts
    return 1              # v2/v3/v5e/v6e: single TensorCore


def _fits_vmem(bt, n, k_nodes, d, itemsize):
    """Budget the per-step working set (O(bt*N^2) rank temporaries plus
    double-buffered h / output tiles) well under the scoped-VMEM defaults."""
    f32 = 4
    rank_tmp = 3 * bt * n * n * f32                        # (bt,N,N) compare/select temps
    sel = bt * k_nodes * n * f32                           # (bt,K,N) selection matrix
    io = 2 * bt * (n * d + k_nodes * d) * max(itemsize, f32)   # double-buffered tiles
    return rank_tmp + sel + io <= (8 << 20)


def _choose_batch_tiling(bs, n, k_nodes, d, itemsize):
    """One maximal grid step per TensorCore, shrinking the batch tile only when
    the VMEM budget for the rank intermediates forces more steps."""
    num_cores = _num_tensorcores()
    bt = max(-(-bs // num_cores), 1)                       # ceil(bs / num_cores)
    while bt > 1 and not _fits_vmem(bt, n, k_nodes, d, itemsize):
        bt -= 1
    steps = -(-bs // bt)
    return bt, steps, steps * bt


def _graph_pool_call(h, w2, b2, k_nodes, bt, steps, dense_out):
    bs_pad, n, d = h.shape
    itemsize = jnp.dtype(h.dtype).itemsize

    kernel = functools.partial(graph_pool_kernel, k_nodes=k_nodes,
                               dense_out=dense_out)
    if dense_out:
        out_shape = jax.ShapeDtypeStruct((bs_pad, 1, k_nodes * d), h.dtype)
        out_spec = pl.BlockSpec((bt, 1, k_nodes * d), lambda b: (b, 0, 0))
    else:
        out_shape = jax.ShapeDtypeStruct((bs_pad, k_nodes, d), h.dtype)
        out_spec = pl.BlockSpec((bt, k_nodes, d), lambda b: (b, 0, 0))

    cost = pl.CostEstimate(
        flops=(2 * bs_pad * n * d            # score projection
               + 3 * bs_pad * n * n          # pairwise rank
               + 2 * bs_pad * k_nodes * n * d),  # selection matmul
        transcendentals=bs_pad * n,          # sigmoid
        bytes_accessed=(bs_pad * n * d * itemsize + d * 4
                        + bs_pad * k_nodes * d * itemsize),
    )

    out = pl.pallas_call(
        kernel,
        out_shape=out_shape,
        grid_spec=pltpu.PrefetchScalarGridSpec(
            num_scalar_prefetch=0,
            grid=(steps,),
            in_specs=[
                pl.BlockSpec((bt, n, d), lambda b: (b, 0, 0)),      # h, batch-tiled
                pl.BlockSpec((1, d), lambda b: (0, 0)),             # proj weight
                pl.BlockSpec(memory_space=pltpu.MemorySpace.SMEM),  # proj bias scalar
            ],
            out_specs=out_spec,
        ),
        compiler_params=pltpu.CompilerParams(
            dimension_semantics=("parallel",)),
        cost_estimate=cost,
    )(h, w2, b2)
    return out.reshape(bs_pad, k_nodes, d)


def graph_pool(h, w, bias, k_ratio):
    """h: (B, N, D); w: (D,); bias: scalar; k_ratio: python float in (0, 1]."""
    bs, n, d = h.shape
    k_nodes = max(int(n * k_ratio), 1)          # matches max((n*k).long(), 1)
    if k_nodes > n:
        raise ValueError(f"k_ratio={k_ratio} selects {k_nodes} > {n} nodes")

    itemsize = jnp.dtype(h.dtype).itemsize
    bt, steps, bs_pad = _choose_batch_tiling(bs, n, k_nodes, d, itemsize)
    if bs_pad != bs:                            # pad batch up to the tile
        h = jnp.pad(h, ((0, bs_pad - bs), (0, 0), (0, 0)))

    w2 = jnp.asarray(w, jnp.float32).reshape(1, d)
    b2 = jnp.reshape(jnp.asarray(bias, jnp.float32), (1, 1))

    # Lane-dense output store when K*D is lane-aligned; fall back to the plain
    # (bt, K, D) store if this backend can't lower the in-kernel collapse.
    dense_out = (k_nodes * d) % 128 == 0
    try:
        out = _graph_pool_call(h, w2, b2, k_nodes, bt, steps, dense_out)
    except Exception:
        if not dense_out:
            raise
        out = _graph_pool_call(h, w2, b2, k_nodes, bt, steps, False)
    return out[:bs]


def graph_pool_ref(h, w, bias, k_ratio):
    """Pure-JAX reference mirroring the PyTorch forward."""
    scores = jax.nn.sigmoid(h @ w.reshape(-1, 1) + bias)        # (B, N, 1)
    k_nodes = max(int(h.shape[1] * k_ratio), 1)
    _, idx = lax.top_k(scores[..., 0], k_nodes)                 # (B, K)
    hw = h * scores
    return jnp.take_along_axis(hw, idx[..., None], axis=1)      # (B, K, D)


if __name__ == "__main__":
    key = jax.random.PRNGKey(0)
    k1, k2, k3 = jax.random.split(key, 3)

    bs, n_nodes, in_dim = 2, 16, 32
    k_ratio = 0.5   # keep 8 of 16 nodes

    h = jax.random.normal(k1, (bs, n_nodes, in_dim), dtype=jnp.float32)
    # deterministic "Linear(in_dim, 1)" parameters
    w = jax.random.normal(k2, (in_dim,), dtype=jnp.float32) * 0.1
    bias = jax.random.normal(k3, (), dtype=jnp.float32) * 0.1

    out = graph_pool(h, w, bias, k_ratio)
    jax.block_until_ready(out)

    ref = graph_pool_ref(h, w, bias, k_ratio)
    assert out.shape == (bs, max(int(n_nodes * k_ratio), 1), in_dim), out.shape
    assert jnp.allclose(out, ref, atol=1e-5, rtol=1e-5), "mismatch vs reference"

    print("KERNEL_OK")
</pallas_src>

<mosaic_0001>
module attributes {stable_mosaic.version = 11 : i64} {
  func.func @graph_pool_kernel(%arg0: i32, %arg1: memref<2x16x32xf32, #tpu.memory_space<vmem>>, %arg2: memref<1x32xf32, #tpu.memory_space<vmem>>, %arg3: memref<1x1xf32, #tpu.memory_space<smem>>, %arg4: memref<2x1x256xf32, #tpu.memory_space<vmem>>) attributes {dimension_semantics = [#tpu.dimension_semantics<parallel>], iteration_bounds = array<i64: 1>, scalar_prefetch = 0 : i64, scratch_operands = 0 : i64, tpu.core_type = #tpu.core_type<tc>, window_params = [{transform_indices = @transform_0, window_bounds = array<i64: 2, 16, 32>}, {pipeline_mode = #tpu.pipeline_mode<synchronous>, transform_indices = @transform_1, window_bounds = array<i64: 1, 32>}, {transform_indices = @transform_2, window_bounds = array<i64: 1, 1>}, {transform_indices = @transform_3, window_bounds = array<i64: 2, 1, 256>}]} {
    %c0 = arith.constant 0 : index
    %c0_0 = arith.constant 0 : index
    %c0_1 = arith.constant 0 : index
    %0 = vector.load %arg1[%c0, %c0_0, %c0_1] : memref<2x16x32xf32, #tpu.memory_space<vmem>>, vector<2x16x32xf32>
    %c0_2 = arith.constant 0 : index
    %c0_3 = arith.constant 0 : index
    %1 = vector.load %arg2[%c0_2, %c0_3] : memref<1x32xf32, #tpu.memory_space<vmem>>, vector<1x32xf32>
    %2 = vector.shape_cast %1 : vector<1x32xf32> to vector<1x1x32xf32>
    %3 = vector.broadcast %2 : vector<1x1x32xf32> to vector<2x16x32xf32>
    %4 = arith.mulf %0, %3 : vector<2x16x32xf32>
    %cst = arith.constant dense<0.000000e+00> : vector<2x16xf32>
    %5 = vector.multi_reduction <add>, %4, %cst [2] : vector<2x16x32xf32> to vector<2x16xf32>
    %c0_4 = arith.constant 0 : index
    %c0_5 = arith.constant 0 : index
    %6 = memref.load %arg3[%c0_4, %c0_5] : memref<1x1xf32, #tpu.memory_space<smem>>
    %7 = vector.broadcast %6 : f32 to vector<2x16xf32>
    %8 = arith.addf %5, %7 : vector<2x16xf32>
    %9 = arith.negf %8 : vector<2x16xf32>
    %10 = math.exp %9 : vector<2x16xf32>
    %cst_6 = arith.constant 1.000000e+00 : f32
    %11 = vector.broadcast %cst_6 : f32 to vector<2x16xf32>
    %12 = arith.addf %11, %10 : vector<2x16xf32>
    %13 = arith.divf %11, %12 : vector<2x16xf32>
    %14 = vector.shape_cast %13 : vector<2x16xf32> to vector<2x16x1xf32>
    %15 = vector.shape_cast %13 : vector<2x16xf32> to vector<2x1x16xf32>
    %16 = tpu.iota {dimensions = array<i32: 1>} : vector<1x16x1xi32>
    %17 = tpu.iota {dimensions = array<i32: 2>} : vector<1x1x16xi32>
    %18 = vector.broadcast %15 : vector<2x1x16xf32> to vector<2x16x16xf32>
    %19 = vector.broadcast %14 : vector<2x16x1xf32> to vector<2x16x16xf32>
    %20 = arith.cmpf ogt, %18, %19 : vector<2x16x16xf32>
    %21 = vector.broadcast %15 : vector<2x1x16xf32> to vector<2x16x16xf32>
    %22 = vector.broadcast %14 : vector<2x16x1xf32> to vector<2x16x16xf32>
    %23 = arith.cmpf oeq, %21, %22 : vector<2x16x16xf32>
    %24 = vector.broadcast %17 : vector<1x1x16xi32> to vector<1x16x16xi32>
    %25 = vector.broadcast %16 : vector<1x16x1xi32> to vector<1x16x16xi32>
    %26 = arith.cmpi slt, %24, %25 : vector<1x16x16xi32>
    %27 = vector.broadcast %26 : vector<1x16x16xi1> to vector<2x16x16xi1>
    %28 = arith.andi %23, %27 : vector<2x16x16xi1>
    %29 = arith.ori %20, %28 : vector<2x16x16xi1>
    %cst_7 = arith.constant 1.000000e+00 : f32
    %cst_8 = arith.constant 0.000000e+00 : f32
    %30 = vector.broadcast %cst_7 : f32 to vector<2x16x16xf32>
    %31 = vector.broadcast %cst_8 : f32 to vector<2x16x16xf32>
    %32 = arith.select %29, %30, %31 : vector<2x16x16xi1>, vector<2x16x16xf32>
    %cst_9 = arith.constant dense<0.000000e+00> : vector<2x16xf32>
    %33 = vector.multi_reduction <add>, %32, %cst_9 [2] : vector<2x16x16xf32> to vector<2x16xf32>
    %34 = tpu.iota {dimensions = array<i32: 1>} : vector<1x8x1xi32>
    %35 = arith.sitofp %34 : vector<1x8x1xi32> to vector<1x8x1xf32>
    %36 = vector.shape_cast %33 : vector<2x16xf32> to vector<2x1x16xf32>
    %37 = vector.broadcast %36 : vector<2x1x16xf32> to vector<2x8x16xf32>
    %38 = vector.broadcast %35 : vector<1x8x1xf32> to vector<2x8x16xf32>
    %39 = arith.cmpf oeq, %37, %38 : vector<2x8x16xf32>
    %cst_10 = arith.constant 0.000000e+00 : f32
    %40 = vector.shape_cast %15 : vector<2x1x16xf32> to vector<2x1x16xf32>
    %41 = vector.broadcast %40 : vector<2x1x16xf32> to vector<2x8x16xf32>
    %42 = vector.broadcast %cst_10 : f32 to vector<2x8x16xf32>
    %43 = arith.select %39, %41, %42 : vector<2x8x16xi1>, vector<2x8x16xf32>
    "tpu.trace_start"() <{level = 10 : i32, message = "bkn,bnd->bkd"}> : () -> ()
    %cst_11 = arith.constant dense<0.000000e+00> : vector<2x8x32xf32>
    %44 = tpu.matmul %43, %0, %cst_11 {dimension_numbers = #tpu.dot_dimension_numbers<[2], [1], [1], [2], [0, 0, 0, 1, 1, 2], [0], [0]>} : vector<2x8x16xf32>, vector<2x16x32xf32>, vector<2x8x32xf32> -> vector<2x8x32xf32>
    "tpu.trace_stop"() : () -> ()
    %45 = vector.shape_cast %44 : vector<2x8x32xf32> to vector<2x1x256xf32>
    %c0_12 = arith.constant 0 : index
    %c0_13 = arith.constant 0 : index
    %c0_14 = arith.constant 0 : index
    %46 = vector.load %arg4[%c0_12, %c0_13, %c0_14] : memref<2x1x256xf32, #tpu.memory_space<vmem>>, vector<2x1x256xf32>
    tpu.vector_store %arg4[%c0_12, %c0_13, %c0_14], %45 {strides = array<i32>} : memref<2x1x256xf32, #tpu.memory_space<vmem>>, vector<2x1x256xf32>,
    return
  }
  func.func @transform_0(%arg0: i32) -> (i32, i32, i32) {
    %c0_i32 = arith.constant 0 : i32
    %c0_i32_0 = arith.constant 0 : i32
    %c0_i32_1 = arith.constant 0 : i32
    return %arg0, %c0_i32, %c0_i32_0 : i32, i32, i32
  }
  func.func @transform_1(%arg0: i32) -> (i32, i32) {
    %c0_i32 = arith.constant 0 : i32
    %c0_i32_0 = arith.constant 0 : i32
    %c0_i32_1 = arith.constant 0 : i32
    return %c0_i32, %c0_i32_0 : i32, i32
  }
  func.func @transform_2(%arg0: i32) -> (i32, i32) {
    %c0_i32 = arith.constant 0 : i32
    %c0_i32_0 = arith.constant 0 : i32
    %c0_i32_1 = arith.constant 0 : i32
    return %c0_i32, %c0_i32_0 : i32, i32
  }
  func.func @transform_3(%arg0: i32) -> (i32, i32, i32) {
    %c0_i32 = arith.constant 0 : i32
    %c0_i32_0 = arith.constant 0 : i32
    %c0_i32_1 = arith.constant 0 : i32
    return %arg0, %c0_i32, %c0_i32_0 : i32, i32, i32
  }
}

module attributes {stable_mosaic.version = 11 : i64} {
  func.func @graph_pool_kernel(%arg0: i32, %arg1: memref<2x16x32xf32, #tpu.memory_space<vmem>>, %arg2: memref<1x32xf32, #tpu.memory_space<vmem>>, %arg3: memref<1x1xf32, #tpu.memory_space<smem>>, %arg4: memref<2x8x32xf32, #tpu.memory_space<vmem>>) attributes {dimension_semantics = [#tpu.dimension_semantics<parallel>], iteration_bounds = array<i64: 1>, scalar_prefetch = 0 : i64, scratch_operands = 0 : i64, tpu.core_type = #tpu.core_type<tc>, window_params = [{transform_indices = @transform_0, window_bounds = array<i64: 2, 16, 32>}, {pipeline_mode = #tpu.pipeline_mode<synchronous>, transform_indices = @transform_1, window_bounds = array<i64: 1, 32>}, {transform_indices = @transform_2, window_bounds = array<i64: 1, 1>}, {transform_indices = @transform_3, window_bounds = array<i64: 2, 8, 32>}]} {
    %c0 = arith.constant 0 : index
    %c0_0 = arith.constant 0 : index
    %c0_1 = arith.constant 0 : index
    %0 = vector.load %arg1[%c0, %c0_0, %c0_1] : memref<2x16x32xf32, #tpu.memory_space<vmem>>, vector<2x16x32xf32>
    %c0_2 = arith.constant 0 : index
    %c0_3 = arith.constant 0 : index
    %1 = vector.load %arg2[%c0_2, %c0_3] : memref<1x32xf32, #tpu.memory_space<vmem>>, vector<1x32xf32>
    %2 = vector.shape_cast %1 : vector<1x32xf32> to vector<1x1x32xf32>
    %3 = vector.broadcast %2 : vector<1x1x32xf32> to vector<2x16x32xf32>
    %4 = arith.mulf %0, %3 : vector<2x16x32xf32>
    %cst = arith.constant dense<0.000000e+00> : vector<2x16xf32>
    %5 = vector.multi_reduction <add>, %4, %cst [2] : vector<2x16x32xf32> to vector<2x16xf32>
    %c0_4 = arith.constant 0 : index
    %c0_5 = arith.constant 0 : index
    %6 = memref.load %arg3[%c0_4, %c0_5] : memref<1x1xf32, #tpu.memory_space<smem>>
    %7 = vector.broadcast %6 : f32 to vector<2x16xf32>
    %8 = arith.addf %5, %7 : vector<2x16xf32>
    %9 = arith.negf %8 : vector<2x16xf32>
    %10 = math.exp %9 : vector<2x16xf32>
    %cst_6 = arith.constant 1.000000e+00 : f32
    %11 = vector.broadcast %cst_6 : f32 to vector<2x16xf32>
    %12 = arith.addf %11, %10 : vector<2x16xf32>
    %13 = arith.divf %11, %12 : vector<2x16xf32>
    %14 = vector.shape_cast %13 : vector<2x16xf32> to vector<2x16x1xf32>
    %15 = vector.shape_cast %13 : vector<2x16xf32> to vector<2x1x16xf32>
    %16 = tpu.iota {dimensions = array<i32: 1>} : vector<1x16x1xi32>
    %17 = tpu.iota {dimensions = array<i32: 2>} : vector<1x1x16xi32>
    %18 = vector.broadcast %15 : vector<2x1x16xf32> to vector<2x16x16xf32>
    %19 = vector.broadcast %14 : vector<2x16x1xf32> to vector<2x16x16xf32>
    %20 = arith.cmpf ogt, %18, %19 : vector<2x16x16xf32>
    %21 = vector.broadcast %15 : vector<2x1x16xf32> to vector<2x16x16xf32>
    %22 = vector.broadcast %14 : vector<2x16x1xf32> to vector<2x16x16xf32>
    %23 = arith.cmpf oeq, %21, %22 : vector<2x16x16xf32>
    %24 = vector.broadcast %17 : vector<1x1x16xi32> to vector<1x16x16xi32>
    %25 = vector.broadcast %16 : vector<1x16x1xi32> to vector<1x16x16xi32>
    %26 = arith.cmpi slt, %24, %25 : vector<1x16x16xi32>
    %27 = vector.broadcast %26 : vector<1x16x16xi1> to vector<2x16x16xi1>
    %28 = arith.andi %23, %27 : vector<2x16x16xi1>
    %29 = arith.ori %20, %28 : vector<2x16x16xi1>
    %cst_7 = arith.constant 1.000000e+00 : f32
    %cst_8 = arith.constant 0.000000e+00 : f32
    %30 = vector.broadcast %cst_7 : f32 to vector<2x16x16xf32>
    %31 = vector.broadcast %cst_8 : f32 to vector<2x16x16xf32>
    %32 = arith.select %29, %30, %31 : vector<2x16x16xi1>, vector<2x16x16xf32>
    %cst_9 = arith.constant dense<0.000000e+00> : vector<2x16xf32>
    %33 = vector.multi_reduction <add>, %32, %cst_9 [2] : vector<2x16x16xf32> to vector<2x16xf32>
    %34 = tpu.iota {dimensions = array<i32: 1>} : vector<1x8x1xi32>
    %35 = arith.sitofp %34 : vector<1x8x1xi32> to vector<1x8x1xf32>
    %36 = vector.shape_cast %33 : vector<2x16xf32> to vector<2x1x16xf32>
    %37 = vector.broadcast %36 : vector<2x1x16xf32> to vector<2x8x16xf32>
    %38 = vector.broadcast %35 : vector<1x8x1xf32> to vector<2x8x16xf32>
    %39 = arith.cmpf oeq, %37, %38 : vector<2x8x16xf32>
    %cst_10 = arith.constant 0.000000e+00 : f32
    %40 = vector.shape_cast %15 : vector<2x1x16xf32> to vector<2x1x16xf32>
    %41 = vector.broadcast %40 : vector<2x1x16xf32> to vector<2x8x16xf32>
    %42 = vector.broadcast %cst_10 : f32 to vector<2x8x16xf32>
    %43 = arith.select %39, %41, %42 : vector<2x8x16xi1>, vector<2x8x16xf32>
    "tpu.trace_start"() <{level = 10 : i32, message = "bkn,bnd->bkd"}> : () -> ()
    %cst_11 = arith.constant dense<0.000000e+00> : vector<2x8x32xf32>
    %44 = tpu.matmul %43, %0, %cst_11 {dimension_numbers = #tpu.dot_dimension_numbers<[2], [1], [1], [2], [0, 0, 0, 1, 1, 2], [0], [0]>} : vector<2x8x16xf32>, vector<2x16x32xf32>, vector<2x8x32xf32> -> vector<2x8x32xf32>
    "tpu.trace_stop"() : () -> ()
    %c0_12 = arith.constant 0 : index
    %c0_13 = arith.constant 0 : index
    %c0_14 = arith.constant 0 : index
    %45 = vector.load %arg4[%c0_12, %c0_13, %c0_14] : memref<2x8x32xf32, #tpu.memory_space<vmem>>, vector<2x8x32xf32>
    tpu.vector_store %arg4[%c0_12, %c0_13, %c0_14], %44 {strides = array<i32>} : memref<2x8x32xf32, #tpu.memory_space<vmem>>, vector<2x8x32xf32>,
    return
  }
  func.func @transform_0(%arg0: i32) -> (i32, i32, i32) {
    %c0_i32 = arith.constant 0 : i32
    %c0_i32_0 = arith.constant 0 : i32
    %c0_i32_1 = arith.constant 0 : i32
    return %arg0, %c0_i32, %c0_i32_0 : i32, i32, i32
  }
  func.func @transform_1(%arg0: i32) -> (i32, i32) {
    %c0_i32 = arith.constant 0 : i32
    %c0_i32_0 = arith.constant 0 : i32
    %c0_i32_1 = arith.constant 0 : i32
    return %c0_i32, %c0_i32_0 : i32, i32
  }
  func.func @transform_2(%arg0: i32) -> (i32, i32) {
    %c0_i32 = arith.constant 0 : i32
    %c0_i32_0 = arith.constant 0 : i32
    %c0_i32_1 = arith.constant 0 : i32
    return %c0_i32, %c0_i32_0 : i32, i32
  }
  func.func @transform_3(%arg0: i32) -> (i32, i32, i32) {
    %c0_i32 = arith.constant 0 : i32
    %c0_i32_0 = arith.constant 0 : i32
    %c0_i32_1 = arith.constant 0 : i32
    return %arg0, %c0_i32, %c0_i32_0 : i32, i32, i32
  }
}

</mosaic_0001>

<llo_original>
// kernel: tpu_custom_call.1
$region0: #{tpu_custom_call.1}
  #allocation0 [shape = 'u32[]', space=smem, size = 0x4, offset = 0x4, fixed_abs, tag = 'smem constant byte address 0x4 - core index']
  #allocation1 [shape = 'u32[144,128]{1,0:T(1,128)}', space=vmem, size = 0x12000, scoped, tag = 'internal scratch']
  #allocation2 [shape = 'f32[1,1]{1,0:T(1,128)S(6)}', space=smem, size = 0x200, scoped, tag = 'scoped memory for tpu_custom_call.1']
  %s0 = inlined_call_operand.hbm [shape: f32[2,16,32], index: 0, kind: input, shape index: {}]
  %s1 = inlined_call_operand.vmem [shape: f32[1,32], index: 1, kind: input, shape index: {}]
  %s2 = inlined_call_operand.<no memory space> [shape: f32[1,1], index: 2, kind: input, shape index: {}]
  %s3 = inlined_call_operand.hbm [shape: f32[2,1,256], index: 3, kind: output, shape index: {}]
  %s4 = sld [smem:[#allocation0]]
  $region26: #{tpu_custom_call.1} parent=0
    _
  %s6 = ssub.s32 1, %s4
  %s7 = scalar_select 0, %s6, %s4
  %8 = sst [smem:[#allocation2]] %s2
  $region1: #{tpu_custom_call.1} parent=0
    #allocation3 [shape = 'u8[16384]{0}', space=vmem, size = 0x4000, scoped, tag = 'input window, operand 0, single buffered']
    #allocation4 [shape = 's32[1]{0}', space=sflag, size = 0x4, scoped, tag = 'scoped memory for tpu_custom_call.1']
    #allocation5 [shape = 's32[1]{0}', space=sflag, size = 0x4, scoped, tag = 'scoped memory for tpu_custom_call.1']
    #allocation6 [shape = 'u8[2048]{0}', space=vmem, size = 0x800, scoped, tag = 'output window, operand 0, single buffered']
    %9 = vsyncpa [#allocation4], 0
    %10 = vsyncpa [#allocation5], 0
    // Predicated region
    $region2: #{tpu_custom_call.1} parent=1 // pred_check
      _
    $region3: #{tpu_custom_call.1} parent=1 // pred_check_branch
      %12 = sbr.rel (0) target = $region5
    $region4: #{tpu_custom_call.1} parent=1 // pred_region
      %s14 = ssub.s32 512, 512
      %15 = vsyncadd [#allocation4], %s14
      %s16 = sshll.u32 [#allocation3], 4
      %s17 = int_to_ptr.vmem [resolvable:$true] %s16
      %22 = dma.hbm_to_vmem [thread:$0]  %s0, 512, %s17, [#allocation4], 128, 128, 8
    $region5: #{tpu_custom_call.1} parent=1 // pred_fallthru
      _
    // Predicated region
    $region6: #{tpu_custom_call.1} parent=1 // pred_check
      _
    $region7: #{tpu_custom_call.1} parent=1 // pred_check_branch
      %24 = sbr.rel (0) target = $region9
    $region8: #{tpu_custom_call.1} parent=1 // pred_region
      _
    $region9: #{tpu_custom_call.1} parent=1 // pred_fallthru
      _
    // Predicated region
    $region10: #{tpu_custom_call.1} parent=1 // pred_check
      _
    $region11: #{tpu_custom_call.1} parent=1 // pred_check_branch
      %26 = sbr.rel (0) target = $region13
    $region12: #{tpu_custom_call.1} parent=1 // pred_region
      _
    $region13: #{tpu_custom_call.1} parent=1 // pred_fallthru
      _
    // Predicated region
    $region14: #{tpu_custom_call.1} parent=1 // pred_check
      _
    $region15: #{tpu_custom_call.1} parent=1 // pred_check_branch
      %28 = sbr.rel (0) target = $region17
    $region16: #{tpu_custom_call.1} parent=1 // pred_region
      %29 = dma.done [#allocation4], 512
    $region17: #{tpu_custom_call.1} parent=1 // pred_fallthru
      _
    %v30 = vld [vmem:[#allocation3] sm:$0xff]
    %v31 = vld [vmem:[#allocation3 + $0x8] sm:$0xff]
    %v32 = vld [vmem:[#allocation3 + $0x10] sm:$0xff]
    %v33 = vld [vmem:[#allocation3 + $0x18] sm:$0xff]
    %v34 = vld [vmem:[%s1] sm:$0x1]
    %v36 = vlaneseq
    %v37 = vshrl.u32 %v36, 7
    %v38 = vsub.s32 0, %v37
    %v39 = vrot.slane %v34, %v38
    %v41 = vmul.f32 %v30, %v39
    %v42 = vmul.f32 %v31, %v39
    %v43 = vmul.f32 %v32, %v39
    %v44 = vmul.f32 %v33, %v39
    %vm45 = vcmask 261120
    %v46 = vsel %vm45, %v41, 0.0
    %47 = vadd.xlane.f32.xlu0 %v46
    %v48 = vpop.xlane.xlu0 %47
    %v49 = vsel %vm45, %v42, 0.0
    %50 = vadd.xlane.f32.xlu0 %v49
    %v51 = vpop.xlane.xlu0 %50
    %v52 = vsel %vm45, %v43, 0.0
    %53 = vadd.xlane.f32.xlu0 %v52
    %v54 = vpop.xlane.xlu0 %53
    %v55 = vsel %vm45, %v44, 0.0
    %56 = vadd.xlane.f32.xlu0 %v55
    %v57 = vpop.xlane.xlu0 %56
    %s58 = sld [smem:[#allocation2]]
    %v59 = vstv %s58
    %v60 = vadd.f32 %v48, %v59
    %v61 = vadd.f32 %v51, %v59
    %v62 = vadd.f32 %v54, %v59
    %v63 = vadd.f32 %v57, %v59
    %v64 = vxor.u32 %v60, 2147483648
    %v65 = vxor.u32 %v61, 2147483648
    %v66 = vxor.u32 %v62, 2147483648
    %v67 = vxor.u32 %v63, 2147483648
    %v68 = vmul.f32 %v64, 1.442695
    %v69 = vpow.pop %v68
    %v70 = vmul.f32 %v65, 1.442695
    %v71 = vpow.pop %v70
    %v72 = vmul.f32 %v66, 1.442695
    %v73 = vpow.pop %v72
    %v74 = vmul.f32 %v67, 1.442695
    %v75 = vpow.pop %v74
    %v76 = vadd.f32 %v69, 1.0
    %v77 = vadd.f32 %v71, 1.0
    %v78 = vadd.f32 %v73, 1.0
    %v79 = vadd.f32 %v75, 1.0
    %v80 = vrcp.pop %v76
    %v81 = vmul.f32 1.0, %v80
    %v82 = vrcp.pop %v77
    %v83 = vmul.f32 1.0, %v82
    %v84 = vrcp.pop %v78
    %v85 = vmul.f32 1.0, %v84
    %v86 = vrcp.pop %v79
    %v87 = vmul.f32 1.0, %v86
    %v88 = vlaneseq
    %v89 = vshrl.u32 %v88, 7
    %v90 = vadd.s32 %v89, 8
    %v91 = vlaneseq
    %v92 = vand.u32 %v91, 127
    %v97 = vlaneseq
    %v98 = vshrl.u32 %v97, 7
    %v99 = vsub.s32 0, %v98
    %v100 = vrot.slane %v81, %v99
    %v101 = vlaneseq
    %v102 = vshrl.u32 %v101, 7
    %v103 = vsub.s32 1, %v102
    %v104 = vrot.slane %v81, %v103
    %v105 = vlaneseq
    %v106 = vshrl.u32 %v105, 7
    %v107 = vsub.s32 2, %v106
    %v108 = vrot.slane %v81, %v107
    %v109 = vlaneseq
    %v110 = vshrl.u32 %v109, 7
    %v111 = vsub.s32 3, %v110
    %v112 = vrot.slane %v81, %v111
    %v113 = vlaneseq
    %v114 = vshrl.u32 %v113, 7
    %v115 = vsub.s32 4, %v114
    %v116 = vrot.slane %v81, %v115
    %v117 = vlaneseq
    %v118 = vshrl.u32 %v117, 7
    %v119 = vsub.s32 5, %v118
    %v120 = vrot.slane %v81, %v119
    %v121 = vlaneseq
    %v122 = vshrl.u32 %v121, 7
    %v123 = vsub.s32 6, %v122
    %v124 = vrot.slane %v81, %v123
    %v125 = vlaneseq
    %v126 = vshrl.u32 %v125, 7
    %v127 = vsub.s32 7, %v126
    %v128 = vrot.slane %v81, %v127
    %v129 = vlaneseq
    %v130 = vshrl.u32 %v129, 7
    %v131 = vsub.s32 0, %v130
    %v132 = vrot.slane %v83, %v131
    %v133 = vlaneseq
    %v134 = vshrl.u32 %v133, 7
    %v135 = vsub.s32 1, %v134
    %v136 = vrot.slane %v83, %v135
    %v137 = vlaneseq
    %v138 = vshrl.u32 %v137, 7
    %v139 = vsub.s32 2, %v138
    %v140 = vrot.slane %v83, %v139
    %v141 = vlaneseq
    %v142 = vshrl.u32 %v141, 7
    %v143 = vsub.s32 3, %v142
    %v144 = vrot.slane %v83, %v143
    %v145 = vlaneseq
    %v146 = vshrl.u32 %v145, 7
    %v147 = vsub.s32 4, %v146
    %v148 = vrot.slane %v83, %v147
    %v149 = vlaneseq
    %v150 = vshrl.u32 %v149, 7
    %v151 = vsub.s32 5, %v150
    %v152 = vrot.slane %v83, %v151
    %v153 = vlaneseq
    %v154 = vshrl.u32 %v153, 7
    %v155 = vsub.s32 6, %v154
    %v156 = vrot.slane %v83, %v155
    %v157 = vlaneseq
    %v158 = vshrl.u32 %v157, 7
    %v159 = vsub.s32 7, %v158
    %v160 = vrot.slane %v83, %v159
    %v161 = vlaneseq
    %v162 = vshrl.u32 %v161, 7
    %v163 = vsub.s32 0, %v162
    %v164 = vrot.slane %v85, %v163
    %v165 = vlaneseq
    %v166 = vshrl.u32 %v165, 7
    %v167 = vsub.s32 1, %v166
    %v168 = vrot.slane %v85, %v167
    %v169 = vlaneseq
    %v170 = vshrl.u32 %v169, 7
    %v171 = vsub.s32 2, %v170
    %v172 = vrot.slane %v85, %v171
    %v173 = vlaneseq
    %v174 = vshrl.u32 %v173, 7
    %v175 = vsub.s32 3, %v174
    %v176 = vrot.slane %v85, %v175
    %v177 = vlaneseq
    %v178 = vshrl.u32 %v177, 7
    %v179 = vsub.s32 4, %v178
    %v180 = vrot.slane %v85, %v179
    %v181 = vlaneseq
    %v182 = vshrl.u32 %v181, 7
    %v183 = vsub.s32 5, %v182
    %v184 = vrot.slane %v85, %v183
    %v185 = vlaneseq
    %v186 = vshrl.u32 %v185, 7
    %v187 = vsub.s32 6, %v186
    %v188 = vrot.slane %v85, %v187
    %v189 = vlaneseq
    %v190 = vshrl.u32 %v189, 7
    %v191 = vsub.s32 7, %v190
    %v192 = vrot.slane %v85, %v191
    %v193 = vlaneseq
    %v194 = vshrl.u32 %v193, 7
    %v195 = vsub.s32 0, %v194
    %v196 = vrot.slane %v87, %v195
    %v197 = vlaneseq
    %v198 = vshrl.u32 %v197, 7
    %v199 = vsub.s32 1, %v198
    %v200 = vrot.slane %v87, %v199
    %v201 = vlaneseq
    %v202 = vshrl.u32 %v201, 7
    %v203 = vsub.s32 2, %v202
    %v204 = vrot.slane %v87, %v203
    %v205 = vlaneseq
    %v206 = vshrl.u32 %v205, 7
    %v207 = vsub.s32 3, %v206
    %v208 = vrot.slane %v87, %v207
    %v209 = vlaneseq
    %v210 = vshrl.u32 %v209, 7
    %v211 = vsub.s32 4, %v210
    %v212 = vrot.slane %v87, %v211
    %v213 = vlaneseq
    %v214 = vshrl.u32 %v213, 7
    %v215 = vsub.s32 5, %v214
    %v216 = vrot.slane %v87, %v215
    %v217 = vlaneseq
    %v218 = vshrl.u32 %v217, 7
    %v219 = vsub.s32 6, %v218
    %v220 = vrot.slane %v87, %v219
    %v221 = vlaneseq
    %v222 = vshrl.u32 %v221, 7
    %v223 = vsub.s32 7, %v222
    %v224 = vrot.slane %v87, %v223
    %vm257 = vcmp.gt.f32.partialorder %v81, %v100
    %vm258 = vcmp.gt.f32.partialorder %v83, %v100
    %vm259 = vcmp.gt.f32.partialorder %v81, %v104
    %vm260 = vcmp.gt.f32.partialorder %v83, %v104
    %vm261 = vcmp.gt.f32.partialorder %v81, %v108
    %vm262 = vcmp.gt.f32.partialorder %v83, %v108
    %vm263 = vcmp.gt.f32.partialorder %v81, %v112
    %vm264 = vcmp.gt.f32.partialorder %v83, %v112
    %vm265 = vcmp.gt.f32.partialorder %v81, %v116
    %vm266 = vcmp.gt.f32.partialorder %v83, %v116
    %vm267 = vcmp.gt.f32.partialorder %v81, %v120
    %vm268 = vcmp.gt.f32.partialorder %v83, %v120
    %vm269 = vcmp.gt.f32.partialorder %v81, %v124
    %vm270 = vcmp.gt.f32.partialorder %v83, %v124
    %vm271 = vcmp.gt.f32.partialorder %v81, %v128
    %vm272 = vcmp.gt.f32.partialorder %v83, %v128
    %vm273 = vcmp.gt.f32.partialorder %v81, %v132
    %vm274 = vcmp.gt.f32.partialorder %v83, %v132
    %vm275 = vcmp.gt.f32.partialorder %v81, %v136
    %vm276 = vcmp.gt.f32.partialorder %v83, %v136
    %vm277 = vcmp.gt.f32.partialorder %v81, %v140
    %vm278 = vcmp.gt.f32.partialorder %v83, %v140
    %vm279 = vcmp.gt.f32.partialorder %v81, %v144
    %vm280 = vcmp.gt.f32.partialorder %v83, %v144
    %vm281 = vcmp.gt.f32.partialorder %v81, %v148
    %vm282 = vcmp.gt.f32.partialorder %v83, %v148
    %vm283 = vcmp.gt.f32.partialorder %v81, %v152
    %vm284 = vcmp.gt.f32.partialorder %v83, %v152
    %vm285 = vcmp.gt.f32.partialorder %v81, %v156
    %vm286 = vcmp.gt.f32.partialorder %v83, %v156
    %vm287 = vcmp.gt.f32.partialorder %v81, %v160
    %vm288 = vcmp.gt.f32.partialorder %v83, %v160
    %vm289 = vcmp.gt.f32.partialorder %v85, %v164
    %vm290 = vcmp.gt.f32.partialorder %v87, %v164
    %vm291 = vcmp.gt.f32.partialorder %v85, %v168
    %vm292 = vcmp.gt.f32.partialorder %v87, %v168
    %vm293 = vcmp.gt.f32.partialorder %v85, %v172
    %vm294 = vcmp.gt.f32.partialorder %v87, %v172
    %vm295 = vcmp.gt.f32.partialorder %v85, %v176
    %vm296 = vcmp.gt.f32.partialorder %v87, %v176
    %vm297 = vcmp.gt.f32.partialorder %v85, %v180
    %vm298 = vcmp.gt.f32.partialorder %v87, %v180
    %vm299 = vcmp.gt.f32.partialorder %v85, %v184
    %vm300 = vcmp.gt.f32.partialorder %v87, %v184
    %vm301 = vcmp.gt.f32.partialorder %v85, %v188
    %vm302 = vcmp.gt.f32.partialorder %v87, %v188
    %vm303 = vcmp.gt.f32.partialorder %v85, %v192
    %vm304 = vcmp.gt.f32.partialorder %v87, %v192
    %vm305 = vcmp.gt.f32.partialorder %v85, %v196
    %vm306 = vcmp.gt.f32.partialorder %v87, %v196
    %vm307 = vcmp.gt.f32.partialorder %v85, %v200
    %vm308 = vcmp.gt.f32.partialorder %v87, %v200
    %vm309 = vcmp.gt.f32.partialorder %v85, %v204
    %vm310 = vcmp.gt.f32.partialorder %v87, %v204
    %vm311 = vcmp.gt.f32.partialorder %v85, %v208
    %vm312 = vcmp.gt.f32.partialorder %v87, %v208
    %vm313 = vcmp.gt.f32.partialorder %v85, %v212
    %vm314 = vcmp.gt.f32.partialorder %v87, %v212
    %vm315 = vcmp.gt.f32.partialorder %v85, %v216
    %vm316 = vcmp.gt.f32.partialorder %v87, %v216
    %vm317 = vcmp.gt.f32.partialorder %v85, %v220
    %vm318 = vcmp.gt.f32.partialorder %v87, %v220
    %vm319 = vcmp.gt.f32.partialorder %v85, %v224
    %vm320 = vcmp.gt.f32.partialorder %v87, %v224
    %vm321 = vcmp.eq.f32.partialorder %v81, %v100
    %vm322 = vcmp.eq.f32.partialorder %v83, %v100
    %vm323 = vcmp.eq.f32.partialorder %v81, %v104
    %vm324 = vcmp.eq.f32.partialorder %v83, %v104
    %vm325 = vcmp.eq.f32.partialorder %v81, %v108
    %vm326 = vcmp.eq.f32.partialorder %v83, %v108
    %vm327 = vcmp.eq.f32.partialorder %v81, %v112
    %vm328 = vcmp.eq.f32.partialorder %v83, %v112
    %vm329 = vcmp.eq.f32.partialorder %v81, %v116
    %vm330 = vcmp.eq.f32.partialorder %v83, %v116
    %vm331 = vcmp.eq.f32.partialorder %v81, %v120
    %vm332 = vcmp.eq.f32.partialorder %v83, %v120
    %vm333 = vcmp.eq.f32.partialorder %v81, %v124
    %vm334 = vcmp.eq.f32.partialorder %v83, %v124
    %vm335 = vcmp.eq.f32.partialorder %v81, %v128
    %vm336 = vcmp.eq.f32.partialorder %v83, %v128
    %vm337 = vcmp.eq.f32.partialorder %v81, %v132
    %vm338 = vcmp.eq.f32.partialorder %v83, %v132
    %vm339 = vcmp.eq.f32.partialorder %v81, %v136
    %vm340 = vcmp.eq.f32.partialorder %v83, %v136
    %vm341 = vcmp.eq.f32.partialorder %v81, %v140
    %vm342 = vcmp.eq.f32.partialorder %v83, %v140
    %vm343 = vcmp.eq.f32.partialorder %v81, %v144
    %vm344 = vcmp.eq.f32.partialorder %v83, %v144
    %vm345 = vcmp.eq.f32.partialorder %v81, %v148
    %vm346 = vcmp.eq.f32.partialorder %v83, %v148
    %vm347 = vcmp.eq.f32.partialorder %v81, %v152
    %vm348 = vcmp.eq.f32.partialorder %v83, %v152
    %vm349 = vcmp.eq.f32.partialorder %v81, %v156
    %vm350 = vcmp.eq.f32.partialorder %v83, %v156
    %vm351 = vcmp.eq.f32.partialorder %v81, %v160
    %vm352 = vcmp.eq.f32.partialorder %v83, %v160
    %vm353 = vcmp.eq.f32.partialorder %v85, %v164
    %vm354 = vcmp.eq.f32.partialorder %v87, %v164
    %vm355 = vcmp.eq.f32.partialorder %v85, %v168
    %vm356 = vcmp.eq.f32.partialorder %v87, %v168
    %vm357 = vcmp.eq.f32.partialorder %v85, %v172
    %vm358 = vcmp.eq.f32.partialorder %v87, %v172
    %vm359 = vcmp.eq.f32.partialorder %v85, %v176
    %vm360 = vcmp.eq.f32.partialorder %v87, %v176
    %vm361 = vcmp.eq.f32.partialorder %v85, %v180
    %vm362 = vcmp.eq.f32.partialorder %v87, %v180
    %vm363 = vcmp.eq.f32.partialorder %v85, %v184
    %vm364 = vcmp.eq.f32.partialorder %v87, %v184
    %vm365 = vcmp.eq.f32.partialorder %v85, %v188
    %vm366 = vcmp.eq.f32.partialorder %v87, %v188
    %vm367 = vcmp.eq.f32.partialorder %v85, %v192
    %vm368 = vcmp.eq.f32.partialorder %v87, %v192
    %vm369 = vcmp.eq.f32.partialorder %v85, %v196
    %vm370 = vcmp.eq.f32.partialorder %v87, %v196
    %vm371 = vcmp.eq.f32.partialorder %v85, %v200
    %vm372 = vcmp.eq.f32.partialorder %v87, %v200
    %vm373 = vcmp.eq.f32.partialorder %v85, %v204
    %vm374 = vcmp.eq.f32.partialorder %v87, %v204
    %vm375 = vcmp.eq.f32.partialorder %v85, %v208
    %vm376 = vcmp.eq.f32.partialorder %v87, %v208
    %vm377 = vcmp.eq.f32.partialorder %v85, %v212
    %vm378 = vcmp.eq.f32.partialorder %v87, %v212
    %vm379 = vcmp.eq.f32.partialorder %v85, %v216
    %vm380 = vcmp.eq.f32.partialorder %v87, %v216
    %vm381 = vcmp.eq.f32.partialorder %v85, %v220
    %vm382 = vcmp.eq.f32.partialorder %v87, %v220
    %vm383 = vcmp.eq.f32.partialorder %v85, %v224
    %vm384 = vcmp.eq.f32.partialorder %v87, %v224
    %vm385 = vcmp.lt.s32.totalorder %v92, %v89
    %vm386 = vcmp.lt.s32.totalorder %v92, %v90
    %v387 = vsel %vm385, 1, 0
    %v388 = vsel %vm386, 1, 0
    %vm389 = vcmp.eq.s32.totalorder %v387, 1
    %vm390 = vcmp.eq.s32.totalorder %v388, 1
    %v391 = vsel %vm389, 1, 0
    %v392 = vsel %vm390, 1, 0
    %v393 = vlaneseq
    %v394 = vshrl.u32 %v393, 7
    %v395 = vsub.s32 0, %v394
    %v396 = vrot.slane %v391, %v395
    %398 = vbcast.lane.b32.xlu0 %v396, 256
    %v399 = vpop.permute.xlu0 %398
    %s401 = sor.u32 256, 8
    %402 = vbcast.lane.b32.xlu0 %v396, %s401
    %v403 = vpop.permute.xlu0 %402
    %v404 = vlaneseq
    %v405 = vshrl.u32 %v404, 7
    %v406 = vsub.s32 1, %v405
    %v407 = vrot.slane %v391, %v406
    %409 = vbcast.lane.b32.xlu0 %v407, 256
    %v410 = vpop.permute.xlu0 %409
    %s412 = sor.u32 256, 8
    %413 = vbcast.lane.b32.xlu0 %v407, %s412
    %v414 = vpop.permute.xlu0 %413
    %v415 = vlaneseq
    %v416 = vshrl.u32 %v415, 7
    %v417 = vsub.s32 2, %v416
    %v418 = vrot.slane %v391, %v417
    %420 = vbcast.lane.b32.xlu0 %v418, 256
    %v421 = vpop.permute.xlu0 %420
    %s423 = sor.u32 256, 8
    %424 = vbcast.lane.b32.xlu0 %v418, %s423
    %v425 = vpop.permute.xlu0 %424
    %v426 = vlaneseq
    %v427 = vshrl.u32 %v426, 7
    %v428 = vsub.s32 3, %v427
    %v429 = vrot.slane %v391, %v428
    %431 = vbcast.lane.b32.xlu0 %v429, 256
    %v432 = vpop.permute.xlu0 %431
    %s434 = sor.u32 256, 8
    %435 = vbcast.lane.b32.xlu0 %v429, %s434
    %v436 = vpop.permute.xlu0 %435
    %v437 = vlaneseq
    %v438 = vshrl.u32 %v437, 7
    %v439 = vsub.s32 4, %v438
    %v440 = vrot.slane %v391, %v439
    %442 = vbcast.lane.b32.xlu0 %v440, 256
    %v443 = vpop.permute.xlu0 %442
    %s445 = sor.u32 256, 8
    %446 = vbcast.lane.b32.xlu0 %v440, %s445
    %v447 = vpop.permute.xlu0 %446
    %v448 = vlaneseq
    %v449 = vshrl.u32 %v448, 7
    %v450 = vsub.s32 5, %v449
    %v451 = vrot.slane %v391, %v450
    %453 = vbcast.lane.b32.xlu0 %v451, 256
    %v454 = vpop.permute.xlu0 %453
    %s456 = sor.u32 256, 8
    %457 = vbcast.lane.b32.xlu0 %v451, %s456
    %v458 = vpop.permute.xlu0 %457
    %v459 = vlaneseq
    %v460 = vshrl.u32 %v459, 7
    %v461 = vsub.s32 6, %v460
    %v462 = vrot.slane %v391, %v461
    %464 = vbcast.lane.b32.xlu0 %v462, 256
    %v465 = vpop.permute.xlu0 %464
    %s467 = sor.u32 256, 8
    %468 = vbcast.lane.b32.xlu0 %v462, %s467
    %v469 = vpop.permute.xlu0 %468
    %v470 = vlaneseq
    %v471 = vshrl.u32 %v470, 7
    %v472 = vsub.s32 7, %v471
    %v473 = vrot.slane %v391, %v472
    %475 = vbcast.lane.b32.xlu0 %v473, 256
    %v476 = vpop.permute.xlu0 %475
    %s478 = sor.u32 256, 8
    %479 = vbcast.lane.b32.xlu0 %v473, %s478
    %v480 = vpop.permute.xlu0 %479
    %v481 = vlaneseq
    %v482 = vshrl.u32 %v481, 7
    %v483 = vsub.s32 0, %v482
    %v484 = vrot.slane %v392, %v483
    %486 = vbcast.lane.b32.xlu0 %v484, 256
    %v487 = vpop.permute.xlu0 %486
    %s489 = sor.u32 256, 8
    %490 = vbcast.lane.b32.xlu0 %v484, %s489
    %v491 = vpop.permute.xlu0 %490
    %v492 = vlaneseq
    %v493 = vshrl.u32 %v492, 7
    %v494 = vsub.s32 1, %v493
    %v495 = vrot.slane %v392, %v494
    %497 = vbcast.lane.b32.xlu0 %v495, 256
    %v498 = vpop.permute.xlu0 %497
    %s500 = sor.u32 256, 8
    %501 = vbcast.lane.b32.xlu0 %v495, %s500
    %v502 = vpop.permute.xlu0 %501
    %v503 = vlaneseq
    %v504 = vshrl.u32 %v503, 7
    %v505 = vsub.s32 2, %v504
    %v506 = vrot.slane %v392, %v505
    %508 = vbcast.lane.b32.xlu0 %v506, 256
    %v509 = vpop.permute.xlu0 %508
    %s511 = sor.u32 256, 8
    %512 = vbcast.lane.b32.xlu0 %v506, %s511
    %v513 = vpop.permute.xlu0 %512
    %v514 = vlaneseq
    %v515 = vshrl.u32 %v514, 7
    %v516 = vsub.s32 3, %v515
    %v517 = vrot.slane %v392, %v516
    %519 = vbcast.lane.b32.xlu0 %v517, 256
    %v520 = vpop.permute.xlu0 %519
    %s522 = sor.u32 256, 8
    %523 = vbcast.lane.b32.xlu0 %v517, %s522
    %v524 = vpop.permute.xlu0 %523
    %v525 = vlaneseq
    %v526 = vshrl.u32 %v525, 7
    %v527 = vsub.s32 4, %v526
    %v528 = vrot.slane %v392, %v527
    %530 = vbcast.lane.b32.xlu0 %v528, 256
    %v531 = vpop.permute.xlu0 %530
    %s533 = sor.u32 256, 8
    %534 = vbcast.lane.b32.xlu0 %v528, %s533
    %v535 = vpop.permute.xlu0 %534
    %v536 = vlaneseq
    %v537 = vshrl.u32 %v536, 7
    %v538 = vsub.s32 5, %v537
    %v539 = vrot.slane %v392, %v538
    %541 = vbcast.lane.b32.xlu0 %v539, 256
    %v542 = vpop.permute.xlu0 %541
    %s544 = sor.u32 256, 8
    %545 = vbcast.lane.b32.xlu0 %v539, %s544
    %v546 = vpop.permute.xlu0 %545
    %v547 = vlaneseq
    %v548 = vshrl.u32 %v547, 7
    %v549 = vsub.s32 6, %v548
    %v550 = vrot.slane %v392, %v549
    %552 = vbcast.lane.b32.xlu0 %v550, 256
    %v553 = vpop.permute.xlu0 %552
    %s555 = sor.u32 256, 8
    %556 = vbcast.lane.b32.xlu0 %v550, %s555
    %v557 = vpop.permute.xlu0 %556
    %v558 = vlaneseq
    %v559 = vshrl.u32 %v558, 7
    %v560 = vsub.s32 7, %v559
    %v561 = vrot.slane %v392, %v560
    %563 = vbcast.lane.b32.xlu0 %v561, 256
    %v564 = vpop.permute.xlu0 %563
    %s566 = sor.u32 256, 8
    %567 = vbcast.lane.b32.xlu0 %v561, %s566
    %v568 = vpop.permute.xlu0 %567
    %vm569 = vcmp.ne.s32.totalorder %v399, 0
    %vm570 = vcmp.ne.s32.totalorder %v403, 0
    %vm571 = vcmp.ne.s32.totalorder %v410, 0
    %vm572 = vcmp.ne.s32.totalorder %v414, 0
    %vm573 = vcmp.ne.s32.totalorder %v421, 0
    %vm574 = vcmp.ne.s32.totalorder %v425, 0
    %vm575 = vcmp.ne.s32.totalorder %v432, 0
    %vm576 = vcmp.ne.s32.totalorder %v436, 0
    %vm577 = vcmp.ne.s32.totalorder %v443, 0
    %vm578 = vcmp.ne.s32.totalorder %v447, 0
    %vm579 = vcmp.ne.s32.totalorder %v454, 0
    %vm580 = vcmp.ne.s32.totalorder %v458, 0
    %vm581 = vcmp.ne.s32.totalorder %v465, 0
    %vm582 = vcmp.ne.s32.totalorder %v469, 0
    %vm583 = vcmp.ne.s32.totalorder %v476, 0
    %vm584 = vcmp.ne.s32.totalorder %v480, 0
    %vm585 = vcmp.ne.s32.totalorder %v487, 0
    %vm586 = vcmp.ne.s32.totalorder %v491, 0
    %vm587 = vcmp.ne.s32.totalorder %v498, 0
    %vm588 = vcmp.ne.s32.totalorder %v502, 0
    %vm589 = vcmp.ne.s32.totalorder %v509, 0
    %vm590 = vcmp.ne.s32.totalorder %v513, 0
    %vm591 = vcmp.ne.s32.totalorder %v520, 0
    %vm592 = vcmp.ne.s32.totalorder %v524, 0
    %vm593 = vcmp.ne.s32.totalorder %v531, 0
    %vm594 = vcmp.ne.s32.totalorder %v535, 0
    %vm595 = vcmp.ne.s32.totalorder %v542, 0
    %vm596 = vcmp.ne.s32.totalorder %v546, 0
    %vm597 = vcmp.ne.s32.totalorder %v553, 0
    %vm598 = vcmp.ne.s32.totalorder %v557, 0
    %vm599 = vcmp.ne.s32.totalorder %v564, 0
    %vm600 = vcmp.ne.s32.totalorder %v568, 0
    %vm601 = vmand %vm321, %vm569
    %vm602 = vmand %vm322, %vm570
    %vm603 = vmand %vm323, %vm571
    %vm604 = vmand %vm324, %vm572
    %vm605 = vmand %vm325, %vm573
    %vm606 = vmand %vm326, %vm574
    %vm607 = vmand %vm327, %vm575
    %vm608 = vmand %vm328, %vm576
    %vm609 = vmand %vm329, %vm577
    %vm610 = vmand %vm330, %vm578
    %vm611 = vmand %vm331, %vm579
    %vm612 = vmand %vm332, %vm580
    %vm613 = vmand %vm333, %vm581
    %vm614 = vmand %vm334, %vm582
    %vm615 = vmand %vm335, %vm583
    %vm616 = vmand %vm336, %vm584
    %vm617 = vmand %vm337, %vm585
    %vm618 = vmand %vm338, %vm586
    %vm619 = vmand %vm339, %vm587
    %vm620 = vmand %vm340, %vm588
    %vm621 = vmand %vm341, %vm589
    %vm622 = vmand %vm342, %vm590
    %vm623 = vmand %vm343, %vm591
    %vm624 = vmand %vm344, %vm592
    %vm625 = vmand %vm345, %vm593
    %vm626 = vmand %vm346, %vm594
    %vm627 = vmand %vm347, %vm595
    %vm628 = vmand %vm348, %vm596
    %vm629 = vmand %vm349, %vm597
    %vm630 = vmand %vm350, %vm598
    %vm631 = vmand %vm351, %vm599
    %vm632 = vmand %vm352, %vm600
    %vm633 = vmand %vm353, %vm569
    %vm634 = vmand %vm354, %vm570
    %vm635 = vmand %vm355, %vm571
    %vm636 = vmand %vm356, %vm572
    %vm637 = vmand %vm357, %vm573
    %vm638 = vmand %vm358, %vm574
    %vm639 = vmand %vm359, %vm575
    %vm640 = vmand %vm360, %vm576
    %vm641 = vmand %vm361, %vm577
    %vm642 = vmand %vm362, %vm578
    %vm643 = vmand %vm363, %vm579
    %vm644 = vmand %vm364, %vm580
    %vm645 = vmand %vm365, %vm581
    %vm646 = vmand %vm366, %vm582
    %vm647 = vmand %vm367, %vm583
    %vm648 = vmand %vm368, %vm584
    %vm649 = vmand %vm369, %vm585
    %vm650 = vmand %vm370, %vm586
    %vm651 = vmand %vm371, %vm587
    %vm652 = vmand %vm372, %vm588
    %vm653 = vmand %vm373, %vm589
    %vm654 = vmand %vm374, %vm590
    %vm655 = vmand %vm375, %vm591
    %vm656 = vmand %vm376, %vm592
    %vm657 = vmand %vm377, %vm593
    %vm658 = vmand %vm378, %vm594
    %vm659 = vmand %vm379, %vm595
    %vm660 = vmand %vm380, %vm596
    %vm661 = vmand %vm381, %vm597
    %vm662 = vmand %vm382, %vm598
    %vm663 = vmand %vm383, %vm599
    %vm664 = vmand %vm384, %vm600
    %vm665 = vmor %vm257, %vm601
    %vm666 = vmor %vm258, %vm602
    %vm667 = vmor %vm259, %vm603
    %vm668 = vmor %vm260, %vm604
    %vm669 = vmor %vm261, %vm605
    %vm670 = vmor %vm262, %vm606
    %vm671 = vmor %vm263, %vm607
    %vm672 = vmor %vm264, %vm608
    %vm673 = vmor %vm265, %vm609
    %vm674 = vmor %vm266, %vm610
    %vm675 = vmor %vm267, %vm611
    %vm676 = vmor %vm268, %vm612
    %vm677 = vmor %vm269, %vm613
    %vm678 = vmor %vm270, %vm614
    %vm679 = vmor %vm271, %vm615
    %vm680 = vmor %vm272, %vm616
    %vm681 = vmor %vm273, %vm617
    %vm682 = vmor %vm274, %vm618
    %vm683 = vmor %vm275, %vm619
    %vm684 = vmor %vm276, %vm620
    %vm685 = vmor %vm277, %vm621
    %vm686 = vmor %vm278, %vm622
    %vm687 = vmor %vm279, %vm623
    %vm688 = vmor %vm280, %vm624
    %vm689 = vmor %vm281, %vm625
    %vm690 = vmor %vm282, %vm626
    %vm691 = vmor %vm283, %vm627
    %vm692 = vmor %vm284, %vm628
    %vm693 = vmor %vm285, %vm629
    %vm694 = vmor %vm286, %vm630
    %vm695 = vmor %vm287, %vm631
    %vm696 = vmor %vm288, %vm632
    %vm697 = vmor %vm289, %vm633
    %vm698 = vmor %vm290, %vm634
    %vm699 = vmor %vm291, %vm635
    %vm700 = vmor %vm292, %vm636
    %vm701 = vmor %vm293, %vm637
    %vm702 = vmor %vm294, %vm638
    %vm703 = vmor %vm295, %vm639
    %vm704 = vmor %vm296, %vm640
    %vm705 = vmor %vm297, %vm641
    %vm706 = vmor %vm298, %vm642
    %vm707 = vmor %vm299, %vm643
    %vm708 = vmor %vm300, %vm644
    %vm709 = vmor %vm301, %vm645
    %vm710 = vmor %vm302, %vm646
    %vm711 = vmor %vm303, %vm647
    %vm712 = vmor %vm304, %vm648
    %vm713 = vmor %vm305, %vm649
    %vm714 = vmor %vm306, %vm650
    %vm715 = vmor %vm307, %vm651
    %vm716 = vmor %vm308, %vm652
    %vm717 = vmor %vm309, %vm653
    %vm718 = vmor %vm310, %vm654
    %vm719 = vmor %vm311, %vm655
    %vm720 = vmor %vm312, %vm656
    %vm721 = vmor %vm313, %vm657
    %vm722 = vmor %vm314, %vm658
    %vm723 = vmor %vm315, %vm659
    %vm724 = vmor %vm316, %vm660
    %vm725 = vmor %vm317, %vm661
    %vm726 = vmor %vm318, %vm662
    %vm727 = vmor %vm319, %vm663
    %vm728 = vmor %vm320, %vm664
    %v729 = vsel %vm665, 1.0, 0.0
    %v730 = vsel %vm666, 1.0, 0.0
    %v731 = vsel %vm667, 1.0, 0.0
    %v732 = vsel %vm668, 1.0, 0.0
    %v733 = vsel %vm669, 1.0, 0.0
    %v734 = vsel %vm670, 1.0, 0.0
    %v735 = vsel %vm671, 1.0, 0.0
    %v736 = vsel %vm672, 1.0, 0.0
    %v737 = vsel %vm673, 1.0, 0.0
    %v738 = vsel %vm674, 1.0, 0.0
    %v739 = vsel %vm675, 1.0, 0.0
    %v740 = vsel %vm676, 1.0, 0.0
    %v741 = vsel %vm677, 1.0, 0.0
    %v742 = vsel %vm678, 1.0, 0.0
    %v743 = vsel %vm679, 1.0, 0.0
    %v744 = vsel %vm680, 1.0, 0.0
    %v745 = vsel %vm681, 1.0, 0.0
    %v746 = vsel %vm682, 1.0, 0.0
    %v747 = vsel %vm683, 1.0, 0.0
    %v748 = vsel %vm684, 1.0, 0.0
    %v749 = vsel %vm685, 1.0, 0.0
    %v750 = vsel %vm686, 1.0, 0.0
    %v751 = vsel %vm687, 1.0, 0.0
    %v752 = vsel %vm688, 1.0, 0.0
    %v753 = vsel %vm689, 1.0, 0.0
    %v754 = vsel %vm690, 1.0, 0.0
    %v755 = vsel %vm691, 1.0, 0.0
    %v756 = vsel %vm692, 1.0, 0.0
    %v757 = vsel %vm693, 1.0, 0.0
    %v758 = vsel %vm694, 1.0, 0.0
    %v759 = vsel %vm695, 1.0, 0.0
    %v760 = vsel %vm696, 1.0, 0.0
    %v761 = vsel %vm697, 1.0, 0.0
    %v762 = vsel %vm698, 1.0, 0.0
    %v763 = vsel %vm699, 1.0, 0.0
    %v764 = vsel %vm700, 1.0, 0.0
    %v765 = vsel %vm701, 1.0, 0.0
    %v766 = vsel %vm702, 1.0, 0.0
    %v767 = vsel %vm703, 1.0, 0.0
    %v768 = vsel %vm704, 1.0, 0.0
    %v769 = vsel %vm705, 1.0, 0.0
    %v770 = vsel %vm706, 1.0, 0.0
    %v771 = vsel %vm707, 1.0, 0.0
    %v772 = vsel %vm708, 1.0, 0.0
    %v773 = vsel %vm709, 1.0, 0.0
    %v774 = vsel %vm710, 1.0, 0.0
    %v775 = vsel %vm711, 1.0, 0.0
    %v776 = vsel %vm712, 1.0, 0.0
    %v777 = vsel %vm713, 1.0, 0.0
    %v778 = vsel %vm714, 1.0, 0.0
    %v779 = vsel %vm715, 1.0, 0.0
    %v780 = vsel %vm716, 1.0, 0.0
    %v781 = vsel %vm717, 1.0, 0.0
    %v782 = vsel %vm718, 1.0, 0.0
    %v783 = vsel %vm719, 1.0, 0.0
    %v784 = vsel %vm720, 1.0, 0.0
    %v785 = vsel %vm721, 1.0, 0.0
    %v786 = vsel %vm722, 1.0, 0.0
    %v787 = vsel %vm723, 1.0, 0.0
    %v788 = vsel %vm724, 1.0, 0.0
    %v789 = vsel %vm725, 1.0, 0.0
    %v790 = vsel %vm726, 1.0, 0.0
    %v791 = vsel %vm727, 1.0, 0.0
    %v792 = vsel %vm728, 1.0, 0.0
    %857 = vset.pattern.permute.xlu0 0
    %858 = vperm.xlu0 %857, %v729
    %v859 = vpop.permute.xlu0 %858
    %860 = vset.pattern.permute.xlu0 0
    %861 = vperm.xlu0 %860, %v730
    %v862 = vpop.permute.xlu0 %861
    %863 = vset.pattern.permute.xlu0 0
    %864 = vperm.xlu0 %863, %v731
    %v865 = vpop.permute.xlu0 %864
    %866 = vset.pattern.permute.xlu0 0
    %867 = vperm.xlu0 %866, %v732
    %v868 = vpop.permute.xlu0 %867
    %869 = vset.pattern.permute.xlu0 0
    %870 = vperm.xlu0 %869, %v733
    %v871 = vpop.permute.xlu0 %870
    %872 = vset.pattern.permute.xlu0 0
    %873 = vperm.xlu0 %872, %v734
    %v874 = vpop.permute.xlu0 %873
    %875 = vset.pattern.permute.xlu0 0
    %876 = vperm.xlu0 %875, %v735
    %v877 = vpop.permute.xlu0 %876
    %878 = vset.pattern.permute.xlu0 0
    %879 = vperm.xlu0 %878, %v736
    %v880 = vpop.permute.xlu0 %879
    %881 = vset.pattern.permute.xlu0 0
    %882 = vperm.xlu0 %881, %v737
    %v883 = vpop.permute.xlu0 %882
    %884 = vset.pattern.permute.xlu0 0
    %885 = vperm.xlu0 %884, %v738
    %v886 = vpop.permute.xlu0 %885
    %887 = vset.pattern.permute.xlu0 0
    %888 = vperm.xlu0 %887, %v739
    %v889 = vpop.permute.xlu0 %888
    %890 = vset.pattern.permute.xlu0 0
    %891 = vperm.xlu0 %890, %v740
    %v892 = vpop.permute.xlu0 %891
    %893 = vset.pattern.permute.xlu0 0
    %894 = vperm.xlu0 %893, %v741
    %v895 = vpop.permute.xlu0 %894
    %896 = vset.pattern.permute.xlu0 0
    %897 = vperm.xlu0 %896, %v742
    %v898 = vpop.permute.xlu0 %897
    %899 = vset.pattern.permute.xlu0 0
    %900 = vperm.xlu0 %899, %v743
    %v901 = vpop.permute.xlu0 %900
    %902 = vset.pattern.permute.xlu0 0
    %903 = vperm.xlu0 %902, %v744
    %v904 = vpop.permute.xlu0 %903
    %905 = vset.pattern.permute.xlu0 0
    %906 = vperm.xlu0 %905, %v745
    %v907 = vpop.permute.xlu0 %906
    %908 = vset.pattern.permute.xlu0 0
    %909 = vperm.xlu0 %908, %v746
    %v910 = vpop.permute.xlu0 %909
    %911 = vset.pattern.permute.xlu0 0
    %912 = vperm.xlu0 %911, %v747
    %v913 = vpop.permute.xlu0 %912
    %914 = vset.pattern.permute.xlu0 0
    %915 = vperm.xlu0 %914, %v748
    %v916 = vpop.permute.xlu0 %915
    %917 = vset.pattern.permute.xlu0 0
    %918 = vperm.xlu0 %917, %v749
    %v919 = vpop.permute.xlu0 %918
    %920 = vset.pattern.permute.xlu0 0
    %921 = vperm.xlu0 %920, %v750
    %v922 = vpop.permute.xlu0 %921
    %923 = vset.pattern.permute.xlu0 0
    %924 = vperm.xlu0 %923, %v751
    %v925 = vpop.permute.xlu0 %924
    %926 = vset.pattern.permute.xlu0 0
    %927 = vperm.xlu0 %926, %v752
    %v928 = vpop.permute.xlu0 %927
    %929 = vset.pattern.permute.xlu0 0
    %930 = vperm.xlu0 %929, %v753
    %v931 = vpop.permute.xlu0 %930
    %932 = vset.pattern.permute.xlu0 0
    %933 = vperm.xlu0 %932, %v754
    %v934 = vpop.permute.xlu0 %933
    %935 = vset.pattern.permute.xlu0 0
    %936 = vperm.xlu0 %935, %v755
    %v937 = vpop.permute.xlu0 %936
    %938 = vset.pattern.permute.xlu0 0
    %939 = vperm.xlu0 %938, %v756
    %v940 = vpop.permute.xlu0 %939
    %941 = vset.pattern.permute.xlu0 0
    %942 = vperm.xlu0 %941, %v757
    %v943 = vpop.permute.xlu0 %942
    %944 = vset.pattern.permute.xlu0 0
    %945 = vperm.xlu0 %944, %v758
    %v946 = vpop.permute.xlu0 %945
    %947 = vset.pattern.permute.xlu0 0
    %948 = vperm.xlu0 %947, %v759
    %v949 = vpop.permute.xlu0 %948
    %950 = vset.pattern.permute.xlu0 0
    %951 = vperm.xlu0 %950, %v760
    %v952 = vpop.permute.xlu0 %951
    %953 = vset.pattern.permute.xlu0 0
    %954 = vperm.xlu0 %953, %v761
    %v955 = vpop.permute.xlu0 %954
    %956 = vset.pattern.permute.xlu0 0
    %957 = vperm.xlu0 %956, %v762
    %v958 = vpop.permute.xlu0 %957
    %959 = vset.pattern.permute.xlu0 0
    %960 = vperm.xlu0 %959, %v763
    %v961 = vpop.permute.xlu0 %960
    %962 = vset.pattern.permute.xlu0 0
    %963 = vperm.xlu0 %962, %v764
    %v964 = vpop.permute.xlu0 %963
    %965 = vset.pattern.permute.xlu0 0
    %966 = vperm.xlu0 %965, %v765
    %v967 = vpop.permute.xlu0 %966
    %968 = vset.pattern.permute.xlu0 0
    %969 = vperm.xlu0 %968, %v766
    %v970 = vpop.permute.xlu0 %969
    %971 = vset.pattern.permute.xlu0 0
    %972 = vperm.xlu0 %971, %v767
    %v973 = vpop.permute.xlu0 %972
    %974 = vset.pattern.permute.xlu0 0
    %975 = vperm.xlu0 %974, %v768
    %v976 = vpop.permute.xlu0 %975
    %977 = vset.pattern.permute.xlu0 0
    %978 = vperm.xlu0 %977, %v769
    %v979 = vpop.permute.xlu0 %978
    %980 = vset.pattern.permute.xlu0 0
    %981 = vperm.xlu0 %980, %v770
    %v982 = vpop.permute.xlu0 %981
    %983 = vset.pattern.permute.xlu0 0
    %984 = vperm.xlu0 %983, %v771
    %v985 = vpop.permute.xlu0 %984
    %986 = vset.pattern.permute.xlu0 0
    %987 = vperm.xlu0 %986, %v772
    %v988 = vpop.permute.xlu0 %987
    %989 = vset.pattern.permute.xlu0 0
    %990 = vperm.xlu0 %989, %v773
    %v991 = vpop.permute.xlu0 %990
    %992 = vset.pattern.permute.xlu0 0
    %993 = vperm.xlu0 %992, %v774
    %v994 = vpop.permute.xlu0 %993
    %995 = vset.pattern.permute.xlu0 0
    %996 = vperm.xlu0 %995, %v775
    %v997 = vpop.permute.xlu0 %996
    %998 = vset.pattern.permute.xlu0 0
    %999 = vperm.xlu0 %998, %v776
    %v1000 = vpop.permute.xlu0 %999
    %1001 = vset.pattern.permute.xlu0 0
    %1002 = vperm.xlu0 %1001, %v777
    %v1003 = vpop.permute.xlu0 %1002
    %1004 = vset.pattern.permute.xlu0 0
    %1005 = vperm.xlu0 %1004, %v778
    %v1006 = vpop.permute.xlu0 %1005
    %1007 = vset.pattern.permute.xlu0 0
    %1008 = vperm.xlu0 %1007, %v779
    %v1009 = vpop.permute.xlu0 %1008
    %1010 = vset.pattern.permute.xlu0 0
    %1011 = vperm.xlu0 %1010, %v780
    %v1012 = vpop.permute.xlu0 %1011
    %1013 = vset.pattern.permute.xlu0 0
    %1014 = vperm.xlu0 %1013, %v781
    %v1015 = vpop.permute.xlu0 %1014
    %1016 = vset.pattern.permute.xlu0 0
    %1017 = vperm.xlu0 %1016, %v782
    %v1018 = vpop.permute.xlu0 %1017
    %1019 = vset.pattern.permute.xlu0 0
    %1020 = vperm.xlu0 %1019, %v783
    %v1021 = vpop.permute.xlu0 %1020
    %1022 = vset.pattern.permute.xlu0 0
    %1023 = vperm.xlu0 %1022, %v784
    %v1024 = vpop.permute.xlu0 %1023
    %1025 = vset.pattern.permute.xlu0 0
    %1026 = vperm.xlu0 %1025, %v785
    %v1027 = vpop.permute.xlu0 %1026
    %1028 = vset.pattern.permute.xlu0 0
    %1029 = vperm.xlu0 %1028, %v786
    %v1030 = vpop.permute.xlu0 %1029
    %1031 = vset.pattern.permute.xlu0 0
    %1032 = vperm.xlu0 %1031, %v787
    %v1033 = vpop.permute.xlu0 %1032
    %1034 = vset.pattern.permute.xlu0 0
    %1035 = vperm.xlu0 %1034, %v788
    %v1036 = vpop.permute.xlu0 %1035
    %1037 = vset.pattern.permute.xlu0 0
    %1038 = vperm.xlu0 %1037, %v789
    %v1039 = vpop.permute.xlu0 %1038
    %1040 = vset.pattern.permute.xlu0 0
    %1041 = vperm.xlu0 %1040, %v790
    %v1042 = vpop.permute.xlu0 %1041
    %1043 = vset.pattern.permute.xlu0 0
    %1044 = vperm.xlu0 %1043, %v791
    %v1045 = vpop.permute.xlu0 %1044
    %1046 = vset.pattern.permute.xlu0 0
    %1047 = vperm.xlu0 %1046, %v792
    %v1048 = vpop.permute.xlu0 %1047
    %v1049 = vlaneseq
    %v1050 = vshrl.u32 %v1049, 7
    %v1051 = vsub.s32 %v92, %v1050
    %v1052 = vrot.slane %v859, %v1051
    %v1053 = vadd.s32 %v92, 4294967288
    %v1054 = vlaneseq
    %v1055 = vshrl.u32 %v1054, 7
    %v1056 = vsub.s32 %v1053, %v1055
    %v1057 = vrot.slane %v862, %v1056
    %vm1058 = vcmask 130112
    %v1059 = vsel %vm1058, %v1057, %v1052
    %v1060 = vlaneseq
    %v1061 = vshrl.u32 %v1060, 7
    %v1062 = vsub.s32 %v92, %v1061
    %v1063 = vrot.slane %v865, %v1062
    %v1064 = vlaneseq
    %v1065 = vshrl.u32 %v1064, 7
    %v1066 = vsub.s32 %v1053, %v1065
    %v1067 = vrot.slane %v868, %v1066
    %v1068 = vsel %vm1058, %v1067, %v1063
    %v1069 = vlaneseq
    %v1070 = vshrl.u32 %v1069, 7
    %v1071 = vsub.s32 %v92, %v1070
    %v1072 = vrot.slane %v871, %v1071
    %v1073 = vlaneseq
    %v1074 = vshrl.u32 %v1073, 7
    %v1075 = vsub.s32 %v1053, %v1074
    %v1076 = vrot.slane %v874, %v1075
    %v1077 = vsel %vm1058, %v1076, %v1072
    %v1078 = vlaneseq
    %v1079 = vshrl.u32 %v1078, 7
    %v1080 = vsub.s32 %v92, %v1079
    %v1081 = vrot.slane %v877, %v1080
    %v1082 = vlaneseq
    %v1083 = vshrl.u32 %v1082, 7
    %v1084 = vsub.s32 %v1053, %v1083
    %v1085 = vrot.slane %v880, %v1084
    %v1086 = vsel %vm1058, %v1085, %v1081
    %v1087 = vlaneseq
    %v1088 = vshrl.u32 %v1087, 7
    %v1089 = vsub.s32 %v92, %v1088
    %v1090 = vrot.slane %v883, %v1089
    %v1091 = vlaneseq
    %v1092 = vshrl.u32 %v1091, 7
    %v1093 = vsub.s32 %v1053, %v1092
    %v1094 = vrot.slane %v886, %v1093
    %v1095 = vsel %vm1058, %v1094, %v1090
    %v1096 = vlaneseq
    %v1097 = vshrl.u32 %v1096, 7
    %v1098 = vsub.s32 %v92, %v1097
    %v1099 = vrot.slane %v889, %v1098
    %v1100 = vlaneseq
    %v1101 = vshrl.u32 %v1100, 7
    %v1102 = vsub.s32 %v1053, %v1101
    %v1103 = vrot.slane %v892, %v1102
    %v1104 = vsel %vm1058, %v1103, %v1099
    %v1105 = vlaneseq
    %v1106 = vshrl.u32 %v1105, 7
    %v1107 = vsub.s32 %v92, %v1106
    %v1108 = vrot.slane %v895, %v1107
    %v1109 = vlaneseq
    %v1110 = vshrl.u32 %v1109, 7
    %v1111 = vsub.s32 %v1053, %v1110
    %v1112 = vrot.slane %v898, %v1111
    %v1113 = vsel %vm1058, %v1112, %v1108
    %v1114 = vlaneseq
    %v1115 = vshrl.u32 %v1114, 7
    %v1116 = vsub.s32 %v92, %v1115
    %v1117 = vrot.slane %v901, %v1116
    %v1118 = vlaneseq
    %v1119 = vshrl.u32 %v1118, 7
    %v1120 = vsub.s32 %v1053, %v1119
    %v1121 = vrot.slane %v904, %v1120
    %v1122 = vsel %vm1058, %v1121, %v1117
    %v1123 = vlaneseq
    %v1124 = vshrl.u32 %v1123, 7
    %v1125 = vsub.s32 %v92, %v1124
    %v1126 = vrot.slane %v907, %v1125
    %v1127 = vlaneseq
    %v1128 = vshrl.u32 %v1127, 7
    %v1129 = vsub.s32 %v1053, %v1128
    %v1130 = vrot.slane %v910, %v1129
    %v1131 = vsel %vm1058, %v1130, %v1126
    %v1132 = vlaneseq
    %v1133 = vshrl.u32 %v1132, 7
    %v1134 = vsub.s32 %v92, %v1133
    %v1135 = vrot.slane %v913, %v1134
    %v1136 = vlaneseq
    %v1137 = vshrl.u32 %v1136, 7
    %v1138 = vsub.s32 %v1053, %v1137
    %v1139 = vrot.slane %v916, %v1138
    %v1140 = vsel %vm1058, %v1139, %v1135
    %v1141 = vlaneseq
    %v1142 = vshrl.u32 %v1141, 7
    %v1143 = vsub.s32 %v92, %v1142
    %v1144 = vrot.slane %v919, %v1143
    %v1145 = vlaneseq
    %v1146 = vshrl.u32 %v1145, 7
    %v1147 = vsub.s32 %v1053, %v1146
    %v1148 = vrot.slane %v922, %v1147
    %v1149 = vsel %vm1058, %v1148, %v1144
    %v1150 = vlaneseq
    %v1151 = vshrl.u32 %v1150, 7
    %v1152 = vsub.s32 %v92, %v1151
    %v1153 = vrot.slane %v925, %v1152
    %v1154 = vlaneseq
    %v1155 = vshrl.u32 %v1154, 7
    %v1156 = vsub.s32 %v1053, %v1155
    %v1157 = vrot.slane %v928, %v1156
    %v1158 = vsel %vm1058, %v1157, %v1153
    %v1159 = vlaneseq
    %v1160 = vshrl.u32 %v1159, 7
    %v1161 = vsub.s32 %v92, %v1160
    %v1162 = vrot.slane %v931, %v1161
    %v1163 = vlaneseq
    %v1164 = vshrl.u32 %v1163, 7
    %v1165 = vsub.s32 %v1053, %v1164
    %v1166 = vrot.slane %v934, %v1165
    %v1167 = vsel %vm1058, %v1166, %v1162
    %v1168 = vlaneseq
    %v1169 = vshrl.u32 %v1168, 7
    %v1170 = vsub.s32 %v92, %v1169
    %v1171 = vrot.slane %v937, %v1170
    %v1172 = vlaneseq
    %v1173 = vshrl.u32 %v1172, 7
    %v1174 = vsub.s32 %v1053, %v1173
    %v1175 = vrot.slane %v940, %v1174
    %v1176 = vsel %vm1058, %v1175, %v1171
    %v1177 = vlaneseq
    %v1178 = vshrl.u32 %v1177, 7
    %v1179 = vsub.s32 %v92, %v1178
    %v1180 = vrot.slane %v943, %v1179
    %v1181 = vlaneseq
    %v1182 = vshrl.u32 %v1181, 7
    %v1183 = vsub.s32 %v1053, %v1182
    %v1184 = vrot.slane %v946, %v1183
    %v1185 = vsel %vm1058, %v1184, %v1180
    %v1186 = vlaneseq
    %v1187 = vshrl.u32 %v1186, 7
    %v1188 = vsub.s32 %v92, %v1187
    %v1189 = vrot.slane %v949, %v1188
    %v1190 = vlaneseq
    %v1191 = vshrl.u32 %v1190, 7
    %v1192 = vsub.s32 %v1053, %v1191
    %v1193 = vrot.slane %v952, %v1192
    %v1194 = vsel %vm1058, %v1193, %v1189
    %v1195 = vlaneseq
    %v1196 = vshrl.u32 %v1195, 7
    %v1197 = vsub.s32 %v92, %v1196
    %v1198 = vrot.slane %v955, %v1197
    %v1199 = vlaneseq
    %v1200 = vshrl.u32 %v1199, 7
    %v1201 = vsub.s32 %v1053, %v1200
    %v1202 = vrot.slane %v958, %v1201
    %v1203 = vsel %vm1058, %v1202, %v1198
    %v1204 = vlaneseq
    %v1205 = vshrl.u32 %v1204, 7
    %v1206 = vsub.s32 %v92, %v1205
    %v1207 = vrot.slane %v961, %v1206
    %v1208 = vlaneseq
    %v1209 = vshrl.u32 %v1208, 7
    %v1210 = vsub.s32 %v1053, %v1209
    %v1211 = vrot.slane %v964, %v1210
    %v1212 = vsel %vm1058, %v1211, %v1207
    %v1213 = vlaneseq
    %v1214 = vshrl.u32 %v1213, 7
    %v1215 = vsub.s32 %v92, %v1214
    %v1216 = vrot.slane %v967, %v1215
    %v1217 = vlaneseq
    %v1218 = vshrl.u32 %v1217, 7
    %v1219 = vsub.s32 %v1053, %v1218
    %v1220 = vrot.slane %v970, %v1219
    %v1221 = vsel %vm1058, %v1220, %v1216
    %v1222 = vlaneseq
    %v1223 = vshrl.u32 %v1222, 7
    %v1224 = vsub.s32 %v92, %v1223
    %v1225 = vrot.slane %v973, %v1224
    %v1226 = vlaneseq
    %v1227 = vshrl.u32 %v1226, 7
    %v1228 = vsub.s32 %v1053, %v1227
    %v1229 = vrot.slane %v976, %v1228
    %v1230 = vsel %vm1058, %v1229, %v1225
    %v1231 = vlaneseq
    %v1232 = vshrl.u32 %v1231, 7
    %v1233 = vsub.s32 %v92, %v1232
    %v1234 = vrot.slane %v979, %v1233
    %v1235 = vlaneseq
    %v1236 = vshrl.u32 %v1235, 7
    %v1237 = vsub.s32 %v1053, %v1236
    %v1238 = vrot.slane %v982, %v1237
    %v1239 = vsel %vm1058, %v1238, %v1234
    %v1240 = vlaneseq
    %v1241 = vshrl.u32 %v1240, 7
    %v1242 = vsub.s32 %v92, %v1241
    %v1243 = vrot.slane %v985, %v1242
    %v1244 = vlaneseq
    %v1245 = vshrl.u32 %v1244, 7
    %v1246 = vsub.s32 %v1053, %v1245
    %v1247 = vrot.slane %v988, %v1246
    %v1248 = vsel %vm1058, %v1247, %v1243
    %v1249 = vlaneseq
    %v1250 = vshrl.u32 %v1249, 7
    %v1251 = vsub.s32 %v92, %v1250
    %v1252 = vrot.slane %v991, %v1251
    %v1253 = vlaneseq
    %v1254 = vshrl.u32 %v1253, 7
    %v1255 = vsub.s32 %v1053, %v1254
    %v1256 = vrot.slane %v994, %v1255
    %v1257 = vsel %vm1058, %v1256, %v1252
    %v1258 = vlaneseq
    %v1259 = vshrl.u32 %v1258, 7
    %v1260 = vsub.s32 %v92, %v1259
    %v1261 = vrot.slane %v997, %v1260
    %v1262 = vlaneseq
    %v1263 = vshrl.u32 %v1262, 7
    %v1264 = vsub.s32 %v1053, %v1263
    %v1265 = vrot.slane %v1000, %v1264
    %v1266 = vsel %vm1058, %v1265, %v1261
    %v1267 = vlaneseq
    %v1268 = vshrl.u32 %v1267, 7
    %v1269 = vsub.s32 %v92, %v1268
    %v1270 = vrot.slane %v1003, %v1269
    %v1271 = vlaneseq
    %v1272 = vshrl.u32 %v1271, 7
    %v1273 = vsub.s32 %v1053, %v1272
    %v1274 = vrot.slane %v1006, %v1273
    %v1275 = vsel %vm1058, %v1274, %v1270
    %v1276 = vlaneseq
    %v1277 = vshrl.u32 %v1276, 7
    %v1278 = vsub.s32 %v92, %v1277
    %v1279 = vrot.slane %v1009, %v1278
    %v1280 = vlaneseq
    %v1281 = vshrl.u32 %v1280, 7
    %v1282 = vsub.s32 %v1053, %v1281
    %v1283 = vrot.slane %v1012, %v1282
    %v1284 = vsel %vm1058, %v1283, %v1279
    %v1285 = vlaneseq
    %v1286 = vshrl.u32 %v1285, 7
    %v1287 = vsub.s32 %v92, %v1286
    %v1288 = vrot.slane %v1015, %v1287
    %v1289 = vlaneseq
    %v1290 = vshrl.u32 %v1289, 7
    %v1291 = vsub.s32 %v1053, %v1290
    %v1292 = vrot.slane %v1018, %v1291
    %v1293 = vsel %vm1058, %v1292, %v1288
    %v1294 = vlaneseq
    %v1295 = vshrl.u32 %v1294, 7
    %v1296 = vsub.s32 %v92, %v1295
    %v1297 = vrot.slane %v1021, %v1296
    %v1298 = vlaneseq
    %v1299 = vshrl.u32 %v1298, 7
    %v1300 = vsub.s32 %v1053, %v1299
    %v1301 = vrot.slane %v1024, %v1300
    %v1302 = vsel %vm1058, %v1301, %v1297
    %v1303 = vlaneseq
    %v1304 = vshrl.u32 %v1303, 7
    %v1305 = vsub.s32 %v92, %v1304
    %v1306 = vrot.slane %v1027, %v1305
    %v1307 = vlaneseq
    %v1308 = vshrl.u32 %v1307, 7
    %v1309 = vsub.s32 %v1053, %v1308
    %v1310 = vrot.slane %v1030, %v1309
    %v1311 = vsel %vm1058, %v1310, %v1306
    %v1312 = vlaneseq
    %v1313 = vshrl.u32 %v1312, 7
    %v1314 = vsub.s32 %v92, %v1313
    %v1315 = vrot.slane %v1033, %v1314
    %v1316 = vlaneseq
    %v1317 = vshrl.u32 %v1316, 7
    %v1318 = vsub.s32 %v1053, %v1317
    %v1319 = vrot.slane %v1036, %v1318
    %v1320 = vsel %vm1058, %v1319, %v1315
    %v1321 = vlaneseq
    %v1322 = vshrl.u32 %v1321, 7
    %v1323 = vsub.s32 %v92, %v1322
    %v1324 = vrot.slane %v1039, %v1323
    %v1325 = vlaneseq
    %v1326 = vshrl.u32 %v1325, 7
    %v1327 = vsub.s32 %v1053, %v1326
    %v1328 = vrot.slane %v1042, %v1327
    %v1329 = vsel %vm1058, %v1328, %v1324
    %v1330 = vlaneseq
    %v1331 = vshrl.u32 %v1330, 7
    %v1332 = vsub.s32 %v92, %v1331
    %v1333 = vrot.slane %v1045, %v1332
    %v1334 = vlaneseq
    %v1335 = vshrl.u32 %v1334, 7
    %v1336 = vsub.s32 %v1053, %v1335
    %v1337 = vrot.slane %v1048, %v1336
    %v1338 = vsel %vm1058, %v1337, %v1333
    %vm1339 = vcmask 1041409
    %v1340 = vsel %vm1339, %v1068, %v1059
    %vm1341 = vcmask 1042434
    %v1342 = vsel %vm1341, %v1077, %v1340
    %vm1343 = vcmask 1043459
    %v1344 = vsel %vm1343, %v1086, %v1342
    %vm1345 = vcmask 1044484
    %v1346 = vsel %vm1345, %v1095, %v1344
    %vm1347 = vcmask 1045509
    %v1348 = vsel %vm1347, %v1104, %v1346
    %vm1349 = vcmask 1046534
    %v1350 = vsel %vm1349, %v1113, %v1348
    %vm1351 = vcmask 1047559
    %v1352 = vsel %vm1351, %v1122, %v1350
    %v1353 = vsel %vm1339, %v1140, %v1131
    %v1354 = vsel %vm1341, %v1149, %v1353
    %v1355 = vsel %vm1343, %v1158, %v1354
    %v1356 = vsel %vm1345, %v1167, %v1355
    %v1357 = vsel %vm1347, %v1176, %v1356
    %v1358 = vsel %vm1349, %v1185, %v1357
    %v1359 = vsel %vm1351, %v1194, %v1358
    %v1360 = vsel %vm1339, %v1212, %v1203
    %v1361 = vsel %vm1341, %v1221, %v1360
    %v1362 = vsel %vm1343, %v1230, %v1361
    %v1363 = vsel %vm1345, %v1239, %v1362
    %v1364 = vsel %vm1347, %v1248, %v1363
    %v1365 = vsel %vm1349, %v1257, %v1364
    %v1366 = vsel %vm1351, %v1266, %v1365
    %v1367 = vsel %vm1339, %v1284, %v1275
    %v1368 = vsel %vm1341, %v1293, %v1367
    %v1369 = vsel %vm1343, %v1302, %v1368
    %v1370 = vsel %vm1345, %v1311, %v1369
    %v1371 = vsel %vm1347, %v1320, %v1370
    %v1372 = vsel %vm1349, %v1329, %v1371
    %v1373 = vsel %vm1351, %v1338, %v1372
    %vm1378 = vcmask 130048
    %v1379 = vsel %vm1378, %v1352, 0.0
    %1380 = vadd.xlane.f32.xlu0 %v1379
    %v1381 = vpop.xlane.xlu0 %1380
    %v1382 = vsel %vm1378, %v1359, 0.0
    %1383 = vadd.xlane.f32.xlu0 %v1382
    %v1384 = vpop.xlane.xlu0 %1383
    %v1385 = vsel %vm1378, %v1366, 0.0
    %1386 = vadd.xlane.f32.xlu0 %v1385
    %v1387 = vpop.xlane.xlu0 %1386
    %v1388 = vsel %vm1378, %v1373, 0.0
    %1389 = vadd.xlane.f32.xlu0 %v1388
    %v1390 = vpop.xlane.xlu0 %1389
    %v1391 = vcvt.s32.f32 %v89
    %v1393 = vlaneseq
    %v1394 = vshrl.u32 %v1393, 7
    %v1395 = vsub.s32 0, %v1394
    %v1396 = vrot.slane %v1391, %v1395
    %v1397 = vlaneseq
    %v1398 = vshrl.u32 %v1397, 7
    %v1399 = vsub.s32 1, %v1398
    %v1400 = vrot.slane %v1391, %v1399
    %v1401 = vlaneseq
    %v1402 = vshrl.u32 %v1401, 7
    %v1403 = vsub.s32 2, %v1402
    %v1404 = vrot.slane %v1391, %v1403
    %v1405 = vlaneseq
    %v1406 = vshrl.u32 %v1405, 7
    %v1407 = vsub.s32 3, %v1406
    %v1408 = vrot.slane %v1391, %v1407
    %v1409 = vlaneseq
    %v1410 = vshrl.u32 %v1409, 7
    %v1411 = vsub.s32 4, %v1410
    %v1412 = vrot.slane %v1391, %v1411
    %v1413 = vlaneseq
    %v1414 = vshrl.u32 %v1413, 7
    %v1415 = vsub.s32 5, %v1414
    %v1416 = vrot.slane %v1391, %v1415
    %v1417 = vlaneseq
    %v1418 = vshrl.u32 %v1417, 7
    %v1419 = vsub.s32 6, %v1418
    %v1420 = vrot.slane %v1391, %v1419
    %v1421 = vlaneseq
    %v1422 = vshrl.u32 %v1421, 7
    %v1423 = vsub.s32 7, %v1422
    %v1424 = vrot.slane %v1391, %v1423
    %vm1433 = vcmp.eq.f32.partialorder %v1381, %v1396
    %vm1434 = vcmp.eq.f32.partialorder %v1384, %v1396
    %vm1435 = vcmp.eq.f32.partialorder %v1381, %v1400
    %vm1436 = vcmp.eq.f32.partialorder %v1384, %v1400
    %vm1437 = vcmp.eq.f32.partialorder %v1381, %v1404
    %vm1438 = vcmp.eq.f32.partialorder %v1384, %v1404
    %vm1439 = vcmp.eq.f32.partialorder %v1381, %v1408
    %vm1440 = vcmp.eq.f32.partialorder %v1384, %v1408
    %vm1441 = vcmp.eq.f32.partialorder %v1381, %v1412
    %vm1442 = vcmp.eq.f32.partialorder %v1384, %v1412
    %vm1443 = vcmp.eq.f32.partialorder %v1381, %v1416
    %vm1444 = vcmp.eq.f32.partialorder %v1384, %v1416
    %vm1445 = vcmp.eq.f32.partialorder %v1381, %v1420
    %vm1446 = vcmp.eq.f32.partialorder %v1384, %v1420
    %vm1447 = vcmp.eq.f32.partialorder %v1381, %v1424
    %vm1448 = vcmp.eq.f32.partialorder %v1384, %v1424
    %vm1449 = vcmp.eq.f32.partialorder %v1387, %v1396
    %vm1450 = vcmp.eq.f32.partialorder %v1390, %v1396
    %vm1451 = vcmp.eq.f32.partialorder %v1387, %v1400
    %vm1452 = vcmp.eq.f32.partialorder %v1390, %v1400
    %vm1453 = vcmp.eq.f32.partialorder %v1387, %v1404
    %vm1454 = vcmp.eq.f32.partialorder %v1390, %v1404
    %vm1455 = vcmp.eq.f32.partialorder %v1387, %v1408
    %vm1456 = vcmp.eq.f32.partialorder %v1390, %v1408
    %vm1457 = vcmp.eq.f32.partialorder %v1387, %v1412
    %vm1458 = vcmp.eq.f32.partialorder %v1390, %v1412
    %vm1459 = vcmp.eq.f32.partialorder %v1387, %v1416
    %vm1460 = vcmp.eq.f32.partialorder %v1390, %v1416
    %vm1461 = vcmp.eq.f32.partialorder %v1387, %v1420
    %vm1462 = vcmp.eq.f32.partialorder %v1390, %v1420
    %vm1463 = vcmp.eq.f32.partialorder %v1387, %v1424
    %vm1464 = vcmp.eq.f32.partialorder %v1390, %v1424
    %v1465 = vsel %vm1433, %v81, 0.0
    %v1466 = vsel %vm1434, %v83, 0.0
    %v1467 = vsel %vm1435, %v81, 0.0
    %v1468 = vsel %vm1436, %v83, 0.0
    %v1469 = vsel %vm1437, %v81, 0.0
    %v1470 = vsel %vm1438, %v83, 0.0
    %v1471 = vsel %vm1439, %v81, 0.0
    %v1472 = vsel %vm1440, %v83, 0.0
    %v1473 = vsel %vm1441, %v81, 0.0
    %v1474 = vsel %vm1442, %v83, 0.0
    %v1475 = vsel %vm1443, %v81, 0.0
    %v1476 = vsel %vm1444, %v83, 0.0
    %v1477 = vsel %vm1445, %v81, 0.0
    %v1478 = vsel %vm1446, %v83, 0.0
    %v1479 = vsel %vm1447, %v81, 0.0
    %v1480 = vsel %vm1448, %v83, 0.0
    %v1481 = vsel %vm1449, %v85, 0.0
    %v1482 = vsel %vm1450, %v87, 0.0
    %v1483 = vsel %vm1451, %v85, 0.0
    %v1484 = vsel %vm1452, %v87, 0.0
    %v1485 = vsel %vm1453, %v85, 0.0
    %v1486 = vsel %vm1454, %v87, 0.0
    %v1487 = vsel %vm1455, %v85, 0.0
    %v1488 = vsel %vm1456, %v87, 0.0
    %v1489 = vsel %vm1457, %v85, 0.0
    %v1490 = vsel %vm1458, %v87, 0.0
    %v1491 = vsel %vm1459, %v85, 0.0
    %v1492 = vsel %vm1460, %v87, 0.0
    %v1493 = vsel %vm1461, %v85, 0.0
    %v1494 = vsel %vm1462, %v87, 0.0
    %v1495 = vsel %vm1463, %v85, 0.0
    %v1496 = vsel %vm1464, %v87, 0.0
    %1513 = vset.pattern.permute.xlu0 0
    %1514 = vperm.xlu0 %1513, %v1465
    %v1515 = vpop.permute.xlu0 %1514
    %1516 = vset.pattern.permute.xlu0 0
    %1517 = vperm.xlu0 %1516, %v1466
    %v1518 = vpop.permute.xlu0 %1517
    %1519 = vset.pattern.permute.xlu0 0
    %1520 = vperm.xlu0 %1519, %v1467
    %v1521 = vpop.permute.xlu0 %1520
    %1522 = vset.pattern.permute.xlu0 0
    %1523 = vperm.xlu0 %1522, %v1468
    %v1524 = vpop.permute.xlu0 %1523
    %1525 = vset.pattern.permute.xlu0 0
    %1526 = vperm.xlu0 %1525, %v1469
    %v1527 = vpop.permute.xlu0 %1526
    %1528 = vset.pattern.permute.xlu0 0
    %1529 = vperm.xlu0 %1528, %v1470
    %v1530 = vpop.permute.xlu0 %1529
    %1531 = vset.pattern.permute.xlu0 0
    %1532 = vperm.xlu0 %1531, %v1471
    %v1533 = vpop.permute.xlu0 %1532
    %1534 = vset.pattern.permute.xlu0 0
    %1535 = vperm.xlu0 %1534, %v1472
    %v1536 = vpop.permute.xlu0 %1535
    %1537 = vset.pattern.permute.xlu0 0
    %1538 = vperm.xlu0 %1537, %v1473
    %v1539 = vpop.permute.xlu0 %1538
    %1540 = vset.pattern.permute.xlu0 0
    %1541 = vperm.xlu0 %1540, %v1474
    %v1542 = vpop.permute.xlu0 %1541
    %1543 = vset.pattern.permute.xlu0 0
    %1544 = vperm.xlu0 %1543, %v1475
    %v1545 = vpop.permute.xlu0 %1544
    %1546 = vset.pattern.permute.xlu0 0
    %1547 = vperm.xlu0 %1546, %v1476
    %v1548 = vpop.permute.xlu0 %1547
    %1549 = vset.pattern.permute.xlu0 0
    %1550 = vperm.xlu0 %1549, %v1477
    %v1551 = vpop.permute.xlu0 %1550
    %1552 = vset.pattern.permute.xlu0 0
    %1553 = vperm.xlu0 %1552, %v1478
    %v1554 = vpop.permute.xlu0 %1553
    %1555 = vset.pattern.permute.xlu0 0
    %1556 = vperm.xlu0 %1555, %v1479
    %v1557 = vpop.permute.xlu0 %1556
    %1558 = vset.pattern.permute.xlu0 0
    %1559 = vperm.xlu0 %1558, %v1480
    %v1560 = vpop.permute.xlu0 %1559
    %v1561 = vlaneseq
    %v1562 = vshrl.u32 %v1561, 7
    %v1563 = vsub.s32 %v92, %v1562
    %v1564 = vrot.slane %v1515, %v1563
    %v1565 = vlaneseq
    %v1566 = vshrl.u32 %v1565, 7
    %v1567 = vsub.s32 %v1053, %v1566
    %v1568 = vrot.slane %v1518, %v1567
    %v1569 = vsel %vm1058, %v1568, %v1564
    %v1570 = vlaneseq
    %v1571 = vshrl.u32 %v1570, 7
    %v1572 = vsub.s32 %v92, %v1571
    %v1573 = vrot.slane %v1521, %v1572
    %v1574 = vlaneseq
    %v1575 = vshrl.u32 %v1574, 7
    %v1576 = vsub.s32 %v1053, %v1575
    %v1577 = vrot.slane %v1524, %v1576
    %v1578 = vsel %vm1058, %v1577, %v1573
    %v1579 = vlaneseq
    %v1580 = vshrl.u32 %v1579, 7
    %v1581 = vsub.s32 %v92, %v1580
    %v1582 = vrot.slane %v1527, %v1581
    %v1583 = vlaneseq
    %v1584 = vshrl.u32 %v1583, 7
    %v1585 = vsub.s32 %v1053, %v1584
    %v1586 = vrot.slane %v1530, %v1585
    %v1587 = vsel %vm1058, %v1586, %v1582
    %v1588 = vlaneseq
    %v1589 = vshrl.u32 %v1588, 7
    %v1590 = vsub.s32 %v92, %v1589
    %v1591 = vrot.slane %v1533, %v1590
    %v1592 = vlaneseq
    %v1593 = vshrl.u32 %v1592, 7
    %v1594 = vsub.s32 %v1053, %v1593
    %v1595 = vrot.slane %v1536, %v1594
    %v1596 = vsel %vm1058, %v1595, %v1591
    %v1597 = vlaneseq
    %v1598 = vshrl.u32 %v1597, 7
    %v1599 = vsub.s32 %v92, %v1598
    %v1600 = vrot.slane %v1539, %v1599
    %v1601 = vlaneseq
    %v1602 = vshrl.u32 %v1601, 7
    %v1603 = vsub.s32 %v1053, %v1602
    %v1604 = vrot.slane %v1542, %v1603
    %v1605 = vsel %vm1058, %v1604, %v1600
    %v1606 = vlaneseq
    %v1607 = vshrl.u32 %v1606, 7
    %v1608 = vsub.s32 %v92, %v1607
    %v1609 = vrot.slane %v1545, %v1608
    %v1610 = vlaneseq
    %v1611 = vshrl.u32 %v1610, 7
    %v1612 = vsub.s32 %v1053, %v1611
    %v1613 = vrot.slane %v1548, %v1612
    %v1614 = vsel %vm1058, %v1613, %v1609
    %v1615 = vlaneseq
    %v1616 = vshrl.u32 %v1615, 7
    %v1617 = vsub.s32 %v92, %v1616
    %v1618 = vrot.slane %v1551, %v1617
    %v1619 = vlaneseq
    %v1620 = vshrl.u32 %v1619, 7
    %v1621 = vsub.s32 %v1053, %v1620
    %v1622 = vrot.slane %v1554, %v1621
    %v1623 = vsel %vm1058, %v1622, %v1618
    %v1624 = vlaneseq
    %v1625 = vshrl.u32 %v1624, 7
    %v1626 = vsub.s32 %v92, %v1625
    %v1627 = vrot.slane %v1557, %v1626
    %v1628 = vlaneseq
    %v1629 = vshrl.u32 %v1628, 7
    %v1630 = vsub.s32 %v1053, %v1629
    %v1631 = vrot.slane %v1560, %v1630
    %v1632 = vsel %vm1058, %v1631, %v1627
    %v1633 = vsel %vm1339, %v1578, %v1569
    %v1634 = vsel %vm1341, %v1587, %v1633
    %v1635 = vsel %vm1343, %v1596, %v1634
    %v1636 = vsel %vm1345, %v1605, %v1635
    %v1637 = vsel %vm1347, %v1614, %v1636
    %v1638 = vsel %vm1349, %v1623, %v1637
    %v1639 = vsel %vm1351, %v1632, %v1638
    %v1640 = vsel %vm1378, %v1639, 0
    %1642 = vmatprep.subr.mxu0 0.0
    %1643 = vmatpush1.msra.mxu0 %v30
    %1644 = vmatprep.subr.mxu0 0.0
    %1645 = vmatpush1.msra.mxu0 %v31
    %1646 = vmatprep.subr.mxu0 0.0
    %1647 = vmatpush1.msra.mxu0 0.0
    %1648 = vmatprep.subr.mxu0 0.0
    %1649 = vmatpush1.msra.mxu0 0.0
    %1650 = vmatprep.subr.mxu0 0.0
    %1651 = vmatpush1.msra.mxu0 0.0
    %1652 = vmatprep.subr.mxu0 0.0
    %1653 = vmatpush1.msra.mxu0 0.0
    %1654 = vmatprep.subr.mxu0 0.0
    %1655 = vmatpush1.msra.mxu0 0.0
    %1656 = vmatprep.subr.mxu0 0.0
    %1657 = vmatpush1.msra.mxu0 0.0
    %1658 = vmatprep.subr.mxu0 0.0
    %1659 = vmatpush1.msra.mxu0 0.0
    %1660 = vmatprep.subr.mxu0 0.0
    %1661 = vmatpush1.msra.mxu0 0.0
    %1662 = vmatprep.subr.mxu0 0.0
    %1663 = vmatpush1.msra.mxu0 0.0
    %1664 = vmatprep.subr.mxu0 0.0
    %1665 = vmatpush1.msra.mxu0 0.0
    %1666 = vmatprep.subr.mxu0 0.0
    %1667 = vmatpush1.msra.mxu0 0.0
    %1668 = vmatprep.subr.mxu0 0.0
    %1669 = vmatpush1.msra.mxu0 0.0
    %1670 = vmatprep.subr.mxu0 0.0
    %1671 = vmatpush1.msra.mxu0 0.0
    %1672 = vmatprep.subr.mxu0 0.0
    %1673 = vmatpush1.msra.mxu0 0.0
    %1674 = vmatprep.subr.mxu0 0.0
    %1675 = vmatpush1.msra.mxu0 0.0
    %1676 = vmatprep.subr.mxu0 0.0
    %1677 = vmatpush1.msra.mxu0 0.0
    %1678 = vmatprep.subr.mxu0 0.0
    %1679 = vmatpush1.msra.mxu0 0.0
    %1680 = vmatprep.subr.mxu0 0.0
    %1681 = vmatpush1.msra.mxu0 0.0
    %1682 = vmatprep.subr.mxu0 0.0
    %1683 = vmatpush1.msra.mxu0 0.0
    %1684 = vmatprep.subr.mxu0 0.0
    %1685 = vmatpush1.msra.mxu0 0.0
    %1686 = vmatprep.subr.mxu0 0.0
    %1687 = vmatpush1.msra.mxu0 0.0
    %1688 = vmatprep.subr.mxu0 0.0
    %1689 = vmatpush1.msra.mxu0 0.0
    %1690 = vmatprep.subr.mxu0 0.0
    %1691 = vmatpush1.msra.mxu0 0.0
    %1692 = vmatprep.subr.mxu0 0.0
    %1693 = vmatpush1.msra.mxu0 0.0
    %1694 = vmatprep.subr.mxu0 0.0
    %1695 = vmatpush1.msra.mxu0 0.0
    %1696 = vmatprep.subr.mxu0 0.0
    %1697 = vmatpush1.msra.mxu0 0.0
    %1698 = vmatprep.subr.mxu0 0.0
    %1699 = vmatpush1.msra.mxu0 0.0
    %1700 = vmatprep.subr.mxu0 0.0
    %1701 = vmatpush1.msra.mxu0 0.0
    %1702 = vmatprep.subr.mxu0 0.0
    %1703 = vmatpush1.msra.mxu0 0.0
    %1704 = vmatprep.subr.mxu0 0.0
    %1705 = vmatpush1.msra.mxu0 0.0
    %1706 = vmatprep.mubr.f32.mxu0 0.0
    %1707 = vmatmul.mubr.f32.gmra.mrb[0].mxu0 %v1640
    %v1708 = vpop.f32.mrb[0].mxu0
    %v1709 = vadd.f32 0.0, %v1708
    %v1710 = vpop.f32.mrb[0].mxu0
    %1711 = vdwg.mxu0
    %1728 = vset.pattern.permute.xlu0 0
    %1729 = vperm.xlu0 %1728, %v1481
    %v1730 = vpop.permute.xlu0 %1729
    %1731 = vset.pattern.permute.xlu0 0
    %1732 = vperm.xlu0 %1731, %v1482
    %v1733 = vpop.permute.xlu0 %1732
    %1734 = vset.pattern.permute.xlu0 0
    %1735 = vperm.xlu0 %1734, %v1483
    %v1736 = vpop.permute.xlu0 %1735
    %1737 = vset.pattern.permute.xlu0 0
    %1738 = vperm.xlu0 %1737, %v1484
    %v1739 = vpop.permute.xlu0 %1738
    %1740 = vset.pattern.permute.xlu0 0
    %1741 = vperm.xlu0 %1740, %v1485
    %v1742 = vpop.permute.xlu0 %1741
    %1743 = vset.pattern.permute.xlu0 0
    %1744 = vperm.xlu0 %1743, %v1486
    %v1745 = vpop.permute.xlu0 %1744
    %1746 = vset.pattern.permute.xlu0 0
    %1747 = vperm.xlu0 %1746, %v1487
    %v1748 = vpop.permute.xlu0 %1747
    %1749 = vset.pattern.permute.xlu0 0
    %1750 = vperm.xlu0 %1749, %v1488
    %v1751 = vpop.permute.xlu0 %1750
    %1752 = vset.pattern.permute.xlu0 0
    %1753 = vperm.xlu0 %1752, %v1489
    %v1754 = vpop.permute.xlu0 %1753
    %1755 = vset.pattern.permute.xlu0 0
    %1756 = vperm.xlu0 %1755, %v1490
    %v1757 = vpop.permute.xlu0 %1756
    %1758 = vset.pattern.permute.xlu0 0
    %1759 = vperm.xlu0 %1758, %v1491
    %v1760 = vpop.permute.xlu0 %1759
    %1761 = vset.pattern.permute.xlu0 0
    %1762 = vperm.xlu0 %1761, %v1492
    %v1763 = vpop.permute.xlu0 %1762
    %1764 = vset.pattern.permute.xlu0 0
    %1765 = vperm.xlu0 %1764, %v1493
    %v1766 = vpop.permute.xlu0 %1765
    %1767 = vset.pattern.permute.xlu0 0
    %1768 = vperm.xlu0 %1767, %v1494
    %v1769 = vpop.permute.xlu0 %1768
    %1770 = vset.pattern.permute.xlu0 0
    %1771 = vperm.xlu0 %1770, %v1495
    %v1772 = vpop.permute.xlu0 %1771
    %1773 = vset.pattern.permute.xlu0 0
    %1774 = vperm.xlu0 %1773, %v1496
    %v1775 = vpop.permute.xlu0 %1774
    %v1776 = vlaneseq
    %v1777 = vshrl.u32 %v1776, 7
    %v1778 = vsub.s32 %v92, %v1777
    %v1779 = vrot.slane %v1730, %v1778
    %v1780 = vlaneseq
    %v1781 = vshrl.u32 %v1780, 7
    %v1782 = vsub.s32 %v1053, %v1781
    %v1783 = vrot.slane %v1733, %v1782
    %v1784 = vsel %vm1058, %v1783, %v1779
    %v1785 = vlaneseq
    %v1786 = vshrl.u32 %v1785, 7
    %v1787 = vsub.s32 %v92, %v1786
    %v1788 = vrot.slane %v1736, %v1787
    %v1789 = vlaneseq
    %v1790 = vshrl.u32 %v1789, 7
    %v1791 = vsub.s32 %v1053, %v1790
    %v1792 = vrot.slane %v1739, %v1791
    %v1793 = vsel %vm1058, %v1792, %v1788
    %v1794 = vlaneseq
    %v1795 = vshrl.u32 %v1794, 7
    %v1796 = vsub.s32 %v92, %v1795
    %v1797 = vrot.slane %v1742, %v1796
    %v1798 = vlaneseq
    %v1799 = vshrl.u32 %v1798, 7
    %v1800 = vsub.s32 %v1053, %v1799
    %v1801 = vrot.slane %v1745, %v1800
    %v1802 = vsel %vm1058, %v1801, %v1797
    %v1803 = vlaneseq
    %v1804 = vshrl.u32 %v1803, 7
    %v1805 = vsub.s32 %v92, %v1804
    %v1806 = vrot.slane %v1748, %v1805
    %v1807 = vlaneseq
    %v1808 = vshrl.u32 %v1807, 7
    %v1809 = vsub.s32 %v1053, %v1808
    %v1810 = vrot.slane %v1751, %v1809
    %v1811 = vsel %vm1058, %v1810, %v1806
    %v1812 = vlaneseq
    %v1813 = vshrl.u32 %v1812, 7
    %v1814 = vsub.s32 %v92, %v1813
    %v1815 = vrot.slane %v1754, %v1814
    %v1816 = vlaneseq
    %v1817 = vshrl.u32 %v1816, 7
    %v1818 = vsub.s32 %v1053, %v1817
    %v1819 = vrot.slane %v1757, %v1818
    %v1820 = vsel %vm1058, %v1819, %v1815
    %v1821 = vlaneseq
    %v1822 = vshrl.u32 %v1821, 7
    %v1823 = vsub.s32 %v92, %v1822
    %v1824 = vrot.slane %v1760, %v1823
    %v1825 = vlaneseq
    %v1826 = vshrl.u32 %v1825, 7
    %v1827 = vsub.s32 %v1053, %v1826
    %v1828 = vrot.slane %v1763, %v1827
    %v1829 = vsel %vm1058, %v1828, %v1824
    %v1830 = vlaneseq
    %v1831 = vshrl.u32 %v1830, 7
    %v1832 = vsub.s32 %v92, %v1831
    %v1833 = vrot.slane %v1766, %v1832
    %v1834 = vlaneseq
    %v1835 = vshrl.u32 %v1834, 7
    %v1836 = vsub.s32 %v1053, %v1835
    %v1837 = vrot.slane %v1769, %v1836
    %v1838 = vsel %vm1058, %v1837, %v1833
    %v1839 = vlaneseq
    %v1840 = vshrl.u32 %v1839, 7
    %v1841 = vsub.s32 %v92, %v1840
    %v1842 = vrot.slane %v1772, %v1841
    %v1843 = vlaneseq
    %v1844 = vshrl.u32 %v1843, 7
    %v1845 = vsub.s32 %v1053, %v1844
    %v1846 = vrot.slane %v1775, %v1845
    %v1847 = vsel %vm1058, %v1846, %v1842
    %v1848 = vsel %vm1339, %v1793, %v1784
    %v1849 = vsel %vm1341, %v1802, %v1848
    %v1850 = vsel %vm1343, %v1811, %v1849
    %v1851 = vsel %vm1345, %v1820, %v1850
    %v1852 = vsel %vm1347, %v1829, %v1851
    %v1853 = vsel %vm1349, %v1838, %v1852
    %v1854 = vsel %vm1351, %v1847, %v1853
    %v1855 = vsel %vm1378, %v1854, 0
    %1857 = vmatprep.subr.mxu0 0.0
    %1858 = vmatpush1.msra.mxu0 %v32
    %1859 = vmatprep.subr.mxu0 0.0
    %1860 = vmatpush1.msra.mxu0 %v33
    %1861 = vmatprep.subr.mxu0 0.0
    %1862 = vmatpush1.msra.mxu0 0.0
    %1863 = vmatprep.subr.mxu0 0.0
    %1864 = vmatpush1.msra.mxu0 0.0
    %1865 = vmatprep.subr.mxu0 0.0
    %1866 = vmatpush1.msra.mxu0 0.0
    %1867 = vmatprep.subr.mxu0 0.0
    %1868 = vmatpush1.msra.mxu0 0.0
    %1869 = vmatprep.subr.mxu0 0.0
    %1870 = vmatpush1.msra.mxu0 0.0
    %1871 = vmatprep.subr.mxu0 0.0
    %1872 = vmatpush1.msra.mxu0 0.0
    %1873 = vmatprep.subr.mxu0 0.0
    %1874 = vmatpush1.msra.mxu0 0.0
    %1875 = vmatprep.subr.mxu0 0.0
    %1876 = vmatpush1.msra.mxu0 0.0
    %1877 = vmatprep.subr.mxu0 0.0
    %1878 = vmatpush1.msra.mxu0 0.0
    %1879 = vmatprep.subr.mxu0 0.0
    %1880 = vmatpush1.msra.mxu0 0.0
    %1881 = vmatprep.subr.mxu0 0.0
    %1882 = vmatpush1.msra.mxu0 0.0
    %1883 = vmatprep.subr.mxu0 0.0
    %1884 = vmatpush1.msra.mxu0 0.0
    %1885 = vmatprep.subr.mxu0 0.0
    %1886 = vmatpush1.msra.mxu0 0.0
    %1887 = vmatprep.subr.mxu0 0.0
    %1888 = vmatpush1.msra.mxu0 0.0
    %1889 = vmatprep.subr.mxu0 0.0
    %1890 = vmatpush1.msra.mxu0 0.0
    %1891 = vmatprep.subr.mxu0 0.0
    %1892 = vmatpush1.msra.mxu0 0.0
    %1893 = vmatprep.subr.mxu0 0.0
    %1894 = vmatpush1.msra.mxu0 0.0
    %1895 = vmatprep.subr.mxu0 0.0
    %1896 = vmatpush1.msra.mxu0 0.0
    %1897 = vmatprep.subr.mxu0 0.0
    %1898 = vmatpush1.msra.mxu0 0.0
    %1899 = vmatprep.subr.mxu0 0.0
    %1900 = vmatpush1.msra.mxu0 0.0
    %1901 = vmatprep.subr.mxu0 0.0
    %1902 = vmatpush1.msra.mxu0 0.0
    %1903 = vmatprep.subr.mxu0 0.0
    %1904 = vmatpush1.msra.mxu0 0.0
    %1905 = vmatprep.subr.mxu0 0.0
    %1906 = vmatpush1.msra.mxu0 0.0
    %1907 = vmatprep.subr.mxu0 0.0
    %1908 = vmatpush1.msra.mxu0 0.0
    %1909 = vmatprep.subr.mxu0 0.0
    %1910 = vmatpush1.msra.mxu0 0.0
    %1911 = vmatprep.subr.mxu0 0.0
    %1912 = vmatpush1.msra.mxu0 0.0
    %1913 = vmatprep.subr.mxu0 0.0
    %1914 = vmatpush1.msra.mxu0 0.0
    %1915 = vmatprep.subr.mxu0 0.0
    %1916 = vmatpush1.msra.mxu0 0.0
    %1917 = vmatprep.subr.mxu0 0.0
    %1918 = vmatpush1.msra.mxu0 0.0
    %1919 = vmatprep.subr.mxu0 0.0
    %1920 = vmatpush1.msra.mxu0 0.0
    %1921 = vmatprep.mubr.f32.mxu0 0.0
    %1922 = vmatmul.mubr.f32.gmra.mrb[0].mxu0 %v1855
    %v1923 = vpop.f32.mrb[0].mxu0
    %v1924 = vadd.f32 0.0, %v1923
    %v1925 = vpop.f32.mrb[0].mxu0
    %1926 = vdwg.mxu0
    %v1927 = vcombine.high %v1709, 0.0
    %v1929 = vunpack.c.l.s4 1983009808
    %v1930 = vunpack.c.0.s8 %v1929
    %v1931 = vlaneseq
    %v1932 = vshrl.u32 %v1931, 7
    %v1933 = vsub.s32 %v1930, %v1932
    %v1934 = vrot.slane %v1709, %v1933
    %v1936 = vunpack.c.l.s4 1983009808
    %v1937 = vunpack.c.0.s8 %v1936
    %v1938 = vlaneseq
    %v1939 = vshrl.u32 %v1938, 7
    %v1940 = vsub.s32 %v1937, %v1939
    %v1941 = vrot.slane %v1927, %v1940
    %v1942 = vcombine.high %v1934, 0.0
    %v1944 = vunpack.c.l.s4 1934713408
    %v1945 = vunpack.c.0.s8 %v1944
    %v1946 = vlaneseq
    %v1947 = vshrl.u32 %v1946, 7
    %v1948 = vsub.s32 %v1945, %v1947
    %v1949 = vrot.slane %v1934, %v1948
    %v1951 = vunpack.c.l.s4 1934713408
    %v1952 = vunpack.c.0.s8 %v1951
    %v1953 = vlaneseq
    %v1954 = vshrl.u32 %v1953, 7
    %v1955 = vsub.s32 %v1952, %v1954
    %v1956 = vrot.slane %v1942, %v1955
    %v1957 = vcombine.high %v1941, 0.0
    %v1959 = vunpack.c.l.s4 1934713408
    %v1960 = vunpack.c.0.s8 %v1959
    %v1961 = vlaneseq
    %v1962 = vshrl.u32 %v1961, 7
    %v1963 = vsub.s32 %v1960, %v1962
    %v1964 = vrot.slane %v1941, %v1963
    %v1966 = vunpack.c.l.s4 1934713408
    %v1967 = vunpack.c.0.s8 %v1966
    %v1968 = vlaneseq
    %v1969 = vshrl.u32 %v1968, 7
    %v1970 = vsub.s32 %v1967, %v1969
    %v1971 = vrot.slane %v1957, %v1970
    %v1972 = vcombine.high %v1949, 0.0
    %v1973 = vcombine.high %v1956, 0.0
    %v1974 = vcombine.high %v1964, 0.0
    %v1975 = vcombine.high %v1971, 0.0
    %v1976 = vcombine.high %v1924, 0.0
    %v1978 = vunpack.c.l.s4 1983009808
    %v1979 = vunpack.c.0.s8 %v1978
    %v1980 = vlaneseq
    %v1981 = vshrl.u32 %v1980, 7
    %v1982 = vsub.s32 %v1979, %v1981
    %v1983 = vrot.slane %v1924, %v1982
    %v1985 = vunpack.c.l.s4 1983009808
    %v1986 = vunpack.c.0.s8 %v1985
    %v1987 = vlaneseq
    %v1988 = vshrl.u32 %v1987, 7
    %v1989 = vsub.s32 %v1986, %v1988
    %v1990 = vrot.slane %v1976, %v1989
    %v1991 = vcombine.high %v1983, 0.0
    %v1993 = vunpack.c.l.s4 1934713408
    %v1994 = vunpack.c.0.s8 %v1993
    %v1995 = vlaneseq
    %v1996 = vshrl.u32 %v1995, 7
    %v1997 = vsub.s32 %v1994, %v1996
    %v1998 = vrot.slane %v1983, %v1997
    %v2000 = vunpack.c.l.s4 1934713408
    %v2001 = vunpack.c.0.s8 %v2000
    %v2002 = vlaneseq
    %v2003 = vshrl.u32 %v2002, 7
    %v2004 = vsub.s32 %v2001, %v2003
    %v2005 = vrot.slane %v1991, %v2004
    %v2006 = vcombine.high %v1990, 0.0
    %v2008 = vunpack.c.l.s4 1934713408
    %v2009 = vunpack.c.0.s8 %v2008
    %v2010 = vlaneseq
    %v2011 = vshrl.u32 %v2010, 7
    %v2012 = vsub.s32 %v2009, %v2011
    %v2013 = vrot.slane %v1990, %v2012
    %v2015 = vunpack.c.l.s4 1934713408
    %v2016 = vunpack.c.0.s8 %v2015
    %v2017 = vlaneseq
    %v2018 = vshrl.u32 %v2017, 7
    %v2019 = vsub.s32 %v2016, %v2018
    %v2020 = vrot.slane %v2006, %v2019
    %v2021 = vcombine.high %v1998, 0.0
    %v2022 = vcombine.high %v2005, 0.0
    %v2023 = vcombine.high %v2013, 0.0
    %v2024 = vcombine.high %v2020, 0.0
    %2027 = vrot.lane.b32.xlu0 %v1972, 32
    %v2028 = vpop.permute.xlu0 %2027
    %2029 = vrot.lane.b32.xlu0 %v2021, 32
    %v2030 = vpop.permute.xlu0 %2029
    %2035 = vrot.lane.b32.xlu0 %v1956, 64
    %v2036 = vpop.permute.xlu0 %2035
    %2037 = vrot.lane.b32.xlu0 %v2005, 64
    %v2038 = vpop.permute.xlu0 %2037
    %2043 = vrot.lane.b32.xlu0 %v1973, 96
    %v2044 = vpop.permute.xlu0 %2043
    %2045 = vrot.lane.b32.xlu0 %v2022, 96
    %v2046 = vpop.permute.xlu0 %2045
    %2051 = vrot.lane.b32.xlu0 %v1974, 32
    %v2052 = vpop.permute.xlu0 %2051
    %2053 = vrot.lane.b32.xlu0 %v2023, 32
    %v2054 = vpop.permute.xlu0 %2053
    %2059 = vrot.lane.b32.xlu0 %v1971, 64
    %v2060 = vpop.permute.xlu0 %2059
    %2061 = vrot.lane.b32.xlu0 %v2020, 64
    %v2062 = vpop.permute.xlu0 %2061
    %2067 = vrot.lane.b32.xlu0 %v1975, 96
    %v2068 = vpop.permute.xlu0 %2067
    %2069 = vrot.lane.b32.xlu0 %v2024, 96
    %v2070 = vpop.permute.xlu0 %2069
    %v2073 = vsel %vm45, %v1949, %v2028
    %v2074 = vsel %vm45, %v1998, %v2030
    %vm2075 = vcmask 523264
    %v2076 = vsel %vm2075, %v2073, %v2036
    %v2077 = vsel %vm2075, %v2074, %v2038
    %vm2078 = vcmask 785408
    %v2079 = vsel %vm2078, %v2076, %v2044
    %v2080 = vsel %vm2078, %v2077, %v2046
    %v2081 = vsel %vm45, %v1964, %v2052
    %v2082 = vsel %vm45, %v2013, %v2054
    %v2083 = vsel %vm2075, %v2081, %v2060
    %v2084 = vsel %vm2075, %v2082, %v2062
    %v2085 = vsel %vm2078, %v2083, %v2068
    %v2086 = vsel %vm2078, %v2084, %v2070
    %v2091 = vcombine.low %v2079, %v2085
    %v2093 = vunpack.c.l.s4 1966171168
    %v2094 = vunpack.c.0.s8 %v2093
    %v2095 = vlaneseq
    %v2096 = vshrl.u32 %v2095, 7
    %v2097 = vsub.s32 %v2094, %v2096
    %v2098 = vrot.slane %v2091, %v2097
    %v2100 = vunpack.c.l.s4 1966171168
    %v2101 = vunpack.c.0.s8 %v2100
    %v2102 = vlaneseq
    %v2103 = vshrl.u32 %v2102, 7
    %v2104 = vsub.s32 %v2101, %v2103
    %v2105 = vrot.slane %v2098, %v2104
    %v2106 = vcombine.low %v2080, %v2086
    %v2108 = vunpack.c.l.s4 1966171168
    %v2109 = vunpack.c.0.s8 %v2108
    %v2110 = vlaneseq
    %v2111 = vshrl.u32 %v2110, 7
    %v2112 = vsub.s32 %v2109, %v2111
    %v2113 = vrot.slane %v2106, %v2112
    %v2115 = vunpack.c.l.s4 1966171168
    %v2116 = vunpack.c.0.s8 %v2115
    %v2117 = vlaneseq
    %v2118 = vshrl.u32 %v2117, 7
    %v2119 = vsub.s32 %v2116, %v2118
    %v2120 = vrot.slane %v2113, %v2119
    %v2123 = vlaneseq
    %vm2124 = vcmp.ge.s32.totalorder %v2123, 0
    %vm2125 = vcmp.lt.s32.totalorder %v2123, 256
    %vm2126 = vmand %vm2124, %vm2125
    %2127 = vst.msk [vmem:[#allocation6] sm:$0x3] %vm2126, %v2105
    %2128 = vst.msk [vmem:[#allocation6 + $0x2] sm:$0x3] %vm2126, %v2120
    // Predicated region
    $region18: #{tpu_custom_call.1} parent=1 // pred_check
      _
    $region19: #{tpu_custom_call.1} parent=1 // pred_check_branch
      %2130 = sbr.rel (0) target = $region21
    $region20: #{tpu_custom_call.1} parent=1 // pred_region
      %s2132 = ssub.s32 64, 64
      %2133 = vsyncadd [#allocation5], %s2132
      %s2134 = sshll.u32 [#allocation6], 4
      %s2135 = int_to_ptr.vmem [resolvable:$true] %s2134
      %2140 = dma.vmem_to_hbm [thread:$0]  %s2135, 64, %s3, [#allocation5], 32, 32, 2
    $region21: #{tpu_custom_call.1} parent=1 // pred_fallthru
      _
    // Predicated region
    $region22: #{tpu_custom_call.1} parent=1 // pred_check
      _
    $region23: #{tpu_custom_call.1} parent=1 // pred_check_branch
      %2142 = sbr.rel (0) target = $region25
    $region24: #{tpu_custom_call.1} parent=1 // pred_region
      %2143 = dma.done [#allocation5], 64
    $region25: #{tpu_custom_call.1} parent=1 // pred_fallthru
      _
    %2144 = vsyncpa [#allocation4], 1
    %2145 = vsyncpa [#allocation5], 1

// kernel: tpu_custom_call.1
$region0: #{tpu_custom_call.1}
  #allocation0 [shape = 'u32[]', space=smem, size = 0x4, offset = 0x4, fixed_abs, tag = 'smem constant byte address 0x4 - core index']
  #allocation1 [shape = 'u32[144,128]{1,0:T(1,128)}', space=vmem, size = 0x12000, scoped, tag = 'internal scratch']
  #allocation2 [shape = 'f32[1,1]{1,0:T(1,128)S(6)}', space=smem, size = 0x200, scoped, tag = 'scoped memory for tpu_custom_call.1']
  %s0 = inlined_call_operand.hbm [shape: f32[2,16,32], index: 0, kind: input, shape index: {}]
  %s1 = inlined_call_operand.vmem [shape: f32[1,32], index: 1, kind: input, shape index: {}]
  %s2 = inlined_call_operand.<no memory space> [shape: f32[1,1], index: 2, kind: input, shape index: {}]
  %s3 = inlined_call_operand.hbm [shape: f32[2,8,32], index: 3, kind: output, shape index: {}]
  %s4 = sld [smem:[#allocation0]]
  $region26: #{tpu_custom_call.1} parent=0
    _
  %s6 = ssub.s32 1, %s4
  %s7 = scalar_select 0, %s6, %s4
  %8 = sst [smem:[#allocation2]] %s2
  $region1: #{tpu_custom_call.1} parent=0
    #allocation3 [shape = 'u8[16384]{0}', space=vmem, size = 0x4000, scoped, tag = 'input window, operand 0, single buffered']
    #allocation4 [shape = 's32[1]{0}', space=sflag, size = 0x4, scoped, tag = 'scoped memory for tpu_custom_call.1']
    #allocation5 [shape = 's32[1]{0}', space=sflag, size = 0x4, scoped, tag = 'scoped memory for tpu_custom_call.1']
    #allocation6 [shape = 'u8[8192]{0}', space=vmem, size = 0x2000, scoped, tag = 'output window, operand 0, single buffered']
    %9 = vsyncpa [#allocation4], 0
    %10 = vsyncpa [#allocation5], 0
    // Predicated region
    $region2: #{tpu_custom_call.1} parent=1 // pred_check
      _
    $region3: #{tpu_custom_call.1} parent=1 // pred_check_branch
      %12 = sbr.rel (0) target = $region5
    $region4: #{tpu_custom_call.1} parent=1 // pred_region
      %s14 = ssub.s32 512, 512
      %15 = vsyncadd [#allocation4], %s14
      %s16 = sshll.u32 [#allocation3], 4
      %s17 = int_to_ptr.vmem [resolvable:$true] %s16
      %22 = dma.hbm_to_vmem [thread:$0]  %s0, 512, %s17, [#allocation4], 128, 128, 8
    $region5: #{tpu_custom_call.1} parent=1 // pred_fallthru
      _
    // Predicated region
    $region6: #{tpu_custom_call.1} parent=1 // pred_check
      _
    $region7: #{tpu_custom_call.1} parent=1 // pred_check_branch
      %24 = sbr.rel (0) target = $region9
    $region8: #{tpu_custom_call.1} parent=1 // pred_region
      _
    $region9: #{tpu_custom_call.1} parent=1 // pred_fallthru
      _
    // Predicated region
    $region10: #{tpu_custom_call.1} parent=1 // pred_check
      _
    $region11: #{tpu_custom_call.1} parent=1 // pred_check_branch
      %26 = sbr.rel (0) target = $region13
    $region12: #{tpu_custom_call.1} parent=1 // pred_region
      _
    $region13: #{tpu_custom_call.1} parent=1 // pred_fallthru
      _
    // Predicated region
    $region14: #{tpu_custom_call.1} parent=1 // pred_check
      _
    $region15: #{tpu_custom_call.1} parent=1 // pred_check_branch
      %28 = sbr.rel (0) target = $region17
    $region16: #{tpu_custom_call.1} parent=1 // pred_region
      %29 = dma.done [#allocation4], 512
    $region17: #{tpu_custom_call.1} parent=1 // pred_fallthru
      _
    %v30 = vld [vmem:[#allocation3] sm:$0xff]
    %v31 = vld [vmem:[#allocation3 + $0x8] sm:$0xff]
    %v32 = vld [vmem:[#allocation3 + $0x10] sm:$0xff]
    %v33 = vld [vmem:[#allocation3 + $0x18] sm:$0xff]
    %v34 = vld [vmem:[%s1] sm:$0x1]
    %v36 = vlaneseq
    %v37 = vshrl.u32 %v36, 7
    %v38 = vsub.s32 0, %v37
    %v39 = vrot.slane %v34, %v38
    %v41 = vmul.f32 %v30, %v39
    %v42 = vmul.f32 %v31, %v39
    %v43 = vmul.f32 %v32, %v39
    %v44 = vmul.f32 %v33, %v39
    %vm45 = vcmask 261120
    %v46 = vsel %vm45, %v41, 0.0
    %47 = vadd.xlane.f32.xlu0 %v46
    %v48 = vpop.xlane.xlu0 %47
    %v49 = vsel %vm45, %v42, 0.0
    %50 = vadd.xlane.f32.xlu0 %v49
    %v51 = vpop.xlane.xlu0 %50
    %v52 = vsel %vm45, %v43, 0.0
    %53 = vadd.xlane.f32.xlu0 %v52
    %v54 = vpop.xlane.xlu0 %53
    %v55 = vsel %vm45, %v44, 0.0
    %56 = vadd.xlane.f32.xlu0 %v55
    %v57 = vpop.xlane.xlu0 %56
    %s58 = sld [smem:[#allocation2]]
    %v59 = vstv %s58
    %v60 = vadd.f32 %v48, %v59
    %v61 = vadd.f32 %v51, %v59
    %v62 = vadd.f32 %v54, %v59
    %v63 = vadd.f32 %v57, %v59
    %v64 = vxor.u32 %v60, 2147483648
    %v65 = vxor.u32 %v61, 2147483648
    %v66 = vxor.u32 %v62, 2147483648
    %v67 = vxor.u32 %v63, 2147483648
    %v68 = vmul.f32 %v64, 1.442695
    %v69 = vpow.pop %v68
    %v70 = vmul.f32 %v65, 1.442695
    %v71 = vpow.pop %v70
    %v72 = vmul.f32 %v66, 1.442695
    %v73 = vpow.pop %v72
    %v74 = vmul.f32 %v67, 1.442695
    %v75 = vpow.pop %v74
    %v76 = vadd.f32 %v69, 1.0
    %v77 = vadd.f32 %v71, 1.0
    %v78 = vadd.f32 %v73, 1.0
    %v79 = vadd.f32 %v75, 1.0
    %v80 = vrcp.pop %v76
    %v81 = vmul.f32 1.0, %v80
    %v82 = vrcp.pop %v77
    %v83 = vmul.f32 1.0, %v82
    %v84 = vrcp.pop %v78
    %v85 = vmul.f32 1.0, %v84
    %v86 = vrcp.pop %v79
    %v87 = vmul.f32 1.0, %v86
    %v88 = vlaneseq
    %v89 = vshrl.u32 %v88, 7
    %v90 = vadd.s32 %v89, 8
    %v91 = vlaneseq
    %v92 = vand.u32 %v91, 127
    %v97 = vlaneseq
    %v98 = vshrl.u32 %v97, 7
    %v99 = vsub.s32 0, %v98
    %v100 = vrot.slane %v81, %v99
    %v101 = vlaneseq
    %v102 = vshrl.u32 %v101, 7
    %v103 = vsub.s32 1, %v102
    %v104 = vrot.slane %v81, %v103
    %v105 = vlaneseq
    %v106 = vshrl.u32 %v105, 7
    %v107 = vsub.s32 2, %v106
    %v108 = vrot.slane %v81, %v107
    %v109 = vlaneseq
    %v110 = vshrl.u32 %v109, 7
    %v111 = vsub.s32 3, %v110
    %v112 = vrot.slane %v81, %v111
    %v113 = vlaneseq
    %v114 = vshrl.u32 %v113, 7
    %v115 = vsub.s32 4, %v114
    %v116 = vrot.slane %v81, %v115
    %v117 = vlaneseq
    %v118 = vshrl.u32 %v117, 7
    %v119 = vsub.s32 5, %v118
    %v120 = vrot.slane %v81, %v119
    %v121 = vlaneseq
    %v122 = vshrl.u32 %v121, 7
    %v123 = vsub.s32 6, %v122
    %v124 = vrot.slane %v81, %v123
    %v125 = vlaneseq
    %v126 = vshrl.u32 %v125, 7
    %v127 = vsub.s32 7, %v126
    %v128 = vrot.slane %v81, %v127
    %v129 = vlaneseq
    %v130 = vshrl.u32 %v129, 7
    %v131 = vsub.s32 0, %v130
    %v132 = vrot.slane %v83, %v131
    %v133 = vlaneseq
    %v134 = vshrl.u32 %v133, 7
    %v135 = vsub.s32 1, %v134
    %v136 = vrot.slane %v83, %v135
    %v137 = vlaneseq
    %v138 = vshrl.u32 %v137, 7
    %v139 = vsub.s32 2, %v138
    %v140 = vrot.slane %v83, %v139
    %v141 = vlaneseq
    %v142 = vshrl.u32 %v141, 7
    %v143 = vsub.s32 3, %v142
    %v144 = vrot.slane %v83, %v143
    %v145 = vlaneseq
    %v146 = vshrl.u32 %v145, 7
    %v147 = vsub.s32 4, %v146
    %v148 = vrot.slane %v83, %v147
    %v149 = vlaneseq
    %v150 = vshrl.u32 %v149, 7
    %v151 = vsub.s32 5, %v150
    %v152 = vrot.slane %v83, %v151
    %v153 = vlaneseq
    %v154 = vshrl.u32 %v153, 7
    %v155 = vsub.s32 6, %v154
    %v156 = vrot.slane %v83, %v155
    %v157 = vlaneseq
    %v158 = vshrl.u32 %v157, 7
    %v159 = vsub.s32 7, %v158
    %v160 = vrot.slane %v83, %v159
    %v161 = vlaneseq
    %v162 = vshrl.u32 %v161, 7
    %v163 = vsub.s32 0, %v162
    %v164 = vrot.slane %v85, %v163
    %v165 = vlaneseq
    %v166 = vshrl.u32 %v165, 7
    %v167 = vsub.s32 1, %v166
    %v168 = vrot.slane %v85, %v167
    %v169 = vlaneseq
    %v170 = vshrl.u32 %v169, 7
    %v171 = vsub.s32 2, %v170
    %v172 = vrot.slane %v85, %v171
    %v173 = vlaneseq
    %v174 = vshrl.u32 %v173, 7
    %v175 = vsub.s32 3, %v174
    %v176 = vrot.slane %v85, %v175
    %v177 = vlaneseq
    %v178 = vshrl.u32 %v177, 7
    %v179 = vsub.s32 4, %v178
    %v180 = vrot.slane %v85, %v179
    %v181 = vlaneseq
    %v182 = vshrl.u32 %v181, 7
    %v183 = vsub.s32 5, %v182
    %v184 = vrot.slane %v85, %v183
    %v185 = vlaneseq
    %v186 = vshrl.u32 %v185, 7
    %v187 = vsub.s32 6, %v186
    %v188 = vrot.slane %v85, %v187
    %v189 = vlaneseq
    %v190 = vshrl.u32 %v189, 7
    %v191 = vsub.s32 7, %v190
    %v192 = vrot.slane %v85, %v191
    %v193 = vlaneseq
    %v194 = vshrl.u32 %v193, 7
    %v195 = vsub.s32 0, %v194
    %v196 = vrot.slane %v87, %v195
    %v197 = vlaneseq
    %v198 = vshrl.u32 %v197, 7
    %v199 = vsub.s32 1, %v198
    %v200 = vrot.slane %v87, %v199
    %v201 = vlaneseq
    %v202 = vshrl.u32 %v201, 7
    %v203 = vsub.s32 2, %v202
    %v204 = vrot.slane %v87, %v203
    %v205 = vlaneseq
    %v206 = vshrl.u32 %v205, 7
    %v207 = vsub.s32 3, %v206
    %v208 = vrot.slane %v87, %v207
    %v209 = vlaneseq
    %v210 = vshrl.u32 %v209, 7
    %v211 = vsub.s32 4, %v210
    %v212 = vrot.slane %v87, %v211
    %v213 = vlaneseq
    %v214 = vshrl.u32 %v213, 7
    %v215 = vsub.s32 5, %v214
    %v216 = vrot.slane %v87, %v215
    %v217 = vlaneseq
    %v218 = vshrl.u32 %v217, 7
    %v219 = vsub.s32 6, %v218
    %v220 = vrot.slane %v87, %v219
    %v221 = vlaneseq
    %v222 = vshrl.u32 %v221, 7
    %v223 = vsub.s32 7, %v222
    %v224 = vrot.slane %v87, %v223
    %vm257 = vcmp.gt.f32.partialorder %v81, %v100
    %vm258 = vcmp.gt.f32.partialorder %v83, %v100
    %vm259 = vcmp.gt.f32.partialorder %v81, %v104
    %vm260 = vcmp.gt.f32.partialorder %v83, %v104
    %vm261 = vcmp.gt.f32.partialorder %v81, %v108
    %vm262 = vcmp.gt.f32.partialorder %v83, %v108
    %vm263 = vcmp.gt.f32.partialorder %v81, %v112
    %vm264 = vcmp.gt.f32.partialorder %v83, %v112
    %vm265 = vcmp.gt.f32.partialorder %v81, %v116
    %vm266 = vcmp.gt.f32.partialorder %v83, %v116
    %vm267 = vcmp.gt.f32.partialorder %v81, %v120
    %vm268 = vcmp.gt.f32.partialorder %v83, %v120
    %vm269 = vcmp.gt.f32.partialorder %v81, %v124
    %vm270 = vcmp.gt.f32.partialorder %v83, %v124
    %vm271 = vcmp.gt.f32.partialorder %v81, %v128
    %vm272 = vcmp.gt.f32.partialorder %v83, %v128
    %vm273 = vcmp.gt.f32.partialorder %v81, %v132
    %vm274 = vcmp.gt.f32.partialorder %v83, %v132
    %vm275 = vcmp.gt.f32.partialorder %v81, %v136
    %vm276 = vcmp.gt.f32.partialorder %v83, %v136
    %vm277 = vcmp.gt.f32.partialorder %v81, %v140
    %vm278 = vcmp.gt.f32.partialorder %v83, %v140
    %vm279 = vcmp.gt.f32.partialorder %v81, %v144
    %vm280 = vcmp.gt.f32.partialorder %v83, %v144
    %vm281 = vcmp.gt.f32.partialorder %v81, %v148
    %vm282 = vcmp.gt.f32.partialorder %v83, %v148
    %vm283 = vcmp.gt.f32.partialorder %v81, %v152
    %vm284 = vcmp.gt.f32.partialorder %v83, %v152
    %vm285 = vcmp.gt.f32.partialorder %v81, %v156
    %vm286 = vcmp.gt.f32.partialorder %v83, %v156
    %vm287 = vcmp.gt.f32.partialorder %v81, %v160
    %vm288 = vcmp.gt.f32.partialorder %v83, %v160
    %vm289 = vcmp.gt.f32.partialorder %v85, %v164
    %vm290 = vcmp.gt.f32.partialorder %v87, %v164
    %vm291 = vcmp.gt.f32.partialorder %v85, %v168
    %vm292 = vcmp.gt.f32.partialorder %v87, %v168
    %vm293 = vcmp.gt.f32.partialorder %v85, %v172
    %vm294 = vcmp.gt.f32.partialorder %v87, %v172
    %vm295 = vcmp.gt.f32.partialorder %v85, %v176
    %vm296 = vcmp.gt.f32.partialorder %v87, %v176
    %vm297 = vcmp.gt.f32.partialorder %v85, %v180
    %vm298 = vcmp.gt.f32.partialorder %v87, %v180
    %vm299 = vcmp.gt.f32.partialorder %v85, %v184
    %vm300 = vcmp.gt.f32.partialorder %v87, %v184
    %vm301 = vcmp.gt.f32.partialorder %v85, %v188
    %vm302 = vcmp.gt.f32.partialorder %v87, %v188
    %vm303 = vcmp.gt.f32.partialorder %v85, %v192
    %vm304 = vcmp.gt.f32.partialorder %v87, %v192
    %vm305 = vcmp.gt.f32.partialorder %v85, %v196
    %vm306 = vcmp.gt.f32.partialorder %v87, %v196
    %vm307 = vcmp.gt.f32.partialorder %v85, %v200
    %vm308 = vcmp.gt.f32.partialorder %v87, %v200
    %vm309 = vcmp.gt.f32.partialorder %v85, %v204
    %vm310 = vcmp.gt.f32.partialorder %v87, %v204
    %vm311 = vcmp.gt.f32.partialorder %v85, %v208
    %vm312 = vcmp.gt.f32.partialorder %v87, %v208
    %vm313 = vcmp.gt.f32.partialorder %v85, %v212
    %vm314 = vcmp.gt.f32.partialorder %v87, %v212
    %vm315 = vcmp.gt.f32.partialorder %v85, %v216
    %vm316 = vcmp.gt.f32.partialorder %v87, %v216
    %vm317 = vcmp.gt.f32.partialorder %v85, %v220
    %vm318 = vcmp.gt.f32.partialorder %v87, %v220
    %vm319 = vcmp.gt.f32.partialorder %v85, %v224
    %vm320 = vcmp.gt.f32.partialorder %v87, %v224
    %vm321 = vcmp.eq.f32.partialorder %v81, %v100
    %vm322 = vcmp.eq.f32.partialorder %v83, %v100
    %vm323 = vcmp.eq.f32.partialorder %v81, %v104
    %vm324 = vcmp.eq.f32.partialorder %v83, %v104
    %vm325 = vcmp.eq.f32.partialorder %v81, %v108
    %vm326 = vcmp.eq.f32.partialorder %v83, %v108
    %vm327 = vcmp.eq.f32.partialorder %v81, %v112
    %vm328 = vcmp.eq.f32.partialorder %v83, %v112
    %vm329 = vcmp.eq.f32.partialorder %v81, %v116
    %vm330 = vcmp.eq.f32.partialorder %v83, %v116
    %vm331 = vcmp.eq.f32.partialorder %v81, %v120
    %vm332 = vcmp.eq.f32.partialorder %v83, %v120
    %vm333 = vcmp.eq.f32.partialorder %v81, %v124
    %vm334 = vcmp.eq.f32.partialorder %v83, %v124
    %vm335 = vcmp.eq.f32.partialorder %v81, %v128
    %vm336 = vcmp.eq.f32.partialorder %v83, %v128
    %vm337 = vcmp.eq.f32.partialorder %v81, %v132
    %vm338 = vcmp.eq.f32.partialorder %v83, %v132
    %vm339 = vcmp.eq.f32.partialorder %v81, %v136
    %vm340 = vcmp.eq.f32.partialorder %v83, %v136
    %vm341 = vcmp.eq.f32.partialorder %v81, %v140
    %vm342 = vcmp.eq.f32.partialorder %v83, %v140
    %vm343 = vcmp.eq.f32.partialorder %v81, %v144
    %vm344 = vcmp.eq.f32.partialorder %v83, %v144
    %vm345 = vcmp.eq.f32.partialorder %v81, %v148
    %vm346 = vcmp.eq.f32.partialorder %v83, %v148
    %vm347 = vcmp.eq.f32.partialorder %v81, %v152
    %vm348 = vcmp.eq.f32.partialorder %v83, %v152
    %vm349 = vcmp.eq.f32.partialorder %v81, %v156
    %vm350 = vcmp.eq.f32.partialorder %v83, %v156
    %vm351 = vcmp.eq.f32.partialorder %v81, %v160
    %vm352 = vcmp.eq.f32.partialorder %v83, %v160
    %vm353 = vcmp.eq.f32.partialorder %v85, %v164
    %vm354 = vcmp.eq.f32.partialorder %v87, %v164
    %vm355 = vcmp.eq.f32.partialorder %v85, %v168
    %vm356 = vcmp.eq.f32.partialorder %v87, %v168
    %vm357 = vcmp.eq.f32.partialorder %v85, %v172
    %vm358 = vcmp.eq.f32.partialorder %v87, %v172
    %vm359 = vcmp.eq.f32.partialorder %v85, %v176
    %vm360 = vcmp.eq.f32.partialorder %v87, %v176
    %vm361 = vcmp.eq.f32.partialorder %v85, %v180
    %vm362 = vcmp.eq.f32.partialorder %v87, %v180
    %vm363 = vcmp.eq.f32.partialorder %v85, %v184
    %vm364 = vcmp.eq.f32.partialorder %v87, %v184
    %vm365 = vcmp.eq.f32.partialorder %v85, %v188
    %vm366 = vcmp.eq.f32.partialorder %v87, %v188
    %vm367 = vcmp.eq.f32.partialorder %v85, %v192
    %vm368 = vcmp.eq.f32.partialorder %v87, %v192
    %vm369 = vcmp.eq.f32.partialorder %v85, %v196
    %vm370 = vcmp.eq.f32.partialorder %v87, %v196
    %vm371 = vcmp.eq.f32.partialorder %v85, %v200
    %vm372 = vcmp.eq.f32.partialorder %v87, %v200
    %vm373 = vcmp.eq.f32.partialorder %v85, %v204
    %vm374 = vcmp.eq.f32.partialorder %v87, %v204
    %vm375 = vcmp.eq.f32.partialorder %v85, %v208
    %vm376 = vcmp.eq.f32.partialorder %v87, %v208
    %vm377 = vcmp.eq.f32.partialorder %v85, %v212
    %vm378 = vcmp.eq.f32.partialorder %v87, %v212
    %vm379 = vcmp.eq.f32.partialorder %v85, %v216
    %vm380 = vcmp.eq.f32.partialorder %v87, %v216
    %vm381 = vcmp.eq.f32.partialorder %v85, %v220
    %vm382 = vcmp.eq.f32.partialorder %v87, %v220
    %vm383 = vcmp.eq.f32.partialorder %v85, %v224
    %vm384 = vcmp.eq.f32.partialorder %v87, %v224
    %vm385 = vcmp.lt.s32.totalorder %v92, %v89
    %vm386 = vcmp.lt.s32.totalorder %v92, %v90
    %v387 = vsel %vm385, 1, 0
    %v388 = vsel %vm386, 1, 0
    %vm389 = vcmp.eq.s32.totalorder %v387, 1
    %vm390 = vcmp.eq.s32.totalorder %v388, 1
    %v391 = vsel %vm389, 1, 0
    %v392 = vsel %vm390, 1, 0
    %v393 = vlaneseq
    %v394 = vshrl.u32 %v393, 7
    %v395 = vsub.s32 0, %v394
    %v396 = vrot.slane %v391, %v395
    %398 = vbcast.lane.b32.xlu0 %v396, 256
    %v399 = vpop.permute.xlu0 %398
    %s401 = sor.u32 256, 8
    %402 = vbcast.lane.b32.xlu0 %v396, %s401
    %v403 = vpop.permute.xlu0 %402
    %v404 = vlaneseq
    %v405 = vshrl.u32 %v404, 7
    %v406 = vsub.s32 1, %v405
    %v407 = vrot.slane %v391, %v406
    %409 = vbcast.lane.b32.xlu0 %v407, 256
    %v410 = vpop.permute.xlu0 %409
    %s412 = sor.u32 256, 8
    %413 = vbcast.lane.b32.xlu0 %v407, %s412
    %v414 = vpop.permute.xlu0 %413
    %v415 = vlaneseq
    %v416 = vshrl.u32 %v415, 7
    %v417 = vsub.s32 2, %v416
    %v418 = vrot.slane %v391, %v417
    %420 = vbcast.lane.b32.xlu0 %v418, 256
    %v421 = vpop.permute.xlu0 %420
    %s423 = sor.u32 256, 8
    %424 = vbcast.lane.b32.xlu0 %v418, %s423
    %v425 = vpop.permute.xlu0 %424
    %v426 = vlaneseq
    %v427 = vshrl.u32 %v426, 7
    %v428 = vsub.s32 3, %v427
    %v429 = vrot.slane %v391, %v428
    %431 = vbcast.lane.b32.xlu0 %v429, 256
    %v432 = vpop.permute.xlu0 %431
    %s434 = sor.u32 256, 8
    %435 = vbcast.lane.b32.xlu0 %v429, %s434
    %v436 = vpop.permute.xlu0 %435
    %v437 = vlaneseq
    %v438 = vshrl.u32 %v437, 7
    %v439 = vsub.s32 4, %v438
    %v440 = vrot.slane %v391, %v439
    %442 = vbcast.lane.b32.xlu0 %v440, 256
    %v443 = vpop.permute.xlu0 %442
    %s445 = sor.u32 256, 8
    %446 = vbcast.lane.b32.xlu0 %v440, %s445
    %v447 = vpop.permute.xlu0 %446
    %v448 = vlaneseq
    %v449 = vshrl.u32 %v448, 7
    %v450 = vsub.s32 5, %v449
    %v451 = vrot.slane %v391, %v450
    %453 = vbcast.lane.b32.xlu0 %v451, 256
    %v454 = vpop.permute.xlu0 %453
    %s456 = sor.u32 256, 8
    %457 = vbcast.lane.b32.xlu0 %v451, %s456
    %v458 = vpop.permute.xlu0 %457
    %v459 = vlaneseq
    %v460 = vshrl.u32 %v459, 7
    %v461 = vsub.s32 6, %v460
    %v462 = vrot.slane %v391, %v461
    %464 = vbcast.lane.b32.xlu0 %v462, 256
    %v465 = vpop.permute.xlu0 %464
    %s467 = sor.u32 256, 8
    %468 = vbcast.lane.b32.xlu0 %v462, %s467
    %v469 = vpop.permute.xlu0 %468
    %v470 = vlaneseq
    %v471 = vshrl.u32 %v470, 7
    %v472 = vsub.s32 7, %v471
    %v473 = vrot.slane %v391, %v472
    %475 = vbcast.lane.b32.xlu0 %v473, 256
    %v476 = vpop.permute.xlu0 %475
    %s478 = sor.u32 256, 8
    %479 = vbcast.lane.b32.xlu0 %v473, %s478
    %v480 = vpop.permute.xlu0 %479
    %v481 = vlaneseq
    %v482 = vshrl.u32 %v481, 7
    %v483 = vsub.s32 0, %v482
    %v484 = vrot.slane %v392, %v483
    %486 = vbcast.lane.b32.xlu0 %v484, 256
    %v487 = vpop.permute.xlu0 %486
    %s489 = sor.u32 256, 8
    %490 = vbcast.lane.b32.xlu0 %v484, %s489
    %v491 = vpop.permute.xlu0 %490
    %v492 = vlaneseq
    %v493 = vshrl.u32 %v492, 7
    %v494 = vsub.s32 1, %v493
    %v495 = vrot.slane %v392, %v494
    %497 = vbcast.lane.b32.xlu0 %v495, 256
    %v498 = vpop.permute.xlu0 %497
    %s500 = sor.u32 256, 8
    %501 = vbcast.lane.b32.xlu0 %v495, %s500
    %v502 = vpop.permute.xlu0 %501
    %v503 = vlaneseq
    %v504 = vshrl.u32 %v503, 7
    %v505 = vsub.s32 2, %v504
    %v506 = vrot.slane %v392, %v505
    %508 = vbcast.lane.b32.xlu0 %v506, 256
    %v509 = vpop.permute.xlu0 %508
    %s511 = sor.u32 256, 8
    %512 = vbcast.lane.b32.xlu0 %v506, %s511
    %v513 = vpop.permute.xlu0 %512
    %v514 = vlaneseq
    %v515 = vshrl.u32 %v514, 7
    %v516 = vsub.s32 3, %v515
    %v517 = vrot.slane %v392, %v516
    %519 = vbcast.lane.b32.xlu0 %v517, 256
    %v520 = vpop.permute.xlu0 %519
    %s522 = sor.u32 256, 8
    %523 = vbcast.lane.b32.xlu0 %v517, %s522
    %v524 = vpop.permute.xlu0 %523
    %v525 = vlaneseq
    %v526 = vshrl.u32 %v525, 7
    %v527 = vsub.s32 4, %v526
    %v528 = vrot.slane %v392, %v527
    %530 = vbcast.lane.b32.xlu0 %v528, 256
    %v531 = vpop.permute.xlu0 %530
    %s533 = sor.u32 256, 8
    %534 = vbcast.lane.b32.xlu0 %v528, %s533
    %v535 = vpop.permute.xlu0 %534
    %v536 = vlaneseq
    %v537 = vshrl.u32 %v536, 7
    %v538 = vsub.s32 5, %v537
    %v539 = vrot.slane %v392, %v538
    %541 = vbcast.lane.b32.xlu0 %v539, 256
    %v542 = vpop.permute.xlu0 %541
    %s544 = sor.u32 256, 8
    %545 = vbcast.lane.b32.xlu0 %v539, %s544
    %v546 = vpop.permute.xlu0 %545
    %v547 = vlaneseq
    %v548 = vshrl.u32 %v547, 7
    %v549 = vsub.s32 6, %v548
    %v550 = vrot.slane %v392, %v549
    %552 = vbcast.lane.b32.xlu0 %v550, 256
    %v553 = vpop.permute.xlu0 %552
    %s555 = sor.u32 256, 8
    %556 = vbcast.lane.b32.xlu0 %v550, %s555
    %v557 = vpop.permute.xlu0 %556
    %v558 = vlaneseq
    %v559 = vshrl.u32 %v558, 7
    %v560 = vsub.s32 7, %v559
    %v561 = vrot.slane %v392, %v560
    %563 = vbcast.lane.b32.xlu0 %v561, 256
    %v564 = vpop.permute.xlu0 %563
    %s566 = sor.u32 256, 8
    %567 = vbcast.lane.b32.xlu0 %v561, %s566
    %v568 = vpop.permute.xlu0 %567
    %vm569 = vcmp.ne.s32.totalorder %v399, 0
    %vm570 = vcmp.ne.s32.totalorder %v403, 0
    %vm571 = vcmp.ne.s32.totalorder %v410, 0
    %vm572 = vcmp.ne.s32.totalorder %v414, 0
    %vm573 = vcmp.ne.s32.totalorder %v421, 0
    %vm574 = vcmp.ne.s32.totalorder %v425, 0
    %vm575 = vcmp.ne.s32.totalorder %v432, 0
    %vm576 = vcmp.ne.s32.totalorder %v436, 0
    %vm577 = vcmp.ne.s32.totalorder %v443, 0
    %vm578 = vcmp.ne.s32.totalorder %v447, 0
    %vm579 = vcmp.ne.s32.totalorder %v454, 0
    %vm580 = vcmp.ne.s32.totalorder %v458, 0
    %vm581 = vcmp.ne.s32.totalorder %v465, 0
    %vm582 = vcmp.ne.s32.totalorder %v469, 0
    %vm583 = vcmp.ne.s32.totalorder %v476, 0
    %vm584 = vcmp.ne.s32.totalorder %v480, 0
    %vm585 = vcmp.ne.s32.totalorder %v487, 0
    %vm586 = vcmp.ne.s32.totalorder %v491, 0
    %vm587 = vcmp.ne.s32.totalorder %v498, 0
    %vm588 = vcmp.ne.s32.totalorder %v502, 0
    %vm589 = vcmp.ne.s32.totalorder %v509, 0
    %vm590 = vcmp.ne.s32.totalorder %v513, 0
    %vm591 = vcmp.ne.s32.totalorder %v520, 0
    %vm592 = vcmp.ne.s32.totalorder %v524, 0
    %vm593 = vcmp.ne.s32.totalorder %v531, 0
    %vm594 = vcmp.ne.s32.totalorder %v535, 0
    %vm595 = vcmp.ne.s32.totalorder %v542, 0
    %vm596 = vcmp.ne.s32.totalorder %v546, 0
    %vm597 = vcmp.ne.s32.totalorder %v553, 0
    %vm598 = vcmp.ne.s32.totalorder %v557, 0
    %vm599 = vcmp.ne.s32.totalorder %v564, 0
    %vm600 = vcmp.ne.s32.totalorder %v568, 0
    %vm601 = vmand %vm321, %vm569
    %vm602 = vmand %vm322, %vm570
    %vm603 = vmand %vm323, %vm571
    %vm604 = vmand %vm324, %vm572
    %vm605 = vmand %vm325, %vm573
    %vm606 = vmand %vm326, %vm574
    %vm607 = vmand %vm327, %vm575
    %vm608 = vmand %vm328, %vm576
    %vm609 = vmand %vm329, %vm577
    %vm610 = vmand %vm330, %vm578
    %vm611 = vmand %vm331, %vm579
    %vm612 = vmand %vm332, %vm580
    %vm613 = vmand %vm333, %vm581
    %vm614 = vmand %vm334, %vm582
    %vm615 = vmand %vm335, %vm583
    %vm616 = vmand %vm336, %vm584
    %vm617 = vmand %vm337, %vm585
    %vm618 = vmand %vm338, %vm586
    %vm619 = vmand %vm339, %vm587
    %vm620 = vmand %vm340, %vm588
    %vm621 = vmand %vm341, %vm589
    %vm622 = vmand %vm342, %vm590
    %vm623 = vmand %vm343, %vm591
    %vm624 = vmand %vm344, %vm592
    %vm625 = vmand %vm345, %vm593
    %vm626 = vmand %vm346, %vm594
    %vm627 = vmand %vm347, %vm595
    %vm628 = vmand %vm348, %vm596
    %vm629 = vmand %vm349, %vm597
    %vm630 = vmand %vm350, %vm598
    %vm631 = vmand %vm351, %vm599
    %vm632 = vmand %vm352, %vm600
    %vm633 = vmand %vm353, %vm569
    %vm634 = vmand %vm354, %vm570
    %vm635 = vmand %vm355, %vm571
    %vm636 = vmand %vm356, %vm572
    %vm637 = vmand %vm357, %vm573
    %vm638 = vmand %vm358, %vm574
    %vm639 = vmand %vm359, %vm575
    %vm640 = vmand %vm360, %vm576
    %vm641 = vmand %vm361, %vm577
    %vm642 = vmand %vm362, %vm578
    %vm643 = vmand %vm363, %vm579
    %vm644 = vmand %vm364, %vm580
    %vm645 = vmand %vm365, %vm581
    %vm646 = vmand %vm366, %vm582
    %vm647 = vmand %vm367, %vm583
    %vm648 = vmand %vm368, %vm584
    %vm649 = vmand %vm369, %vm585
    %vm650 = vmand %vm370, %vm586
    %vm651 = vmand %vm371, %vm587
    %vm652 = vmand %vm372, %vm588
    %vm653 = vmand %vm373, %vm589
    %vm654 = vmand %vm374, %vm590
    %vm655 = vmand %vm375, %vm591
    %vm656 = vmand %vm376, %vm592
    %vm657 = vmand %vm377, %vm593
    %vm658 = vmand %vm378, %vm594
    %vm659 = vmand %vm379, %vm595
    %vm660 = vmand %vm380, %vm596
    %vm661 = vmand %vm381, %vm597
    %vm662 = vmand %vm382, %vm598
    %vm663 = vmand %vm383, %vm599
    %vm664 = vmand %vm384, %vm600
    %vm665 = vmor %vm257, %vm601
    %vm666 = vmor %vm258, %vm602
    %vm667 = vmor %vm259, %vm603
    %vm668 = vmor %vm260, %vm604
    %vm669 = vmor %vm261, %vm605
    %vm670 = vmor %vm262, %vm606
    %vm671 = vmor %vm263, %vm607
    %vm672 = vmor %vm264, %vm608
    %vm673 = vmor %vm265, %vm609
    %vm674 = vmor %vm266, %vm610
    %vm675 = vmor %vm267, %vm611
    %vm676 = vmor %vm268, %vm612
    %vm677 = vmor %vm269, %vm613
    %vm678 = vmor %vm270, %vm614
    %vm679 = vmor %vm271, %vm615
    %vm680 = vmor %vm272, %vm616
    %vm681 = vmor %vm273, %vm617
    %vm682 = vmor %vm274, %vm618
    %vm683 = vmor %vm275, %vm619
    %vm684 = vmor %vm276, %vm620
    %vm685 = vmor %vm277, %vm621
    %vm686 = vmor %vm278, %vm622
    %vm687 = vmor %vm279, %vm623
    %vm688 = vmor %vm280, %vm624
    %vm689 = vmor %vm281, %vm625
    %vm690 = vmor %vm282, %vm626
    %vm691 = vmor %vm283, %vm627
    %vm692 = vmor %vm284, %vm628
    %vm693 = vmor %vm285, %vm629
    %vm694 = vmor %vm286, %vm630
    %vm695 = vmor %vm287, %vm631
    %vm696 = vmor %vm288, %vm632
    %vm697 = vmor %vm289, %vm633
    %vm698 = vmor %vm290, %vm634
    %vm699 = vmor %vm291, %vm635
    %vm700 = vmor %vm292, %vm636
    %vm701 = vmor %vm293, %vm637
    %vm702 = vmor %vm294, %vm638
    %vm703 = vmor %vm295, %vm639
    %vm704 = vmor %vm296, %vm640
    %vm705 = vmor %vm297, %vm641
    %vm706 = vmor %vm298, %vm642
    %vm707 = vmor %vm299, %vm643
    %vm708 = vmor %vm300, %vm644
    %vm709 = vmor %vm301, %vm645
    %vm710 = vmor %vm302, %vm646
    %vm711 = vmor %vm303, %vm647
    %vm712 = vmor %vm304, %vm648
    %vm713 = vmor %vm305, %vm649
    %vm714 = vmor %vm306, %vm650
    %vm715 = vmor %vm307, %vm651
    %vm716 = vmor %vm308, %vm652
    %vm717 = vmor %vm309, %vm653
    %vm718 = vmor %vm310, %vm654
    %vm719 = vmor %vm311, %vm655
    %vm720 = vmor %vm312, %vm656
    %vm721 = vmor %vm313, %vm657
    %vm722 = vmor %vm314, %vm658
    %vm723 = vmor %vm315, %vm659
    %vm724 = vmor %vm316, %vm660
    %vm725 = vmor %vm317, %vm661
    %vm726 = vmor %vm318, %vm662
    %vm727 = vmor %vm319, %vm663
    %vm728 = vmor %vm320, %vm664
    %v729 = vsel %vm665, 1.0, 0.0
    %v730 = vsel %vm666, 1.0, 0.0
    %v731 = vsel %vm667, 1.0, 0.0
    %v732 = vsel %vm668, 1.0, 0.0
    %v733 = vsel %vm669, 1.0, 0.0
    %v734 = vsel %vm670, 1.0, 0.0
    %v735 = vsel %vm671, 1.0, 0.0
    %v736 = vsel %vm672, 1.0, 0.0
    %v737 = vsel %vm673, 1.0, 0.0
    %v738 = vsel %vm674, 1.0, 0.0
    %v739 = vsel %vm675, 1.0, 0.0
    %v740 = vsel %vm676, 1.0, 0.0
    %v741 = vsel %vm677, 1.0, 0.0
    %v742 = vsel %vm678, 1.0, 0.0
    %v743 = vsel %vm679, 1.0, 0.0
    %v744 = vsel %vm680, 1.0, 0.0
    %v745 = vsel %vm681, 1.0, 0.0
    %v746 = vsel %vm682, 1.0, 0.0
    %v747 = vsel %vm683, 1.0, 0.0
    %v748 = vsel %vm684, 1.0, 0.0
    %v749 = vsel %vm685, 1.0, 0.0
    %v750 = vsel %vm686, 1.0, 0.0
    %v751 = vsel %vm687, 1.0, 0.0
    %v752 = vsel %vm688, 1.0, 0.0
    %v753 = vsel %vm689, 1.0, 0.0
    %v754 = vsel %vm690, 1.0, 0.0
    %v755 = vsel %vm691, 1.0, 0.0
    %v756 = vsel %vm692, 1.0, 0.0
    %v757 = vsel %vm693, 1.0, 0.0
    %v758 = vsel %vm694, 1.0, 0.0
    %v759 = vsel %vm695, 1.0, 0.0
    %v760 = vsel %vm696, 1.0, 0.0
    %v761 = vsel %vm697, 1.0, 0.0
    %v762 = vsel %vm698, 1.0, 0.0
    %v763 = vsel %vm699, 1.0, 0.0
    %v764 = vsel %vm700, 1.0, 0.0
    %v765 = vsel %vm701, 1.0, 0.0
    %v766 = vsel %vm702, 1.0, 0.0
    %v767 = vsel %vm703, 1.0, 0.0
    %v768 = vsel %vm704, 1.0, 0.0
    %v769 = vsel %vm705, 1.0, 0.0
    %v770 = vsel %vm706, 1.0, 0.0
    %v771 = vsel %vm707, 1.0, 0.0
    %v772 = vsel %vm708, 1.0, 0.0
    %v773 = vsel %vm709, 1.0, 0.0
    %v774 = vsel %vm710, 1.0, 0.0
    %v775 = vsel %vm711, 1.0, 0.0
    %v776 = vsel %vm712, 1.0, 0.0
    %v777 = vsel %vm713, 1.0, 0.0
    %v778 = vsel %vm714, 1.0, 0.0
    %v779 = vsel %vm715, 1.0, 0.0
    %v780 = vsel %vm716, 1.0, 0.0
    %v781 = vsel %vm717, 1.0, 0.0
    %v782 = vsel %vm718, 1.0, 0.0
    %v783 = vsel %vm719, 1.0, 0.0
    %v784 = vsel %vm720, 1.0, 0.0
    %v785 = vsel %vm721, 1.0, 0.0
    %v786 = vsel %vm722, 1.0, 0.0
    %v787 = vsel %vm723, 1.0, 0.0
    %v788 = vsel %vm724, 1.0, 0.0
    %v789 = vsel %vm725, 1.0, 0.0
    %v790 = vsel %vm726, 1.0, 0.0
    %v791 = vsel %vm727, 1.0, 0.0
    %v792 = vsel %vm728, 1.0, 0.0
    %857 = vset.pattern.permute.xlu0 0
    %858 = vperm.xlu0 %857, %v729
    %v859 = vpop.permute.xlu0 %858
    %860 = vset.pattern.permute.xlu0 0
    %861 = vperm.xlu0 %860, %v730
    %v862 = vpop.permute.xlu0 %861
    %863 = vset.pattern.permute.xlu0 0
    %864 = vperm.xlu0 %863, %v731
    %v865 = vpop.permute.xlu0 %864
    %866 = vset.pattern.permute.xlu0 0
    %867 = vperm.xlu0 %866, %v732
    %v868 = vpop.permute.xlu0 %867
    %869 = vset.pattern.permute.xlu0 0
    %870 = vperm.xlu0 %869, %v733
    %v871 = vpop.permute.xlu0 %870
    %872 = vset.pattern.permute.xlu0 0
    %873 = vperm.xlu0 %872, %v734
    %v874 = vpop.permute.xlu0 %873
    %875 = vset.pattern.permute.xlu0 0
    %876 = vperm.xlu0 %875, %v735
    %v877 = vpop.permute.xlu0 %876
    %878 = vset.pattern.permute.xlu0 0
    %879 = vperm.xlu0 %878, %v736
    %v880 = vpop.permute.xlu0 %879
    %881 = vset.pattern.permute.xlu0 0
    %882 = vperm.xlu0 %881, %v737
    %v883 = vpop.permute.xlu0 %882
    %884 = vset.pattern.permute.xlu0 0
    %885 = vperm.xlu0 %884, %v738
    %v886 = vpop.permute.xlu0 %885
    %887 = vset.pattern.permute.xlu0 0
    %888 = vperm.xlu0 %887, %v739
    %v889 = vpop.permute.xlu0 %888
    %890 = vset.pattern.permute.xlu0 0
    %891 = vperm.xlu0 %890, %v740
    %v892 = vpop.permute.xlu0 %891
    %893 = vset.pattern.permute.xlu0 0
    %894 = vperm.xlu0 %893, %v741
    %v895 = vpop.permute.xlu0 %894
    %896 = vset.pattern.permute.xlu0 0
    %897 = vperm.xlu0 %896, %v742
    %v898 = vpop.permute.xlu0 %897
    %899 = vset.pattern.permute.xlu0 0
    %900 = vperm.xlu0 %899, %v743
    %v901 = vpop.permute.xlu0 %900
    %902 = vset.pattern.permute.xlu0 0
    %903 = vperm.xlu0 %902, %v744
    %v904 = vpop.permute.xlu0 %903
    %905 = vset.pattern.permute.xlu0 0
    %906 = vperm.xlu0 %905, %v745
    %v907 = vpop.permute.xlu0 %906
    %908 = vset.pattern.permute.xlu0 0
    %909 = vperm.xlu0 %908, %v746
    %v910 = vpop.permute.xlu0 %909
    %911 = vset.pattern.permute.xlu0 0
    %912 = vperm.xlu0 %911, %v747
    %v913 = vpop.permute.xlu0 %912
    %914 = vset.pattern.permute.xlu0 0
    %915 = vperm.xlu0 %914, %v748
    %v916 = vpop.permute.xlu0 %915
    %917 = vset.pattern.permute.xlu0 0
    %918 = vperm.xlu0 %917, %v749
    %v919 = vpop.permute.xlu0 %918
    %920 = vset.pattern.permute.xlu0 0
    %921 = vperm.xlu0 %920, %v750
    %v922 = vpop.permute.xlu0 %921
    %923 = vset.pattern.permute.xlu0 0
    %924 = vperm.xlu0 %923, %v751
    %v925 = vpop.permute.xlu0 %924
    %926 = vset.pattern.permute.xlu0 0
    %927 = vperm.xlu0 %926, %v752
    %v928 = vpop.permute.xlu0 %927
    %929 = vset.pattern.permute.xlu0 0
    %930 = vperm.xlu0 %929, %v753
    %v931 = vpop.permute.xlu0 %930
    %932 = vset.pattern.permute.xlu0 0
    %933 = vperm.xlu0 %932, %v754
    %v934 = vpop.permute.xlu0 %933
    %935 = vset.pattern.permute.xlu0 0
    %936 = vperm.xlu0 %935, %v755
    %v937 = vpop.permute.xlu0 %936
    %938 = vset.pattern.permute.xlu0 0
    %939 = vperm.xlu0 %938, %v756
    %v940 = vpop.permute.xlu0 %939
    %941 = vset.pattern.permute.xlu0 0
    %942 = vperm.xlu0 %941, %v757
    %v943 = vpop.permute.xlu0 %942
    %944 = vset.pattern.permute.xlu0 0
    %945 = vperm.xlu0 %944, %v758
    %v946 = vpop.permute.xlu0 %945
    %947 = vset.pattern.permute.xlu0 0
    %948 = vperm.xlu0 %947, %v759
    %v949 = vpop.permute.xlu0 %948
    %950 = vset.pattern.permute.xlu0 0
    %951 = vperm.xlu0 %950, %v760
    %v952 = vpop.permute.xlu0 %951
    %953 = vset.pattern.permute.xlu0 0
    %954 = vperm.xlu0 %953, %v761
    %v955 = vpop.permute.xlu0 %954
    %956 = vset.pattern.permute.xlu0 0
    %957 = vperm.xlu0 %956, %v762
    %v958 = vpop.permute.xlu0 %957
    %959 = vset.pattern.permute.xlu0 0
    %960 = vperm.xlu0 %959, %v763
    %v961 = vpop.permute.xlu0 %960
    %962 = vset.pattern.permute.xlu0 0
    %963 = vperm.xlu0 %962, %v764
    %v964 = vpop.permute.xlu0 %963
    %965 = vset.pattern.permute.xlu0 0
    %966 = vperm.xlu0 %965, %v765
    %v967 = vpop.permute.xlu0 %966
    %968 = vset.pattern.permute.xlu0 0
    %969 = vperm.xlu0 %968, %v766
    %v970 = vpop.permute.xlu0 %969
    %971 = vset.pattern.permute.xlu0 0
    %972 = vperm.xlu0 %971, %v767
    %v973 = vpop.permute.xlu0 %972
    %974 = vset.pattern.permute.xlu0 0
    %975 = vperm.xlu0 %974, %v768
    %v976 = vpop.permute.xlu0 %975
    %977 = vset.pattern.permute.xlu0 0
    %978 = vperm.xlu0 %977, %v769
    %v979 = vpop.permute.xlu0 %978
    %980 = vset.pattern.permute.xlu0 0
    %981 = vperm.xlu0 %980, %v770
    %v982 = vpop.permute.xlu0 %981
    %983 = vset.pattern.permute.xlu0 0
    %984 = vperm.xlu0 %983, %v771
    %v985 = vpop.permute.xlu0 %984
    %986 = vset.pattern.permute.xlu0 0
    %987 = vperm.xlu0 %986, %v772
    %v988 = vpop.permute.xlu0 %987
    %989 = vset.pattern.permute.xlu0 0
    %990 = vperm.xlu0 %989, %v773
    %v991 = vpop.permute.xlu0 %990
    %992 = vset.pattern.permute.xlu0 0
    %993 = vperm.xlu0 %992, %v774
    %v994 = vpop.permute.xlu0 %993
    %995 = vset.pattern.permute.xlu0 0
    %996 = vperm.xlu0 %995, %v775
    %v997 = vpop.permute.xlu0 %996
    %998 = vset.pattern.permute.xlu0 0
    %999 = vperm.xlu0 %998, %v776
    %v1000 = vpop.permute.xlu0 %999
    %1001 = vset.pattern.permute.xlu0 0
    %1002 = vperm.xlu0 %1001, %v777
    %v1003 = vpop.permute.xlu0 %1002
    %1004 = vset.pattern.permute.xlu0 0
    %1005 = vperm.xlu0 %1004, %v778
    %v1006 = vpop.permute.xlu0 %1005
    %1007 = vset.pattern.permute.xlu0 0
    %1008 = vperm.xlu0 %1007, %v779
    %v1009 = vpop.permute.xlu0 %1008
    %1010 = vset.pattern.permute.xlu0 0
    %1011 = vperm.xlu0 %1010, %v780
    %v1012 = vpop.permute.xlu0 %1011
    %1013 = vset.pattern.permute.xlu0 0
    %1014 = vperm.xlu0 %1013, %v781
    %v1015 = vpop.permute.xlu0 %1014
    %1016 = vset.pattern.permute.xlu0 0
    %1017 = vperm.xlu0 %1016, %v782
    %v1018 = vpop.permute.xlu0 %1017
    %1019 = vset.pattern.permute.xlu0 0
    %1020 = vperm.xlu0 %1019, %v783
    %v1021 = vpop.permute.xlu0 %1020
    %1022 = vset.pattern.permute.xlu0 0
    %1023 = vperm.xlu0 %1022, %v784
    %v1024 = vpop.permute.xlu0 %1023
    %1025 = vset.pattern.permute.xlu0 0
    %1026 = vperm.xlu0 %1025, %v785
    %v1027 = vpop.permute.xlu0 %1026
    %1028 = vset.pattern.permute.xlu0 0
    %1029 = vperm.xlu0 %1028, %v786
    %v1030 = vpop.permute.xlu0 %1029
    %1031 = vset.pattern.permute.xlu0 0
    %1032 = vperm.xlu0 %1031, %v787
    %v1033 = vpop.permute.xlu0 %1032
    %1034 = vset.pattern.permute.xlu0 0
    %1035 = vperm.xlu0 %1034, %v788
    %v1036 = vpop.permute.xlu0 %1035
    %1037 = vset.pattern.permute.xlu0 0
    %1038 = vperm.xlu0 %1037, %v789
    %v1039 = vpop.permute.xlu0 %1038
    %1040 = vset.pattern.permute.xlu0 0
    %1041 = vperm.xlu0 %1040, %v790
    %v1042 = vpop.permute.xlu0 %1041
    %1043 = vset.pattern.permute.xlu0 0
    %1044 = vperm.xlu0 %1043, %v791
    %v1045 = vpop.permute.xlu0 %1044
    %1046 = vset.pattern.permute.xlu0 0
    %1047 = vperm.xlu0 %1046, %v792
    %v1048 = vpop.permute.xlu0 %1047
    %v1049 = vlaneseq
    %v1050 = vshrl.u32 %v1049, 7
    %v1051 = vsub.s32 %v92, %v1050
    %v1052 = vrot.slane %v859, %v1051
    %v1053 = vadd.s32 %v92, 4294967288
    %v1054 = vlaneseq
    %v1055 = vshrl.u32 %v1054, 7
    %v1056 = vsub.s32 %v1053, %v1055
    %v1057 = vrot.slane %v862, %v1056
    %vm1058 = vcmask 130112
    %v1059 = vsel %vm1058, %v1057, %v1052
    %v1060 = vlaneseq
    %v1061 = vshrl.u32 %v1060, 7
    %v1062 = vsub.s32 %v92, %v1061
    %v1063 = vrot.slane %v865, %v1062
    %v1064 = vlaneseq
    %v1065 = vshrl.u32 %v1064, 7
    %v1066 = vsub.s32 %v1053, %v1065
    %v1067 = vrot.slane %v868, %v1066
    %v1068 = vsel %vm1058, %v1067, %v1063
    %v1069 = vlaneseq
    %v1070 = vshrl.u32 %v1069, 7
    %v1071 = vsub.s32 %v92, %v1070
    %v1072 = vrot.slane %v871, %v1071
    %v1073 = vlaneseq
    %v1074 = vshrl.u32 %v1073, 7
    %v1075 = vsub.s32 %v1053, %v1074
    %v1076 = vrot.slane %v874, %v1075
    %v1077 = vsel %vm1058, %v1076, %v1072
    %v1078 = vlaneseq
    %v1079 = vshrl.u32 %v1078, 7
    %v1080 = vsub.s32 %v92, %v1079
    %v1081 = vrot.slane %v877, %v1080
    %v1082 = vlaneseq
    %v1083 = vshrl.u32 %v1082, 7
    %v1084 = vsub.s32 %v1053, %v1083
    %v1085 = vrot.slane %v880, %v1084
    %v1086 = vsel %vm1058, %v1085, %v1081
    %v1087 = vlaneseq
    %v1088 = vshrl.u32 %v1087, 7
    %v1089 = vsub.s32 %v92, %v1088
    %v1090 = vrot.slane %v883, %v1089
    %v1091 = vlaneseq
    %v1092 = vshrl.u32 %v1091, 7
    %v1093 = vsub.s32 %v1053, %v1092
    %v1094 = vrot.slane %v886, %v1093
    %v1095 = vsel %vm1058, %v1094, %v1090
    %v1096 = vlaneseq
    %v1097 = vshrl.u32 %v1096, 7
    %v1098 = vsub.s32 %v92, %v1097
    %v1099 = vrot.slane %v889, %v1098
    %v1100 = vlaneseq
    %v1101 = vshrl.u32 %v1100, 7
    %v1102 = vsub.s32 %v1053, %v1101
    %v1103 = vrot.slane %v892, %v1102
    %v1104 = vsel %vm1058, %v1103, %v1099
    %v1105 = vlaneseq
    %v1106 = vshrl.u32 %v1105, 7
    %v1107 = vsub.s32 %v92, %v1106
    %v1108 = vrot.slane %v895, %v1107
    %v1109 = vlaneseq
    %v1110 = vshrl.u32 %v1109, 7
    %v1111 = vsub.s32 %v1053, %v1110
    %v1112 = vrot.slane %v898, %v1111
    %v1113 = vsel %vm1058, %v1112, %v1108
    %v1114 = vlaneseq
    %v1115 = vshrl.u32 %v1114, 7
    %v1116 = vsub.s32 %v92, %v1115
    %v1117 = vrot.slane %v901, %v1116
    %v1118 = vlaneseq
    %v1119 = vshrl.u32 %v1118, 7
    %v1120 = vsub.s32 %v1053, %v1119
    %v1121 = vrot.slane %v904, %v1120
    %v1122 = vsel %vm1058, %v1121, %v1117
    %v1123 = vlaneseq
    %v1124 = vshrl.u32 %v1123, 7
    %v1125 = vsub.s32 %v92, %v1124
    %v1126 = vrot.slane %v907, %v1125
    %v1127 = vlaneseq
    %v1128 = vshrl.u32 %v1127, 7
    %v1129 = vsub.s32 %v1053, %v1128
    %v1130 = vrot.slane %v910, %v1129
    %v1131 = vsel %vm1058, %v1130, %v1126
    %v1132 = vlaneseq
    %v1133 = vshrl.u32 %v1132, 7
    %v1134 = vsub.s32 %v92, %v1133
    %v1135 = vrot.slane %v913, %v1134
    %v1136 = vlaneseq
    %v1137 = vshrl.u32 %v1136, 7
    %v1138 = vsub.s32 %v1053, %v1137
    %v1139 = vrot.slane %v916, %v1138
    %v1140 = vsel %vm1058, %v1139, %v1135
    %v1141 = vlaneseq
    %v1142 = vshrl.u32 %v1141, 7
    %v1143 = vsub.s32 %v92, %v1142
    %v1144 = vrot.slane %v919, %v1143
    %v1145 = vlaneseq
    %v1146 = vshrl.u32 %v1145, 7
    %v1147 = vsub.s32 %v1053, %v1146
    %v1148 = vrot.slane %v922, %v1147
    %v1149 = vsel %vm1058, %v1148, %v1144
    %v1150 = vlaneseq
    %v1151 = vshrl.u32 %v1150, 7
    %v1152 = vsub.s32 %v92, %v1151
    %v1153 = vrot.slane %v925, %v1152
    %v1154 = vlaneseq
    %v1155 = vshrl.u32 %v1154, 7
    %v1156 = vsub.s32 %v1053, %v1155
    %v1157 = vrot.slane %v928, %v1156
    %v1158 = vsel %vm1058, %v1157, %v1153
    %v1159 = vlaneseq
    %v1160 = vshrl.u32 %v1159, 7
    %v1161 = vsub.s32 %v92, %v1160
    %v1162 = vrot.slane %v931, %v1161
    %v1163 = vlaneseq
    %v1164 = vshrl.u32 %v1163, 7
    %v1165 = vsub.s32 %v1053, %v1164
    %v1166 = vrot.slane %v934, %v1165
    %v1167 = vsel %vm1058, %v1166, %v1162
    %v1168 = vlaneseq
    %v1169 = vshrl.u32 %v1168, 7
    %v1170 = vsub.s32 %v92, %v1169
    %v1171 = vrot.slane %v937, %v1170
    %v1172 = vlaneseq
    %v1173 = vshrl.u32 %v1172, 7
    %v1174 = vsub.s32 %v1053, %v1173
    %v1175 = vrot.slane %v940, %v1174
    %v1176 = vsel %vm1058, %v1175, %v1171
    %v1177 = vlaneseq
    %v1178 = vshrl.u32 %v1177, 7
    %v1179 = vsub.s32 %v92, %v1178
    %v1180 = vrot.slane %v943, %v1179
    %v1181 = vlaneseq
    %v1182 = vshrl.u32 %v1181, 7
    %v1183 = vsub.s32 %v1053, %v1182
    %v1184 = vrot.slane %v946, %v1183
    %v1185 = vsel %vm1058, %v1184, %v1180
    %v1186 = vlaneseq
    %v1187 = vshrl.u32 %v1186, 7
    %v1188 = vsub.s32 %v92, %v1187
    %v1189 = vrot.slane %v949, %v1188
    %v1190 = vlaneseq
    %v1191 = vshrl.u32 %v1190, 7
    %v1192 = vsub.s32 %v1053, %v1191
    %v1193 = vrot.slane %v952, %v1192
    %v1194 = vsel %vm1058, %v1193, %v1189
    %v1195 = vlaneseq
    %v1196 = vshrl.u32 %v1195, 7
    %v1197 = vsub.s32 %v92, %v1196
    %v1198 = vrot.slane %v955, %v1197
    %v1199 = vlaneseq
    %v1200 = vshrl.u32 %v1199, 7
    %v1201 = vsub.s32 %v1053, %v1200
    %v1202 = vrot.slane %v958, %v1201
    %v1203 = vsel %vm1058, %v1202, %v1198
    %v1204 = vlaneseq
    %v1205 = vshrl.u32 %v1204, 7
    %v1206 = vsub.s32 %v92, %v1205
    %v1207 = vrot.slane %v961, %v1206
    %v1208 = vlaneseq
    %v1209 = vshrl.u32 %v1208, 7
    %v1210 = vsub.s32 %v1053, %v1209
    %v1211 = vrot.slane %v964, %v1210
    %v1212 = vsel %vm1058, %v1211, %v1207
    %v1213 = vlaneseq
    %v1214 = vshrl.u32 %v1213, 7
    %v1215 = vsub.s32 %v92, %v1214
    %v1216 = vrot.slane %v967, %v1215
    %v1217 = vlaneseq
    %v1218 = vshrl.u32 %v1217, 7
    %v1219 = vsub.s32 %v1053, %v1218
    %v1220 = vrot.slane %v970, %v1219
    %v1221 = vsel %vm1058, %v1220, %v1216
    %v1222 = vlaneseq
    %v1223 = vshrl.u32 %v1222, 7
    %v1224 = vsub.s32 %v92, %v1223
    %v1225 = vrot.slane %v973, %v1224
    %v1226 = vlaneseq
    %v1227 = vshrl.u32 %v1226, 7
    %v1228 = vsub.s32 %v1053, %v1227
    %v1229 = vrot.slane %v976, %v1228
    %v1230 = vsel %vm1058, %v1229, %v1225
    %v1231 = vlaneseq
    %v1232 = vshrl.u32 %v1231, 7
    %v1233 = vsub.s32 %v92, %v1232
    %v1234 = vrot.slane %v979, %v1233
    %v1235 = vlaneseq
    %v1236 = vshrl.u32 %v1235, 7
    %v1237 = vsub.s32 %v1053, %v1236
    %v1238 = vrot.slane %v982, %v1237
    %v1239 = vsel %vm1058, %v1238, %v1234
    %v1240 = vlaneseq
    %v1241 = vshrl.u32 %v1240, 7
    %v1242 = vsub.s32 %v92, %v1241
    %v1243 = vrot.slane %v985, %v1242
    %v1244 = vlaneseq
    %v1245 = vshrl.u32 %v1244, 7
    %v1246 = vsub.s32 %v1053, %v1245
    %v1247 = vrot.slane %v988, %v1246
    %v1248 = vsel %vm1058, %v1247, %v1243
    %v1249 = vlaneseq
    %v1250 = vshrl.u32 %v1249, 7
    %v1251 = vsub.s32 %v92, %v1250
    %v1252 = vrot.slane %v991, %v1251
    %v1253 = vlaneseq
    %v1254 = vshrl.u32 %v1253, 7
    %v1255 = vsub.s32 %v1053, %v1254
    %v1256 = vrot.slane %v994, %v1255
    %v1257 = vsel %vm1058, %v1256, %v1252
    %v1258 = vlaneseq
    %v1259 = vshrl.u32 %v1258, 7
    %v1260 = vsub.s32 %v92, %v1259
    %v1261 = vrot.slane %v997, %v1260
    %v1262 = vlaneseq
    %v1263 = vshrl.u32 %v1262, 7
    %v1264 = vsub.s32 %v1053, %v1263
    %v1265 = vrot.slane %v1000, %v1264
    %v1266 = vsel %vm1058, %v1265, %v1261
    %v1267 = vlaneseq
    %v1268 = vshrl.u32 %v1267, 7
    %v1269 = vsub.s32 %v92, %v1268
    %v1270 = vrot.slane %v1003, %v1269
    %v1271 = vlaneseq
    %v1272 = vshrl.u32 %v1271, 7
    %v1273 = vsub.s32 %v1053, %v1272
    %v1274 = vrot.slane %v1006, %v1273
    %v1275 = vsel %vm1058, %v1274, %v1270
    %v1276 = vlaneseq
    %v1277 = vshrl.u32 %v1276, 7
    %v1278 = vsub.s32 %v92, %v1277
    %v1279 = vrot.slane %v1009, %v1278
    %v1280 = vlaneseq
    %v1281 = vshrl.u32 %v1280, 7
    %v1282 = vsub.s32 %v1053, %v1281
    %v1283 = vrot.slane %v1012, %v1282
    %v1284 = vsel %vm1058, %v1283, %v1279
    %v1285 = vlaneseq
    %v1286 = vshrl.u32 %v1285, 7
    %v1287 = vsub.s32 %v92, %v1286
    %v1288 = vrot.slane %v1015, %v1287
    %v1289 = vlaneseq
    %v1290 = vshrl.u32 %v1289, 7
    %v1291 = vsub.s32 %v1053, %v1290
    %v1292 = vrot.slane %v1018, %v1291
    %v1293 = vsel %vm1058, %v1292, %v1288
    %v1294 = vlaneseq
    %v1295 = vshrl.u32 %v1294, 7
    %v1296 = vsub.s32 %v92, %v1295
    %v1297 = vrot.slane %v1021, %v1296
    %v1298 = vlaneseq
    %v1299 = vshrl.u32 %v1298, 7
    %v1300 = vsub.s32 %v1053, %v1299
    %v1301 = vrot.slane %v1024, %v1300
    %v1302 = vsel %vm1058, %v1301, %v1297
    %v1303 = vlaneseq
    %v1304 = vshrl.u32 %v1303, 7
    %v1305 = vsub.s32 %v92, %v1304
    %v1306 = vrot.slane %v1027, %v1305
    %v1307 = vlaneseq
    %v1308 = vshrl.u32 %v1307, 7
    %v1309 = vsub.s32 %v1053, %v1308
    %v1310 = vrot.slane %v1030, %v1309
    %v1311 = vsel %vm1058, %v1310, %v1306
    %v1312 = vlaneseq
    %v1313 = vshrl.u32 %v1312, 7
    %v1314 = vsub.s32 %v92, %v1313
    %v1315 = vrot.slane %v1033, %v1314
    %v1316 = vlaneseq
    %v1317 = vshrl.u32 %v1316, 7
    %v1318 = vsub.s32 %v1053, %v1317
    %v1319 = vrot.slane %v1036, %v1318
    %v1320 = vsel %vm1058, %v1319, %v1315
    %v1321 = vlaneseq
    %v1322 = vshrl.u32 %v1321, 7
    %v1323 = vsub.s32 %v92, %v1322
    %v1324 = vrot.slane %v1039, %v1323
    %v1325 = vlaneseq
    %v1326 = vshrl.u32 %v1325, 7
    %v1327 = vsub.s32 %v1053, %v1326
    %v1328 = vrot.slane %v1042, %v1327
    %v1329 = vsel %vm1058, %v1328, %v1324
    %v1330 = vlaneseq
    %v1331 = vshrl.u32 %v1330, 7
    %v1332 = vsub.s32 %v92, %v1331
    %v1333 = vrot.slane %v1045, %v1332
    %v1334 = vlaneseq
    %v1335 = vshrl.u32 %v1334, 7
    %v1336 = vsub.s32 %v1053, %v1335
    %v1337 = vrot.slane %v1048, %v1336
    %v1338 = vsel %vm1058, %v1337, %v1333
    %vm1339 = vcmask 1041409
    %v1340 = vsel %vm1339, %v1068, %v1059
    %vm1341 = vcmask 1042434
    %v1342 = vsel %vm1341, %v1077, %v1340
    %vm1343 = vcmask 1043459
    %v1344 = vsel %vm1343, %v1086, %v1342
    %vm1345 = vcmask 1044484
    %v1346 = vsel %vm1345, %v1095, %v1344
    %vm1347 = vcmask 1045509
    %v1348 = vsel %vm1347, %v1104, %v1346
    %vm1349 = vcmask 1046534
    %v1350 = vsel %vm1349, %v1113, %v1348
    %vm1351 = vcmask 1047559
    %v1352 = vsel %vm1351, %v1122, %v1350
    %v1353 = vsel %vm1339, %v1140, %v1131
    %v1354 = vsel %vm1341, %v1149, %v1353
    %v1355 = vsel %vm1343, %v1158, %v1354
    %v1356 = vsel %vm1345, %v1167, %v1355
    %v1357 = vsel %vm1347, %v1176, %v1356
    %v1358 = vsel %vm1349, %v1185, %v1357
    %v1359 = vsel %vm1351, %v1194, %v1358
    %v1360 = vsel %vm1339, %v1212, %v1203
    %v1361 = vsel %vm1341, %v1221, %v1360
    %v1362 = vsel %vm1343, %v1230, %v1361
    %v1363 = vsel %vm1345, %v1239, %v1362
    %v1364 = vsel %vm1347, %v1248, %v1363
    %v1365 = vsel %vm1349, %v1257, %v1364
    %v1366 = vsel %vm1351, %v1266, %v1365
    %v1367 = vsel %vm1339, %v1284, %v1275
    %v1368 = vsel %vm1341, %v1293, %v1367
    %v1369 = vsel %vm1343, %v1302, %v1368
    %v1370 = vsel %vm1345, %v1311, %v1369
    %v1371 = vsel %vm1347, %v1320, %v1370
    %v1372 = vsel %vm1349, %v1329, %v1371
    %v1373 = vsel %vm1351, %v1338, %v1372
    %vm1378 = vcmask 130048
    %v1379 = vsel %vm1378, %v1352, 0.0
    %1380 = vadd.xlane.f32.xlu0 %v1379
    %v1381 = vpop.xlane.xlu0 %1380
    %v1382 = vsel %vm1378, %v1359, 0.0
    %1383 = vadd.xlane.f32.xlu0 %v1382
    %v1384 = vpop.xlane.xlu0 %1383
    %v1385 = vsel %vm1378, %v1366, 0.0
    %1386 = vadd.xlane.f32.xlu0 %v1385
    %v1387 = vpop.xlane.xlu0 %1386
    %v1388 = vsel %vm1378, %v1373, 0.0
    %1389 = vadd.xlane.f32.xlu0 %v1388
    %v1390 = vpop.xlane.xlu0 %1389
    %v1391 = vcvt.s32.f32 %v89
    %v1393 = vlaneseq
    %v1394 = vshrl.u32 %v1393, 7
    %v1395 = vsub.s32 0, %v1394
    %v1396 = vrot.slane %v1391, %v1395
    %v1397 = vlaneseq
    %v1398 = vshrl.u32 %v1397, 7
    %v1399 = vsub.s32 1, %v1398
    %v1400 = vrot.slane %v1391, %v1399
    %v1401 = vlaneseq
    %v1402 = vshrl.u32 %v1401, 7
    %v1403 = vsub.s32 2, %v1402
    %v1404 = vrot.slane %v1391, %v1403
    %v1405 = vlaneseq
    %v1406 = vshrl.u32 %v1405, 7
    %v1407 = vsub.s32 3, %v1406
    %v1408 = vrot.slane %v1391, %v1407
    %v1409 = vlaneseq
    %v1410 = vshrl.u32 %v1409, 7
    %v1411 = vsub.s32 4, %v1410
    %v1412 = vrot.slane %v1391, %v1411
    %v1413 = vlaneseq
    %v1414 = vshrl.u32 %v1413, 7
    %v1415 = vsub.s32 5, %v1414
    %v1416 = vrot.slane %v1391, %v1415
    %v1417 = vlaneseq
    %v1418 = vshrl.u32 %v1417, 7
    %v1419 = vsub.s32 6, %v1418
    %v1420 = vrot.slane %v1391, %v1419
    %v1421 = vlaneseq
    %v1422 = vshrl.u32 %v1421, 7
    %v1423 = vsub.s32 7, %v1422
    %v1424 = vrot.slane %v1391, %v1423
    %vm1433 = vcmp.eq.f32.partialorder %v1381, %v1396
    %vm1434 = vcmp.eq.f32.partialorder %v1384, %v1396
    %vm1435 = vcmp.eq.f32.partialorder %v1381, %v1400
    %vm1436 = vcmp.eq.f32.partialorder %v1384, %v1400
    %vm1437 = vcmp.eq.f32.partialorder %v1381, %v1404
    %vm1438 = vcmp.eq.f32.partialorder %v1384, %v1404
    %vm1439 = vcmp.eq.f32.partialorder %v1381, %v1408
    %vm1440 = vcmp.eq.f32.partialorder %v1384, %v1408
    %vm1441 = vcmp.eq.f32.partialorder %v1381, %v1412
    %vm1442 = vcmp.eq.f32.partialorder %v1384, %v1412
    %vm1443 = vcmp.eq.f32.partialorder %v1381, %v1416
    %vm1444 = vcmp.eq.f32.partialorder %v1384, %v1416
    %vm1445 = vcmp.eq.f32.partialorder %v1381, %v1420
    %vm1446 = vcmp.eq.f32.partialorder %v1384, %v1420
    %vm1447 = vcmp.eq.f32.partialorder %v1381, %v1424
    %vm1448 = vcmp.eq.f32.partialorder %v1384, %v1424
    %vm1449 = vcmp.eq.f32.partialorder %v1387, %v1396
    %vm1450 = vcmp.eq.f32.partialorder %v1390, %v1396
    %vm1451 = vcmp.eq.f32.partialorder %v1387, %v1400
    %vm1452 = vcmp.eq.f32.partialorder %v1390, %v1400
    %vm1453 = vcmp.eq.f32.partialorder %v1387, %v1404
    %vm1454 = vcmp.eq.f32.partialorder %v1390, %v1404
    %vm1455 = vcmp.eq.f32.partialorder %v1387, %v1408
    %vm1456 = vcmp.eq.f32.partialorder %v1390, %v1408
    %vm1457 = vcmp.eq.f32.partialorder %v1387, %v1412
    %vm1458 = vcmp.eq.f32.partialorder %v1390, %v1412
    %vm1459 = vcmp.eq.f32.partialorder %v1387, %v1416
    %vm1460 = vcmp.eq.f32.partialorder %v1390, %v1416
    %vm1461 = vcmp.eq.f32.partialorder %v1387, %v1420
    %vm1462 = vcmp.eq.f32.partialorder %v1390, %v1420
    %vm1463 = vcmp.eq.f32.partialorder %v1387, %v1424
    %vm1464 = vcmp.eq.f32.partialorder %v1390, %v1424
    %v1465 = vsel %vm1433, %v81, 0.0
    %v1466 = vsel %vm1434, %v83, 0.0
    %v1467 = vsel %vm1435, %v81, 0.0
    %v1468 = vsel %vm1436, %v83, 0.0
    %v1469 = vsel %vm1437, %v81, 0.0
    %v1470 = vsel %vm1438, %v83, 0.0
    %v1471 = vsel %vm1439, %v81, 0.0
    %v1472 = vsel %vm1440, %v83, 0.0
    %v1473 = vsel %vm1441, %v81, 0.0
    %v1474 = vsel %vm1442, %v83, 0.0
    %v1475 = vsel %vm1443, %v81, 0.0
    %v1476 = vsel %vm1444, %v83, 0.0
    %v1477 = vsel %vm1445, %v81, 0.0
    %v1478 = vsel %vm1446, %v83, 0.0
    %v1479 = vsel %vm1447, %v81, 0.0
    %v1480 = vsel %vm1448, %v83, 0.0
    %v1481 = vsel %vm1449, %v85, 0.0
    %v1482 = vsel %vm1450, %v87, 0.0
    %v1483 = vsel %vm1451, %v85, 0.0
    %v1484 = vsel %vm1452, %v87, 0.0
    %v1485 = vsel %vm1453, %v85, 0.0
    %v1486 = vsel %vm1454, %v87, 0.0
    %v1487 = vsel %vm1455, %v85, 0.0
    %v1488 = vsel %vm1456, %v87, 0.0
    %v1489 = vsel %vm1457, %v85, 0.0
    %v1490 = vsel %vm1458, %v87, 0.0
    %v1491 = vsel %vm1459, %v85, 0.0
    %v1492 = vsel %vm1460, %v87, 0.0
    %v1493 = vsel %vm1461, %v85, 0.0
    %v1494 = vsel %vm1462, %v87, 0.0
    %v1495 = vsel %vm1463, %v85, 0.0
    %v1496 = vsel %vm1464, %v87, 0.0
    %1513 = vset.pattern.permute.xlu0 0
    %1514 = vperm.xlu0 %1513, %v1465
    %v1515 = vpop.permute.xlu0 %1514
    %1516 = vset.pattern.permute.xlu0 0
    %1517 = vperm.xlu0 %1516, %v1466
    %v1518 = vpop.permute.xlu0 %1517
    %1519 = vset.pattern.permute.xlu0 0
    %1520 = vperm.xlu0 %1519, %v1467
    %v1521 = vpop.permute.xlu0 %1520
    %1522 = vset.pattern.permute.xlu0 0
    %1523 = vperm.xlu0 %1522, %v1468
    %v1524 = vpop.permute.xlu0 %1523
    %1525 = vset.pattern.permute.xlu0 0
    %1526 = vperm.xlu0 %1525, %v1469
    %v1527 = vpop.permute.xlu0 %1526
    %1528 = vset.pattern.permute.xlu0 0
    %1529 = vperm.xlu0 %1528, %v1470
    %v1530 = vpop.permute.xlu0 %1529
    %1531 = vset.pattern.permute.xlu0 0
    %1532 = vperm.xlu0 %1531, %v1471
    %v1533 = vpop.permute.xlu0 %1532
    %1534 = vset.pattern.permute.xlu0 0
    %1535 = vperm.xlu0 %1534, %v1472
    %v1536 = vpop.permute.xlu0 %1535
    %1537 = vset.pattern.permute.xlu0 0
    %1538 = vperm.xlu0 %1537, %v1473
    %v1539 = vpop.permute.xlu0 %1538
    %1540 = vset.pattern.permute.xlu0 0
    %1541 = vperm.xlu0 %1540, %v1474
    %v1542 = vpop.permute.xlu0 %1541
    %1543 = vset.pattern.permute.xlu0 0
    %1544 = vperm.xlu0 %1543, %v1475
    %v1545 = vpop.permute.xlu0 %1544
    %1546 = vset.pattern.permute.xlu0 0
    %1547 = vperm.xlu0 %1546, %v1476
    %v1548 = vpop.permute.xlu0 %1547
    %1549 = vset.pattern.permute.xlu0 0
    %1550 = vperm.xlu0 %1549, %v1477
    %v1551 = vpop.permute.xlu0 %1550
    %1552 = vset.pattern.permute.xlu0 0
    %1553 = vperm.xlu0 %1552, %v1478
    %v1554 = vpop.permute.xlu0 %1553
    %1555 = vset.pattern.permute.xlu0 0
    %1556 = vperm.xlu0 %1555, %v1479
    %v1557 = vpop.permute.xlu0 %1556
    %1558 = vset.pattern.permute.xlu0 0
    %1559 = vperm.xlu0 %1558, %v1480
    %v1560 = vpop.permute.xlu0 %1559
    %v1561 = vlaneseq
    %v1562 = vshrl.u32 %v1561, 7
    %v1563 = vsub.s32 %v92, %v1562
    %v1564 = vrot.slane %v1515, %v1563
    %v1565 = vlaneseq
    %v1566 = vshrl.u32 %v1565, 7
    %v1567 = vsub.s32 %v1053, %v1566
    %v1568 = vrot.slane %v1518, %v1567
    %v1569 = vsel %vm1058, %v1568, %v1564
    %v1570 = vlaneseq
    %v1571 = vshrl.u32 %v1570, 7
    %v1572 = vsub.s32 %v92, %v1571
    %v1573 = vrot.slane %v1521, %v1572
    %v1574 = vlaneseq
    %v1575 = vshrl.u32 %v1574, 7
    %v1576 = vsub.s32 %v1053, %v1575
    %v1577 = vrot.slane %v1524, %v1576
    %v1578 = vsel %vm1058, %v1577, %v1573
    %v1579 = vlaneseq
    %v1580 = vshrl.u32 %v1579, 7
    %v1581 = vsub.s32 %v92, %v1580
    %v1582 = vrot.slane %v1527, %v1581
    %v1583 = vlaneseq
    %v1584 = vshrl.u32 %v1583, 7
    %v1585 = vsub.s32 %v1053, %v1584
    %v1586 = vrot.slane %v1530, %v1585
    %v1587 = vsel %vm1058, %v1586, %v1582
    %v1588 = vlaneseq
    %v1589 = vshrl.u32 %v1588, 7
    %v1590 = vsub.s32 %v92, %v1589
    %v1591 = vrot.slane %v1533, %v1590
    %v1592 = vlaneseq
    %v1593 = vshrl.u32 %v1592, 7
    %v1594 = vsub.s32 %v1053, %v1593
    %v1595 = vrot.slane %v1536, %v1594
    %v1596 = vsel %vm1058, %v1595, %v1591
    %v1597 = vlaneseq
    %v1598 = vshrl.u32 %v1597, 7
    %v1599 = vsub.s32 %v92, %v1598
    %v1600 = vrot.slane %v1539, %v1599
    %v1601 = vlaneseq
    %v1602 = vshrl.u32 %v1601, 7
    %v1603 = vsub.s32 %v1053, %v1602
    %v1604 = vrot.slane %v1542, %v1603
    %v1605 = vsel %vm1058, %v1604, %v1600
    %v1606 = vlaneseq
    %v1607 = vshrl.u32 %v1606, 7
    %v1608 = vsub.s32 %v92, %v1607
    %v1609 = vrot.slane %v1545, %v1608
    %v1610 = vlaneseq
    %v1611 = vshrl.u32 %v1610, 7
    %v1612 = vsub.s32 %v1053, %v1611
    %v1613 = vrot.slane %v1548, %v1612
    %v1614 = vsel %vm1058, %v1613, %v1609
    %v1615 = vlaneseq
    %v1616 = vshrl.u32 %v1615, 7
    %v1617 = vsub.s32 %v92, %v1616
    %v1618 = vrot.slane %v1551, %v1617
    %v1619 = vlaneseq
    %v1620 = vshrl.u32 %v1619, 7
    %v1621 = vsub.s32 %v1053, %v1620
    %v1622 = vrot.slane %v1554, %v1621
    %v1623 = vsel %vm1058, %v1622, %v1618
    %v1624 = vlaneseq
    %v1625 = vshrl.u32 %v1624, 7
    %v1626 = vsub.s32 %v92, %v1625
    %v1627 = vrot.slane %v1557, %v1626
    %v1628 = vlaneseq
    %v1629 = vshrl.u32 %v1628, 7
    %v1630 = vsub.s32 %v1053, %v1629
    %v1631 = vrot.slane %v1560, %v1630
    %v1632 = vsel %vm1058, %v1631, %v1627
    %v1633 = vsel %vm1339, %v1578, %v1569
    %v1634 = vsel %vm1341, %v1587, %v1633
    %v1635 = vsel %vm1343, %v1596, %v1634
    %v1636 = vsel %vm1345, %v1605, %v1635
    %v1637 = vsel %vm1347, %v1614, %v1636
    %v1638 = vsel %vm1349, %v1623, %v1637
    %v1639 = vsel %vm1351, %v1632, %v1638
    %v1640 = vsel %vm1378, %v1639, 0
    %1642 = vmatprep.subr.mxu0 0.0
    %1643 = vmatpush1.msra.mxu0 %v30
    %1644 = vmatprep.subr.mxu0 0.0
    %1645 = vmatpush1.msra.mxu0 %v31
    %1646 = vmatprep.subr.mxu0 0.0
    %1647 = vmatpush1.msra.mxu0 0.0
    %1648 = vmatprep.subr.mxu0 0.0
    %1649 = vmatpush1.msra.mxu0 0.0
    %1650 = vmatprep.subr.mxu0 0.0
    %1651 = vmatpush1.msra.mxu0 0.0
    %1652 = vmatprep.subr.mxu0 0.0
    %1653 = vmatpush1.msra.mxu0 0.0
    %1654 = vmatprep.subr.mxu0 0.0
    %1655 = vmatpush1.msra.mxu0 0.0
    %1656 = vmatprep.subr.mxu0 0.0
    %1657 = vmatpush1.msra.mxu0 0.0
    %1658 = vmatprep.subr.mxu0 0.0
    %1659 = vmatpush1.msra.mxu0 0.0
    %1660 = vmatprep.subr.mxu0 0.0
    %1661 = vmatpush1.msra.mxu0 0.0
    %1662 = vmatprep.subr.mxu0 0.0
    %1663 = vmatpush1.msra.mxu0 0.0
    %1664 = vmatprep.subr.mxu0 0.0
    %1665 = vmatpush1.msra.mxu0 0.0
    %1666 = vmatprep.subr.mxu0 0.0
    %1667 = vmatpush1.msra.mxu0 0.0
    %1668 = vmatprep.subr.mxu0 0.0
    %1669 = vmatpush1.msra.mxu0 0.0
    %1670 = vmatprep.subr.mxu0 0.0
    %1671 = vmatpush1.msra.mxu0 0.0
    %1672 = vmatprep.subr.mxu0 0.0
    %1673 = vmatpush1.msra.mxu0 0.0
    %1674 = vmatprep.subr.mxu0 0.0
    %1675 = vmatpush1.msra.mxu0 0.0
    %1676 = vmatprep.subr.mxu0 0.0
    %1677 = vmatpush1.msra.mxu0 0.0
    %1678 = vmatprep.subr.mxu0 0.0
    %1679 = vmatpush1.msra.mxu0 0.0
    %1680 = vmatprep.subr.mxu0 0.0
    %1681 = vmatpush1.msra.mxu0 0.0
    %1682 = vmatprep.subr.mxu0 0.0
    %1683 = vmatpush1.msra.mxu0 0.0
    %1684 = vmatprep.subr.mxu0 0.0
    %1685 = vmatpush1.msra.mxu0 0.0
    %1686 = vmatprep.subr.mxu0 0.0
    %1687 = vmatpush1.msra.mxu0 0.0
    %1688 = vmatprep.subr.mxu0 0.0
    %1689 = vmatpush1.msra.mxu0 0.0
    %1690 = vmatprep.subr.mxu0 0.0
    %1691 = vmatpush1.msra.mxu0 0.0
    %1692 = vmatprep.subr.mxu0 0.0
    %1693 = vmatpush1.msra.mxu0 0.0
    %1694 = vmatprep.subr.mxu0 0.0
    %1695 = vmatpush1.msra.mxu0 0.0
    %1696 = vmatprep.subr.mxu0 0.0
    %1697 = vmatpush1.msra.mxu0 0.0
    %1698 = vmatprep.subr.mxu0 0.0
    %1699 = vmatpush1.msra.mxu0 0.0
    %1700 = vmatprep.subr.mxu0 0.0
    %1701 = vmatpush1.msra.mxu0 0.0
    %1702 = vmatprep.subr.mxu0 0.0
    %1703 = vmatpush1.msra.mxu0 0.0
    %1704 = vmatprep.subr.mxu0 0.0
    %1705 = vmatpush1.msra.mxu0 0.0
    %1706 = vmatprep.mubr.f32.mxu0 0.0
    %1707 = vmatmul.mubr.f32.gmra.mrb[0].mxu0 %v1640
    %v1708 = vpop.f32.mrb[0].mxu0
    %v1709 = vadd.f32 0.0, %v1708
    %v1710 = vpop.f32.mrb[0].mxu0
    %1711 = vdwg.mxu0
    %1728 = vset.pattern.permute.xlu0 0
    %1729 = vperm.xlu0 %1728, %v1481
    %v1730 = vpop.permute.xlu0 %1729
    %1731 = vset.pattern.permute.xlu0 0
    %1732 = vperm.xlu0 %1731, %v1482
    %v1733 = vpop.permute.xlu0 %1732
    %1734 = vset.pattern.permute.xlu0 0
    %1735 = vperm.xlu0 %1734, %v1483
    %v1736 = vpop.permute.xlu0 %1735
    %1737 = vset.pattern.permute.xlu0 0
    %1738 = vperm.xlu0 %1737, %v1484
    %v1739 = vpop.permute.xlu0 %1738
    %1740 = vset.pattern.permute.xlu0 0
    %1741 = vperm.xlu0 %1740, %v1485
    %v1742 = vpop.permute.xlu0 %1741
    %1743 = vset.pattern.permute.xlu0 0
    %1744 = vperm.xlu0 %1743, %v1486
    %v1745 = vpop.permute.xlu0 %1744
    %1746 = vset.pattern.permute.xlu0 0
    %1747 = vperm.xlu0 %1746, %v1487
    %v1748 = vpop.permute.xlu0 %1747
    %1749 = vset.pattern.permute.xlu0 0
    %1750 = vperm.xlu0 %1749, %v1488
    %v1751 = vpop.permute.xlu0 %1750
    %1752 = vset.pattern.permute.xlu0 0
    %1753 = vperm.xlu0 %1752, %v1489
    %v1754 = vpop.permute.xlu0 %1753
    %1755 = vset.pattern.permute.xlu0 0
    %1756 = vperm.xlu0 %1755, %v1490
    %v1757 = vpop.permute.xlu0 %1756
    %1758 = vset.pattern.permute.xlu0 0
    %1759 = vperm.xlu0 %1758, %v1491
    %v1760 = vpop.permute.xlu0 %1759
    %1761 = vset.pattern.permute.xlu0 0
    %1762 = vperm.xlu0 %1761, %v1492
    %v1763 = vpop.permute.xlu0 %1762
    %1764 = vset.pattern.permute.xlu0 0
    %1765 = vperm.xlu0 %1764, %v1493
    %v1766 = vpop.permute.xlu0 %1765
    %1767 = vset.pattern.permute.xlu0 0
    %1768 = vperm.xlu0 %1767, %v1494
    %v1769 = vpop.permute.xlu0 %1768
    %1770 = vset.pattern.permute.xlu0 0
    %1771 = vperm.xlu0 %1770, %v1495
    %v1772 = vpop.permute.xlu0 %1771
    %1773 = vset.pattern.permute.xlu0 0
    %1774 = vperm.xlu0 %1773, %v1496
    %v1775 = vpop.permute.xlu0 %1774
    %v1776 = vlaneseq
    %v1777 = vshrl.u32 %v1776, 7
    %v1778 = vsub.s32 %v92, %v1777
    %v1779 = vrot.slane %v1730, %v1778
    %v1780 = vlaneseq
    %v1781 = vshrl.u32 %v1780, 7
    %v1782 = vsub.s32 %v1053, %v1781
    %v1783 = vrot.slane %v1733, %v1782
    %v1784 = vsel %vm1058, %v1783, %v1779
    %v1785 = vlaneseq
    %v1786 = vshrl.u32 %v1785, 7
    %v1787 = vsub.s32 %v92, %v1786
    %v1788 = vrot.slane %v1736, %v1787
    %v1789 = vlaneseq
    %v1790 = vshrl.u32 %v1789, 7
    %v1791 = vsub.s32 %v1053, %v1790
    %v1792 = vrot.slane %v1739, %v1791
    %v1793 = vsel %vm1058, %v1792, %v1788
    %v1794 = vlaneseq
    %v1795 = vshrl.u32 %v1794, 7
    %v1796 = vsub.s32 %v92, %v1795
    %v1797 = vrot.slane %v1742, %v1796
    %v1798 = vlaneseq
    %v1799 = vshrl.u32 %v1798, 7
    %v1800 = vsub.s32 %v1053, %v1799
    %v1801 = vrot.slane %v1745, %v1800
    %v1802 = vsel %vm1058, %v1801, %v1797
    %v1803 = vlaneseq
    %v1804 = vshrl.u32 %v1803, 7
    %v1805 = vsub.s32 %v92, %v1804
    %v1806 = vrot.slane %v1748, %v1805
    %v1807 = vlaneseq
    %v1808 = vshrl.u32 %v1807, 7
    %v1809 = vsub.s32 %v1053, %v1808
    %v1810 = vrot.slane %v1751, %v1809
    %v1811 = vsel %vm1058, %v1810, %v1806
    %v1812 = vlaneseq
    %v1813 = vshrl.u32 %v1812, 7
    %v1814 = vsub.s32 %v92, %v1813
    %v1815 = vrot.slane %v1754, %v1814
    %v1816 = vlaneseq
    %v1817 = vshrl.u32 %v1816, 7
    %v1818 = vsub.s32 %v1053, %v1817
    %v1819 = vrot.slane %v1757, %v1818
    %v1820 = vsel %vm1058, %v1819, %v1815
    %v1821 = vlaneseq
    %v1822 = vshrl.u32 %v1821, 7
    %v1823 = vsub.s32 %v92, %v1822
    %v1824 = vrot.slane %v1760, %v1823
    %v1825 = vlaneseq
    %v1826 = vshrl.u32 %v1825, 7
    %v1827 = vsub.s32 %v1053, %v1826
    %v1828 = vrot.slane %v1763, %v1827
    %v1829 = vsel %vm1058, %v1828, %v1824
    %v1830 = vlaneseq
    %v1831 = vshrl.u32 %v1830, 7
    %v1832 = vsub.s32 %v92, %v1831
    %v1833 = vrot.slane %v1766, %v1832
    %v1834 = vlaneseq
    %v1835 = vshrl.u32 %v1834, 7
    %v1836 = vsub.s32 %v1053, %v1835
    %v1837 = vrot.slane %v1769, %v1836
    %v1838 = vsel %vm1058, %v1837, %v1833
    %v1839 = vlaneseq
    %v1840 = vshrl.u32 %v1839, 7
    %v1841 = vsub.s32 %v92, %v1840
    %v1842 = vrot.slane %v1772, %v1841
    %v1843 = vlaneseq
    %v1844 = vshrl.u32 %v1843, 7
    %v1845 = vsub.s32 %v1053, %v1844
    %v1846 = vrot.slane %v1775, %v1845
    %v1847 = vsel %vm1058, %v1846, %v1842
    %v1848 = vsel %vm1339, %v1793, %v1784
    %v1849 = vsel %vm1341, %v1802, %v1848
    %v1850 = vsel %vm1343, %v1811, %v1849
    %v1851 = vsel %vm1345, %v1820, %v1850
    %v1852 = vsel %vm1347, %v1829, %v1851
    %v1853 = vsel %vm1349, %v1838, %v1852
    %v1854 = vsel %vm1351, %v1847, %v1853
    %v1855 = vsel %vm1378, %v1854, 0
    %1857 = vmatprep.subr.mxu0 0.0
    %1858 = vmatpush1.msra.mxu0 %v32
    %1859 = vmatprep.subr.mxu0 0.0
    %1860 = vmatpush1.msra.mxu0 %v33
    %1861 = vmatprep.subr.mxu0 0.0
    %1862 = vmatpush1.msra.mxu0 0.0
    %1863 = vmatprep.subr.mxu0 0.0
    %1864 = vmatpush1.msra.mxu0 0.0
    %1865 = vmatprep.subr.mxu0 0.0
    %1866 = vmatpush1.msra.mxu0 0.0
    %1867 = vmatprep.subr.mxu0 0.0
    %1868 = vmatpush1.msra.mxu0 0.0
    %1869 = vmatprep.subr.mxu0 0.0
    %1870 = vmatpush1.msra.mxu0 0.0
    %1871 = vmatprep.subr.mxu0 0.0
    %1872 = vmatpush1.msra.mxu0 0.0
    %1873 = vmatprep.subr.mxu0 0.0
    %1874 = vmatpush1.msra.mxu0 0.0
    %1875 = vmatprep.subr.mxu0 0.0
    %1876 = vmatpush1.msra.mxu0 0.0
    %1877 = vmatprep.subr.mxu0 0.0
    %1878 = vmatpush1.msra.mxu0 0.0
    %1879 = vmatprep.subr.mxu0 0.0
    %1880 = vmatpush1.msra.mxu0 0.0
    %1881 = vmatprep.subr.mxu0 0.0
    %1882 = vmatpush1.msra.mxu0 0.0
    %1883 = vmatprep.subr.mxu0 0.0
    %1884 = vmatpush1.msra.mxu0 0.0
    %1885 = vmatprep.subr.mxu0 0.0
    %1886 = vmatpush1.msra.mxu0 0.0
    %1887 = vmatprep.subr.mxu0 0.0
    %1888 = vmatpush1.msra.mxu0 0.0
    %1889 = vmatprep.subr.mxu0 0.0
    %1890 = vmatpush1.msra.mxu0 0.0
    %1891 = vmatprep.subr.mxu0 0.0
    %1892 = vmatpush1.msra.mxu0 0.0
    %1893 = vmatprep.subr.mxu0 0.0
    %1894 = vmatpush1.msra.mxu0 0.0
    %1895 = vmatprep.subr.mxu0 0.0
    %1896 = vmatpush1.msra.mxu0 0.0
    %1897 = vmatprep.subr.mxu0 0.0
    %1898 = vmatpush1.msra.mxu0 0.0
    %1899 = vmatprep.subr.mxu0 0.0
    %1900 = vmatpush1.msra.mxu0 0.0
    %1901 = vmatprep.subr.mxu0 0.0
    %1902 = vmatpush1.msra.mxu0 0.0
    %1903 = vmatprep.subr.mxu0 0.0
    %1904 = vmatpush1.msra.mxu0 0.0
    %1905 = vmatprep.subr.mxu0 0.0
    %1906 = vmatpush1.msra.mxu0 0.0
    %1907 = vmatprep.subr.mxu0 0.0
    %1908 = vmatpush1.msra.mxu0 0.0
    %1909 = vmatprep.subr.mxu0 0.0
    %1910 = vmatpush1.msra.mxu0 0.0
    %1911 = vmatprep.subr.mxu0 0.0
    %1912 = vmatpush1.msra.mxu0 0.0
    %1913 = vmatprep.subr.mxu0 0.0
    %1914 = vmatpush1.msra.mxu0 0.0
    %1915 = vmatprep.subr.mxu0 0.0
    %1916 = vmatpush1.msra.mxu0 0.0
    %1917 = vmatprep.subr.mxu0 0.0
    %1918 = vmatpush1.msra.mxu0 0.0
    %1919 = vmatprep.subr.mxu0 0.0
    %1920 = vmatpush1.msra.mxu0 0.0
    %1921 = vmatprep.mubr.f32.mxu0 0.0
    %1922 = vmatmul.mubr.f32.gmra.mrb[0].mxu0 %v1855
    %v1923 = vpop.f32.mrb[0].mxu0
    %v1924 = vadd.f32 0.0, %v1923
    %v1925 = vpop.f32.mrb[0].mxu0
    %1926 = vdwg.mxu0
    %1927 = vst.msk [vmem:[#allocation6] sm:$0xff] %vm45, %v1709
    %1928 = vst.msk [vmem:[#allocation6 + $0x8] sm:$0xff] %vm45, %v1924
    // Predicated region
    $region18: #{tpu_custom_call.1} parent=1 // pred_check
      _
    $region19: #{tpu_custom_call.1} parent=1 // pred_check_branch
      %1930 = sbr.rel (0) target = $region21
    $region20: #{tpu_custom_call.1} parent=1 // pred_region
      %s1932 = ssub.s32 256, 256
      %1933 = vsyncadd [#allocation5], %s1932
      %s1934 = sshll.u32 [#allocation6], 4
      %s1935 = int_to_ptr.vmem [resolvable:$true] %s1934
      %1940 = dma.vmem_to_hbm [thread:$0]  %s1935, 256, %s3, [#allocation5], 128, 128, 8
    $region21: #{tpu_custom_call.1} parent=1 // pred_fallthru
      _
    // Predicated region
    $region22: #{tpu_custom_call.1} parent=1 // pred_check
      _
    $region23: #{tpu_custom_call.1} parent=1 // pred_check_branch
      %1942 = sbr.rel (0) target = $region25
    $region24: #{tpu_custom_call.1} parent=1 // pred_region
      %1943 = dma.done [#allocation5], 256
    $region25: #{tpu_custom_call.1} parent=1 // pred_fallthru
      _
    %1944 = vsyncpa [#allocation4], 1
    %1945 = vsyncpa [#allocation5], 1

</llo_original>
